<compile_context>
chip_gen: v7x
topology: tpu7x:2x2x1
jax: 0.10.0
libtpu: 0.0.40
codegen_flags: <defaults>
</compile_context>

<pallas_src>
import math
import functools

import numpy as np
import jax
import jax.numpy as jnp
from jax.experimental import pallas as pl
from jax.experimental.pallas import tpu as pltpu


# ----------------------------------------------------------------------------
# small helpers
# ----------------------------------------------------------------------------
def _roll_lanes(v, m):
    """Return w with w[:, p] = v[:, (p + m) % n] for a static shift m in [0, n)."""
    if m == 0:
        return v
    return jnp.concatenate([v[:, m:], v[:, :m]], axis=1)


@functools.lru_cache(maxsize=None)
def _tap_masks(H, W, kh, kw):
    """Per-tap validity mask (kh*kw, 1, H*W): 1 where the shifted read stays
    inside the un-padded image (i.e. implements the conv's zero padding)."""
    ph, pw = kh // 2, kw // 2
    rows = np.arange(H)[:, None]
    cols = np.arange(W)[None, :]
    masks = []
    for dy in range(kh):
        for dx in range(kw):
            valid = ((rows + dy - ph >= 0) & (rows + dy - ph < H) &
                     (cols + dx - pw >= 0) & (cols + dx - pw < W))
            masks.append(valid.reshape(1, H * W))
    return jnp.asarray(np.stack(masks, axis=0), dtype=jnp.float32)


# ----------------------------------------------------------------------------
# Pallas kernel: full time recurrence of one ConvLSTM layer
# ----------------------------------------------------------------------------
def _make_layer_kernel(H, W, kh, kw, c_in, c_hid):
    HW = H * W
    ph, pw = kh // 2, kw // 2
    C4 = 4 * c_hid

    def kernel(x_ref, wx_ref, wh_ref, b_ref, mask_ref,
               hseq_ref, clast_ref, h_sc, c_sc):
        # x_ref    : (1, 1, c_in, HW)  bf16   input frame x_t (channel-major)
        # wx_ref   : (kh*kw, 4C, c_in) bf16   per-tap fused-gate weights (x part)
        # wh_ref   : (kh*kw, 4C, c_hid)bf16   per-tap fused-gate weights (h part)
        # b_ref    : (4C, 1)           f32    fused-gate bias
        # mask_ref : (kh*kw, 1, HW)    f32    conv zero-padding masks
        # hseq_ref : (1, 1, c_hid, HW) f32    output h_t
        # clast_ref: (1, c_hid, HW)    f32    final cell state (revisited block)
        # h_sc/c_sc: (c_hid, HW)       f32    recurrent state, VMEM-resident
        t = pl.program_id(1)

        @pl.when(t == 0)
        def _():
            h_sc[...] = jnp.zeros_like(h_sc)
            c_sc[...] = jnp.zeros_like(c_sc)

        x = x_ref[0, 0].astype(jnp.float32)     # (c_in, HW)
        h = h_sc[...]                           # (c_hid, HW)

        # Tap-accumulated convolution: for each tap (dy, dx) shift the flat
        # spatial axis by s = (dy-ph)*W + (dx-pw), zero out-of-image reads,
        # and accumulate one fused-4-gate matmul per operand (x part, h part).
        acc = jnp.zeros((C4, HW), jnp.float32)
        for dy in range(kh):
            for dx in range(kw):
                tap = dy * kw + dx
                s = (dy - ph) * W + (dx - pw)
                m = s % HW
                xs = _roll_lanes(x, m)
                hs = _roll_lanes(h, m)
                if not (dy == ph and dx == pw):     # center tap needs no mask
                    mask = mask_ref[tap]            # (1, HW)
                    xs = xs * mask
                    hs = hs * mask
                acc = acc + jnp.dot(wx_ref[tap], xs.astype(jnp.bfloat16),
                                    preferred_element_type=jnp.float32)
                acc = acc + jnp.dot(wh_ref[tap], hs.astype(jnp.bfloat16),
                                    preferred_element_type=jnp.float32)

        gates = acc + b_ref[...]                    # single bias broadcast

        i = jax.nn.sigmoid(gates[0 * c_hid:1 * c_hid])
        f = jax.nn.sigmoid(gates[1 * c_hid:2 * c_hid])
        o = jax.nn.sigmoid(gates[2 * c_hid:3 * c_hid])
        g = jnp.tanh(gates[3 * c_hid:4 * c_hid])

        c_new = f * c_sc[...] + i * g
        h_new = o * jnp.tanh(c_new)

        c_sc[...] = c_new
        h_sc[...] = h_new
        hseq_ref[0, 0] = h_new                      # lane-dense (c_hid, 256) store
        clast_ref[0] = c_new                        # revisited block; last write wins

    return kernel


@functools.lru_cache(maxsize=None)
def _make_layer_call(B, T, H, W, kh, kw, c_in, c_hid):
    HW = H * W
    C4 = 4 * c_hid
    KK = kh * kw
    kernel = _make_layer_kernel(H, W, kh, kw, c_in, c_hid)
    return pl.pallas_call(
        kernel,
        out_shape=(
            jax.ShapeDtypeStruct((B, T, c_hid, HW), jnp.float32),  # h sequence
            jax.ShapeDtypeStruct((B, c_hid, HW), jnp.float32),     # final c
        ),
        grid=(B, T),
        in_specs=[
            pl.BlockSpec((1, 1, c_in, HW), lambda b, t: (b, t, 0, 0)),   # x_t
            pl.BlockSpec((KK, C4, c_in), lambda b, t: (0, 0, 0)),        # wx (resident)
            pl.BlockSpec((KK, C4, c_hid), lambda b, t: (0, 0, 0)),       # wh (resident)
            pl.BlockSpec((C4, 1), lambda b, t: (0, 0)),                  # bias (resident)
            pl.BlockSpec((KK, 1, HW), lambda b, t: (0, 0, 0)),           # masks (resident)
        ],
        out_specs=(
            pl.BlockSpec((1, 1, c_hid, HW), lambda b, t: (b, t, 0, 0)),
            pl.BlockSpec((1, c_hid, HW), lambda b, t: (b, 0, 0)),
        ),
        scratch_shapes=[
            pltpu.VMEM((c_hid, HW), jnp.float32),   # h state
            pltpu.VMEM((c_hid, HW), jnp.float32),   # c state
        ],
        compiler_params=pltpu.CompilerParams(
            dimension_semantics=("parallel", "arbitrary"),
            vmem_limit_bytes=32 * 1024 * 1024,
        ),
    )


# ----------------------------------------------------------------------------
# Parameter init (matches nn.init.xavier_uniform_ on the Conv2d weight, bias=0)
# ----------------------------------------------------------------------------
def init_layer_params(key, c_in, c_hid, kernel_size):
    kh, kw = kernel_size
    cc = c_in + c_hid
    fan_in = cc * kh * kw
    fan_out = 4 * c_hid * kh * kw
    bound = math.sqrt(6.0 / (fan_in + fan_out))
    # PyTorch OIHW layout (4*Chid, Cc, kh, kw); gate order along O: i, f, o, g;
    # input-channel order along I: x channels then h channels.
    w_oihw = jax.random.uniform(
        key, (4 * c_hid, cc, kh, kw), minval=-bound, maxval=bound, dtype=jnp.float32)
    bias = jnp.zeros((4 * c_hid,), jnp.float32)

    # Per-tap fused-gate matrices, split into x-part and h-part, stored bf16.
    w_taps = jnp.transpose(w_oihw, (2, 3, 0, 1)).reshape(kh * kw, 4 * c_hid, cc)
    wx = w_taps[:, :, :c_in].astype(jnp.bfloat16)
    wh = w_taps[:, :, c_in:].astype(jnp.bfloat16)

    # HWIO weights for the lax.conv reference, built from the *bf16-rounded*
    # values so reference and kernel share the same quantization.
    w_hwio = jnp.transpose(
        jnp.concatenate([wx, wh], axis=-1).astype(jnp.float32)
        .reshape(kh, kw, 4 * c_hid, cc),
        (0, 1, 3, 2))

    return dict(kernel=(kh, kw), hidden_dim=c_hid, input_dim=c_in,
                wx=wx, wh=wh, bias=bias,
                bias_col=bias.reshape(4 * c_hid, 1), w_hwio=w_hwio)


# ----------------------------------------------------------------------------
# ConvLSTM forward (Pallas path)
# ----------------------------------------------------------------------------
def convlstm_forward_pallas(x_nchw, layers):
    """x_nchw: (B, T, C, H, W) float32.  Returns ([last_layer_out], [[h, c]])
    with PyTorch conventions: out (B, T, Chid, H, W), h/c (B, Chid, H, W)."""
    B, T, _, H, W = x_nchw.shape
    HW = H * W
    cur = x_nchw.reshape(B, T, x_nchw.shape[2], HW)   # channel-major, HW on lanes
    chid = None
    c_last = None
    for lp in layers:
        kh, kw = lp["kernel"]
        chid = lp["hidden_dim"]
        c_in = cur.shape[2]
        masks = _tap_masks(H, W, kh, kw)
        call = _make_layer_call(B, T, H, W, kh, kw, c_in, chid)
        x_bf = cur.astype(jnp.bfloat16)               # halve x HBM traffic
        h_seq, c_last = call(x_bf, lp["wx"], lp["wh"], lp["bias_col"], masks)
        cur = h_seq                                   # (B, T, Chid, HW) f32

    layer_output = cur.reshape(B, T, chid, H, W)      # already NCHW
    h_out = cur[:, -1].reshape(B, chid, H, W)
    c_out = c_last.reshape(B, chid, H, W)
    return [layer_output], [[h_out, c_out]]


# ----------------------------------------------------------------------------
# Pure-JAX reference (lax.conv) with matching bf16 operand quantization
# ----------------------------------------------------------------------------
def convlstm_forward_ref(x_nchw, layers):
    x = jnp.transpose(x_nchw, (0, 1, 3, 4, 2))        # NHWC
    B, T, H, W, _ = x.shape
    cur = x
    h = c = None
    for lp in layers:
        chid = lp["hidden_dim"]
        w = lp["w_hwio"]
        b = lp["bias"]
        cur_q = cur.astype(jnp.bfloat16).astype(jnp.float32)   # match wrapper cast
        h = jnp.zeros((B, H, W, chid), jnp.float32)
        c = jnp.zeros_like(h)
        outs = []
        for t in range(T):
            h_q = h.astype(jnp.bfloat16).astype(jnp.float32)   # match in-kernel cast
            comb = jnp.concatenate([cur_q[:, t], h_q], axis=-1)
            cc = jax.lax.conv_general_dilated(
                comb, w, (1, 1), "SAME",
                dimension_numbers=("NHWC", "HWIO", "NHWC")) + b
            i = jax.nn.sigmoid(cc[..., :chid])
            f = jax.nn.sigmoid(cc[..., chid:2 * chid])
            o = jax.nn.sigmoid(cc[..., 2 * chid:3 * chid])
            g = jnp.tanh(cc[..., 3 * chid:])
            c = f * c + i * g
            h = o * jnp.tanh(c)
            outs.append(h)
        cur = jnp.stack(outs, axis=1)
    layer_output = jnp.transpose(cur, (0, 1, 4, 2, 3))
    return [layer_output], [[jnp.transpose(h, (0, 3, 1, 2)),
                             jnp.transpose(c, (0, 3, 1, 2))]]


# ----------------------------------------------------------------------------
if __name__ == "__main__":
    key = jax.random.PRNGKey(0)
    B, T, C_in, H, W = 2, 8, 4, 16, 16
    num_layers = 2
    hidden_dims = [32, 32]          # 4*Chid = 128 -> MXU/lane aligned gate dim
    kernel_size = (3, 3)

    k_x, *k_layers = jax.random.split(key, 1 + num_layers)
    x = jax.random.normal(k_x, (B, T, C_in, H, W), dtype=jnp.float32)

    layers = []
    prev = C_in
    for li in range(num_layers):
        layers.append(init_layer_params(k_layers[li], prev, hidden_dims[li], kernel_size))
        prev = hidden_dims[li]

    out_list, state_list = convlstm_forward_pallas(x, layers)
    out = jax.block_until_ready(out_list[0])
    h_n = jax.block_until_ready(state_list[0][0])
    c_n = jax.block_until_ready(state_list[0][1])

    # correctness check against pure-JAX reference
    ref_out_list, ref_state_list = convlstm_forward_ref(x, layers)
    ref_out = ref_out_list[0]

    assert out.shape == (B, T, hidden_dims[-1], H, W)
    assert h_n.shape == (B, hidden_dims[-1], H, W)
    assert c_n.shape == (B, hidden_dims[-1], H, W)
    assert jnp.allclose(out, ref_out, atol=1e-2, rtol=1e-2), \
        float(jnp.max(jnp.abs(out - ref_out)))
    assert jnp.allclose(h_n, ref_state_list[0][0], atol=1e-2, rtol=1e-2)
    assert jnp.allclose(c_n, ref_state_list[0][1], atol=1e-2, rtol=1e-2)

    print("KERNEL_OK")
</pallas_src>

<mosaic_0001>
module attributes {stable_mosaic.version = 11 : i64} {
  func.func @kernel(%arg0: i32, %arg1: i32, %arg2: memref<1x1x4x256xbf16, #tpu.memory_space<vmem>>, %arg3: memref<9x128x4xbf16, #tpu.memory_space<vmem>>, %arg4: memref<9x128x32xbf16, #tpu.memory_space<vmem>>, %arg5: memref<128x1xf32, #tpu.memory_space<vmem>>, %arg6: memref<9x1x256xf32, #tpu.memory_space<vmem>>, %arg7: memref<1x1x32x256xf32, #tpu.memory_space<vmem>>, %arg8: memref<1x32x256xf32, #tpu.memory_space<vmem>>, %arg9: memref<32x256xf32, #tpu.memory_space<vmem>>, %arg10: memref<32x256xf32, #tpu.memory_space<vmem>>) attributes {dimension_semantics = [#tpu.dimension_semantics<parallel>, #tpu.dimension_semantics<arbitrary>], iteration_bounds = array<i64: 2, 8>, scalar_prefetch = 0 : i64, scratch_operands = 2 : i64, tpu.core_type = #tpu.core_type<tc>, window_params = [{transform_indices = @transform_0, window_bounds = array<i64: 1, 1, 4, 256>}, {pipeline_mode = #tpu.pipeline_mode<synchronous>, transform_indices = @transform_1, window_bounds = array<i64: 9, 128, 4>}, {pipeline_mode = #tpu.pipeline_mode<synchronous>, transform_indices = @transform_2, window_bounds = array<i64: 9, 128, 32>}, {pipeline_mode = #tpu.pipeline_mode<synchronous>, transform_indices = @transform_3, window_bounds = array<i64: 128, 1>}, {pipeline_mode = #tpu.pipeline_mode<synchronous>, transform_indices = @transform_4, window_bounds = array<i64: 9, 1, 256>}, {transform_indices = @transform_5, window_bounds = array<i64: 1, 1, 32, 256>}, {transform_indices = @transform_6, window_bounds = array<i64: 1, 32, 256>}]} {
    %c0_i32 = arith.constant 0 : i32
    %0 = arith.cmpi eq, %arg1, %c0_i32 : i32
    %1 = arith.extui %0 : i1 to i32
    %c0_i32_0 = arith.constant 0 : i32
    %2 = arith.cmpi ne, %1, %c0_i32_0 : i32
    scf.if %2 {
      %cst_112 = arith.constant 0.000000e+00 : f32
      %231 = vector.broadcast %cst_112 : f32 to vector<32x256xf32>
      %c0_113 = arith.constant 0 : index
      %c0_114 = arith.constant 0 : index
      %232 = vector.load %arg9[%c0_113, %c0_114] : memref<32x256xf32, #tpu.memory_space<vmem>>, vector<32x256xf32>
      tpu.vector_store %arg9[%c0_113, %c0_114], %231 {strides = array<i32>} : memref<32x256xf32, #tpu.memory_space<vmem>>, vector<32x256xf32>,
      %cst_115 = arith.constant 0.000000e+00 : f32
      %233 = vector.broadcast %cst_115 : f32 to vector<32x256xf32>
      %c0_116 = arith.constant 0 : index
      %c0_117 = arith.constant 0 : index
      %234 = vector.load %arg10[%c0_116, %c0_117] : memref<32x256xf32, #tpu.memory_space<vmem>>, vector<32x256xf32>
      tpu.vector_store %arg10[%c0_116, %c0_117], %233 {strides = array<i32>} : memref<32x256xf32, #tpu.memory_space<vmem>>, vector<32x256xf32>,
    } else {
    }
    %c0 = arith.constant 0 : index
    %c0_1 = arith.constant 0 : index
    %c0_2 = arith.constant 0 : index
    %c0_3 = arith.constant 0 : index
    %3 = vector.load %arg2[%c0, %c0_1, %c0_2, %c0_3] : memref<1x1x4x256xbf16, #tpu.memory_space<vmem>>, vector<1x1x4x256xbf16>
    %4 = vector.shape_cast %3 : vector<1x1x4x256xbf16> to vector<4x256xbf16>
    %5 = arith.extf %4 : vector<4x256xbf16> to vector<4x256xf32>
    %c0_4 = arith.constant 0 : index
    %c0_5 = arith.constant 0 : index
    %6 = vector.load %arg9[%c0_4, %c0_5] : memref<32x256xf32, #tpu.memory_space<vmem>>, vector<32x256xf32>
    %cst = arith.constant 0.000000e+00 : f32
    %7 = vector.broadcast %cst : f32 to vector<128x256xf32>
    %8 = vector.extract_strided_slice %5 {offsets = [0, 239], sizes = [4, 17], strides = [1, 1]} : vector<4x256xf32> to vector<4x17xf32>
    %9 = vector.extract_strided_slice %5 {offsets = [0, 0], sizes = [4, 239], strides = [1, 1]} : vector<4x256xf32> to vector<4x239xf32>
    %10 = tpu.concatenate %8, %9 in 1 : vector<4x17xf32>, vector<4x239xf32> -> vector<4x256xf32>
    %11 = vector.extract_strided_slice %6 {offsets = [0, 239], sizes = [32, 17], strides = [1, 1]} : vector<32x256xf32> to vector<32x17xf32>
    %12 = vector.extract_strided_slice %6 {offsets = [0, 0], sizes = [32, 239], strides = [1, 1]} : vector<32x256xf32> to vector<32x239xf32>
    %13 = tpu.concatenate %11, %12 in 1 : vector<32x17xf32>, vector<32x239xf32> -> vector<32x256xf32>
    %c0_6 = arith.constant 0 : index
    %c0_7 = arith.constant 0 : index
    %c0_8 = arith.constant 0 : index
    %14 = vector.load %arg6[%c0_6, %c0_7, %c0_8] : memref<9x1x256xf32, #tpu.memory_space<vmem>>, vector<1x1x256xf32>
    %15 = vector.shape_cast %14 : vector<1x1x256xf32> to vector<1x256xf32>
    %16 = vector.broadcast %15 : vector<1x256xf32> to vector<4x256xf32>
    %17 = arith.mulf %10, %16 : vector<4x256xf32>
    %18 = vector.broadcast %15 : vector<1x256xf32> to vector<32x256xf32>
    %19 = arith.mulf %13, %18 : vector<32x256xf32>
    %c0_9 = arith.constant 0 : index
    %c0_10 = arith.constant 0 : index
    %c0_11 = arith.constant 0 : index
    %20 = vector.load %arg3[%c0_9, %c0_10, %c0_11] : memref<9x128x4xbf16, #tpu.memory_space<vmem>>, vector<1x128x4xbf16>
    %21 = vector.shape_cast %20 : vector<1x128x4xbf16> to vector<128x4xbf16>
    %22 = arith.truncf %17 : vector<4x256xf32> to vector<4x256xbf16>
    %cst_12 = arith.constant dense<0.000000e+00> : vector<128x256xf32>
    %23 = tpu.matmul %21, %22, %cst_12 {dimension_numbers = #tpu.dot_dimension_numbers<[1], [0], [0], [1], [0, 0, 1, 1], [], []>} : vector<128x4xbf16>, vector<4x256xbf16>, vector<128x256xf32> -> vector<128x256xf32>
    %24 = arith.addf %7, %23 : vector<128x256xf32>
    %c0_13 = arith.constant 0 : index
    %c0_14 = arith.constant 0 : index
    %c0_15 = arith.constant 0 : index
    %25 = vector.load %arg4[%c0_13, %c0_14, %c0_15] : memref<9x128x32xbf16, #tpu.memory_space<vmem>>, vector<1x128x32xbf16>
    %26 = vector.shape_cast %25 : vector<1x128x32xbf16> to vector<128x32xbf16>
    %27 = arith.truncf %19 : vector<32x256xf32> to vector<32x256xbf16>
    %cst_16 = arith.constant dense<0.000000e+00> : vector<128x256xf32>
    %28 = tpu.matmul %26, %27, %cst_16 {dimension_numbers = #tpu.dot_dimension_numbers<[1], [0], [0], [1], [0, 0, 1, 1], [], []>} : vector<128x32xbf16>, vector<32x256xbf16>, vector<128x256xf32> -> vector<128x256xf32>
    %29 = arith.addf %24, %28 : vector<128x256xf32>
    %30 = vector.extract_strided_slice %5 {offsets = [0, 240], sizes = [4, 16], strides = [1, 1]} : vector<4x256xf32> to vector<4x16xf32>
    %31 = vector.extract_strided_slice %5 {offsets = [0, 0], sizes = [4, 240], strides = [1, 1]} : vector<4x256xf32> to vector<4x240xf32>
    %32 = tpu.concatenate %30, %31 in 1 : vector<4x16xf32>, vector<4x240xf32> -> vector<4x256xf32>
    %33 = vector.extract_strided_slice %6 {offsets = [0, 240], sizes = [32, 16], strides = [1, 1]} : vector<32x256xf32> to vector<32x16xf32>
    %34 = vector.extract_strided_slice %6 {offsets = [0, 0], sizes = [32, 240], strides = [1, 1]} : vector<32x256xf32> to vector<32x240xf32>
    %35 = tpu.concatenate %33, %34 in 1 : vector<32x16xf32>, vector<32x240xf32> -> vector<32x256xf32>
    %c1 = arith.constant 1 : index
    %c0_17 = arith.constant 0 : index
    %c0_18 = arith.constant 0 : index
    %36 = vector.load %arg6[%c1, %c0_17, %c0_18] : memref<9x1x256xf32, #tpu.memory_space<vmem>>, vector<1x1x256xf32>
    %37 = vector.shape_cast %36 : vector<1x1x256xf32> to vector<1x256xf32>
    %38 = vector.broadcast %37 : vector<1x256xf32> to vector<4x256xf32>
    %39 = arith.mulf %32, %38 : vector<4x256xf32>
    %40 = vector.broadcast %37 : vector<1x256xf32> to vector<32x256xf32>
    %41 = arith.mulf %35, %40 : vector<32x256xf32>
    %c1_19 = arith.constant 1 : index
    %c0_20 = arith.constant 0 : index
    %c0_21 = arith.constant 0 : index
    %42 = vector.load %arg3[%c1_19, %c0_20, %c0_21] : memref<9x128x4xbf16, #tpu.memory_space<vmem>>, vector<1x128x4xbf16>
    %43 = vector.shape_cast %42 : vector<1x128x4xbf16> to vector<128x4xbf16>
    %44 = arith.truncf %39 : vector<4x256xf32> to vector<4x256xbf16>
    %cst_22 = arith.constant dense<0.000000e+00> : vector<128x256xf32>
    %45 = tpu.matmul %43, %44, %cst_22 {dimension_numbers = #tpu.dot_dimension_numbers<[1], [0], [0], [1], [0, 0, 1, 1], [], []>} : vector<128x4xbf16>, vector<4x256xbf16>, vector<128x256xf32> -> vector<128x256xf32>
    %46 = arith.addf %29, %45 : vector<128x256xf32>
    %c1_23 = arith.constant 1 : index
    %c0_24 = arith.constant 0 : index
    %c0_25 = arith.constant 0 : index
    %47 = vector.load %arg4[%c1_23, %c0_24, %c0_25] : memref<9x128x32xbf16, #tpu.memory_space<vmem>>, vector<1x128x32xbf16>
    %48 = vector.shape_cast %47 : vector<1x128x32xbf16> to vector<128x32xbf16>
    %49 = arith.truncf %41 : vector<32x256xf32> to vector<32x256xbf16>
    %cst_26 = arith.constant dense<0.000000e+00> : vector<128x256xf32>
    %50 = tpu.matmul %48, %49, %cst_26 {dimension_numbers = #tpu.dot_dimension_numbers<[1], [0], [0], [1], [0, 0, 1, 1], [], []>} : vector<128x32xbf16>, vector<32x256xbf16>, vector<128x256xf32> -> vector<128x256xf32>
    %51 = arith.addf %46, %50 : vector<128x256xf32>
    %52 = vector.extract_strided_slice %5 {offsets = [0, 241], sizes = [4, 15], strides = [1, 1]} : vector<4x256xf32> to vector<4x15xf32>
    %53 = vector.extract_strided_slice %5 {offsets = [0, 0], sizes = [4, 241], strides = [1, 1]} : vector<4x256xf32> to vector<4x241xf32>
    %54 = tpu.concatenate %52, %53 in 1 : vector<4x15xf32>, vector<4x241xf32> -> vector<4x256xf32>
    %55 = vector.extract_strided_slice %6 {offsets = [0, 241], sizes = [32, 15], strides = [1, 1]} : vector<32x256xf32> to vector<32x15xf32>
    %56 = vector.extract_strided_slice %6 {offsets = [0, 0], sizes = [32, 241], strides = [1, 1]} : vector<32x256xf32> to vector<32x241xf32>
    %57 = tpu.concatenate %55, %56 in 1 : vector<32x15xf32>, vector<32x241xf32> -> vector<32x256xf32>
    %c2 = arith.constant 2 : index
    %c0_27 = arith.constant 0 : index
    %c0_28 = arith.constant 0 : index
    %58 = vector.load %arg6[%c2, %c0_27, %c0_28] : memref<9x1x256xf32, #tpu.memory_space<vmem>>, vector<1x1x256xf32>
    %59 = vector.shape_cast %58 : vector<1x1x256xf32> to vector<1x256xf32>
    %60 = vector.broadcast %59 : vector<1x256xf32> to vector<4x256xf32>
    %61 = arith.mulf %54, %60 : vector<4x256xf32>
    %62 = vector.broadcast %59 : vector<1x256xf32> to vector<32x256xf32>
    %63 = arith.mulf %57, %62 : vector<32x256xf32>
    %c2_29 = arith.constant 2 : index
    %c0_30 = arith.constant 0 : index
    %c0_31 = arith.constant 0 : index
    %64 = vector.load %arg3[%c2_29, %c0_30, %c0_31] : memref<9x128x4xbf16, #tpu.memory_space<vmem>>, vector<1x128x4xbf16>
    %65 = vector.shape_cast %64 : vector<1x128x4xbf16> to vector<128x4xbf16>
    %66 = arith.truncf %61 : vector<4x256xf32> to vector<4x256xbf16>
    %cst_32 = arith.constant dense<0.000000e+00> : vector<128x256xf32>
    %67 = tpu.matmul %65, %66, %cst_32 {dimension_numbers = #tpu.dot_dimension_numbers<[1], [0], [0], [1], [0, 0, 1, 1], [], []>} : vector<128x4xbf16>, vector<4x256xbf16>, vector<128x256xf32> -> vector<128x256xf32>
    %68 = arith.addf %51, %67 : vector<128x256xf32>
    %c2_33 = arith.constant 2 : index
    %c0_34 = arith.constant 0 : index
    %c0_35 = arith.constant 0 : index
    %69 = vector.load %arg4[%c2_33, %c0_34, %c0_35] : memref<9x128x32xbf16, #tpu.memory_space<vmem>>, vector<1x128x32xbf16>
    %70 = vector.shape_cast %69 : vector<1x128x32xbf16> to vector<128x32xbf16>
    %71 = arith.truncf %63 : vector<32x256xf32> to vector<32x256xbf16>
    %cst_36 = arith.constant dense<0.000000e+00> : vector<128x256xf32>
    %72 = tpu.matmul %70, %71, %cst_36 {dimension_numbers = #tpu.dot_dimension_numbers<[1], [0], [0], [1], [0, 0, 1, 1], [], []>} : vector<128x32xbf16>, vector<32x256xbf16>, vector<128x256xf32> -> vector<128x256xf32>
    %73 = arith.addf %68, %72 : vector<128x256xf32>
    %74 = vector.extract_strided_slice %5 {offsets = [0, 255], sizes = [4, 1], strides = [1, 1]} : vector<4x256xf32> to vector<4x1xf32>
    %75 = vector.extract_strided_slice %5 {offsets = [0, 0], sizes = [4, 255], strides = [1, 1]} : vector<4x256xf32> to vector<4x255xf32>
    %76 = tpu.concatenate %74, %75 in 1 : vector<4x1xf32>, vector<4x255xf32> -> vector<4x256xf32>
    %77 = vector.extract_strided_slice %6 {offsets = [0, 255], sizes = [32, 1], strides = [1, 1]} : vector<32x256xf32> to vector<32x1xf32>
    %78 = vector.extract_strided_slice %6 {offsets = [0, 0], sizes = [32, 255], strides = [1, 1]} : vector<32x256xf32> to vector<32x255xf32>
    %79 = tpu.concatenate %77, %78 in 1 : vector<32x1xf32>, vector<32x255xf32> -> vector<32x256xf32>
    %c3 = arith.constant 3 : index
    %c0_37 = arith.constant 0 : index
    %c0_38 = arith.constant 0 : index
    %80 = vector.load %arg6[%c3, %c0_37, %c0_38] : memref<9x1x256xf32, #tpu.memory_space<vmem>>, vector<1x1x256xf32>
    %81 = vector.shape_cast %80 : vector<1x1x256xf32> to vector<1x256xf32>
    %82 = vector.broadcast %81 : vector<1x256xf32> to vector<4x256xf32>
    %83 = arith.mulf %76, %82 : vector<4x256xf32>
    %84 = vector.broadcast %81 : vector<1x256xf32> to vector<32x256xf32>
    %85 = arith.mulf %79, %84 : vector<32x256xf32>
    %c3_39 = arith.constant 3 : index
    %c0_40 = arith.constant 0 : index
    %c0_41 = arith.constant 0 : index
    %86 = vector.load %arg3[%c3_39, %c0_40, %c0_41] : memref<9x128x4xbf16, #tpu.memory_space<vmem>>, vector<1x128x4xbf16>
    %87 = vector.shape_cast %86 : vector<1x128x4xbf16> to vector<128x4xbf16>
    %88 = arith.truncf %83 : vector<4x256xf32> to vector<4x256xbf16>
    %cst_42 = arith.constant dense<0.000000e+00> : vector<128x256xf32>
    %89 = tpu.matmul %87, %88, %cst_42 {dimension_numbers = #tpu.dot_dimension_numbers<[1], [0], [0], [1], [0, 0, 1, 1], [], []>} : vector<128x4xbf16>, vector<4x256xbf16>, vector<128x256xf32> -> vector<128x256xf32>
    %90 = arith.addf %73, %89 : vector<128x256xf32>
    %c3_43 = arith.constant 3 : index
    %c0_44 = arith.constant 0 : index
    %c0_45 = arith.constant 0 : index
    %91 = vector.load %arg4[%c3_43, %c0_44, %c0_45] : memref<9x128x32xbf16, #tpu.memory_space<vmem>>, vector<1x128x32xbf16>
    %92 = vector.shape_cast %91 : vector<1x128x32xbf16> to vector<128x32xbf16>
    %93 = arith.truncf %85 : vector<32x256xf32> to vector<32x256xbf16>
    %cst_46 = arith.constant dense<0.000000e+00> : vector<128x256xf32>
    %94 = tpu.matmul %92, %93, %cst_46 {dimension_numbers = #tpu.dot_dimension_numbers<[1], [0], [0], [1], [0, 0, 1, 1], [], []>} : vector<128x32xbf16>, vector<32x256xbf16>, vector<128x256xf32> -> vector<128x256xf32>
    %95 = arith.addf %90, %94 : vector<128x256xf32>
    %c4 = arith.constant 4 : index
    %c0_47 = arith.constant 0 : index
    %c0_48 = arith.constant 0 : index
    %96 = vector.load %arg3[%c4, %c0_47, %c0_48] : memref<9x128x4xbf16, #tpu.memory_space<vmem>>, vector<1x128x4xbf16>
    %97 = vector.shape_cast %96 : vector<1x128x4xbf16> to vector<128x4xbf16>
    %98 = arith.truncf %5 : vector<4x256xf32> to vector<4x256xbf16>
    %cst_49 = arith.constant dense<0.000000e+00> : vector<128x256xf32>
    %99 = tpu.matmul %97, %98, %cst_49 {dimension_numbers = #tpu.dot_dimension_numbers<[1], [0], [0], [1], [0, 0, 1, 1], [], []>} : vector<128x4xbf16>, vector<4x256xbf16>, vector<128x256xf32> -> vector<128x256xf32>
    %100 = arith.addf %95, %99 : vector<128x256xf32>
    %c4_50 = arith.constant 4 : index
    %c0_51 = arith.constant 0 : index
    %c0_52 = arith.constant 0 : index
    %101 = vector.load %arg4[%c4_50, %c0_51, %c0_52] : memref<9x128x32xbf16, #tpu.memory_space<vmem>>, vector<1x128x32xbf16>
    %102 = vector.shape_cast %101 : vector<1x128x32xbf16> to vector<128x32xbf16>
    %103 = arith.truncf %6 : vector<32x256xf32> to vector<32x256xbf16>
    %cst_53 = arith.constant dense<0.000000e+00> : vector<128x256xf32>
    %104 = tpu.matmul %102, %103, %cst_53 {dimension_numbers = #tpu.dot_dimension_numbers<[1], [0], [0], [1], [0, 0, 1, 1], [], []>} : vector<128x32xbf16>, vector<32x256xbf16>, vector<128x256xf32> -> vector<128x256xf32>
    %105 = arith.addf %100, %104 : vector<128x256xf32>
    %106 = vector.extract_strided_slice %5 {offsets = [0, 1], sizes = [4, 255], strides = [1, 1]} : vector<4x256xf32> to vector<4x255xf32>
    %107 = vector.extract_strided_slice %5 {offsets = [0, 0], sizes = [4, 1], strides = [1, 1]} : vector<4x256xf32> to vector<4x1xf32>
    %108 = tpu.concatenate %106, %107 in 1 : vector<4x255xf32>, vector<4x1xf32> -> vector<4x256xf32>
    %109 = vector.extract_strided_slice %6 {offsets = [0, 1], sizes = [32, 255], strides = [1, 1]} : vector<32x256xf32> to vector<32x255xf32>
    %110 = vector.extract_strided_slice %6 {offsets = [0, 0], sizes = [32, 1], strides = [1, 1]} : vector<32x256xf32> to vector<32x1xf32>
    %111 = tpu.concatenate %109, %110 in 1 : vector<32x255xf32>, vector<32x1xf32> -> vector<32x256xf32>
    %c5 = arith.constant 5 : index
    %c0_54 = arith.constant 0 : index
    %c0_55 = arith.constant 0 : index
    %112 = vector.load %arg6[%c5, %c0_54, %c0_55] : memref<9x1x256xf32, #tpu.memory_space<vmem>>, vector<1x1x256xf32>
    %113 = vector.shape_cast %112 : vector<1x1x256xf32> to vector<1x256xf32>
    %114 = vector.broadcast %113 : vector<1x256xf32> to vector<4x256xf32>
    %115 = arith.mulf %108, %114 : vector<4x256xf32>
    %116 = vector.broadcast %113 : vector<1x256xf32> to vector<32x256xf32>
    %117 = arith.mulf %111, %116 : vector<32x256xf32>
    %c5_56 = arith.constant 5 : index
    %c0_57 = arith.constant 0 : index
    %c0_58 = arith.constant 0 : index
    %118 = vector.load %arg3[%c5_56, %c0_57, %c0_58] : memref<9x128x4xbf16, #tpu.memory_space<vmem>>, vector<1x128x4xbf16>
    %119 = vector.shape_cast %118 : vector<1x128x4xbf16> to vector<128x4xbf16>
    %120 = arith.truncf %115 : vector<4x256xf32> to vector<4x256xbf16>
    %cst_59 = arith.constant dense<0.000000e+00> : vector<128x256xf32>
    %121 = tpu.matmul %119, %120, %cst_59 {dimension_numbers = #tpu.dot_dimension_numbers<[1], [0], [0], [1], [0, 0, 1, 1], [], []>} : vector<128x4xbf16>, vector<4x256xbf16>, vector<128x256xf32> -> vector<128x256xf32>
    %122 = arith.addf %105, %121 : vector<128x256xf32>
    %c5_60 = arith.constant 5 : index
    %c0_61 = arith.constant 0 : index
    %c0_62 = arith.constant 0 : index
    %123 = vector.load %arg4[%c5_60, %c0_61, %c0_62] : memref<9x128x32xbf16, #tpu.memory_space<vmem>>, vector<1x128x32xbf16>
    %124 = vector.shape_cast %123 : vector<1x128x32xbf16> to vector<128x32xbf16>
    %125 = arith.truncf %117 : vector<32x256xf32> to vector<32x256xbf16>
    %cst_63 = arith.constant dense<0.000000e+00> : vector<128x256xf32>
    %126 = tpu.matmul %124, %125, %cst_63 {dimension_numbers = #tpu.dot_dimension_numbers<[1], [0], [0], [1], [0, 0, 1, 1], [], []>} : vector<128x32xbf16>, vector<32x256xbf16>, vector<128x256xf32> -> vector<128x256xf32>
    %127 = arith.addf %122, %126 : vector<128x256xf32>
    %128 = vector.extract_strided_slice %5 {offsets = [0, 15], sizes = [4, 241], strides = [1, 1]} : vector<4x256xf32> to vector<4x241xf32>
    %129 = vector.extract_strided_slice %5 {offsets = [0, 0], sizes = [4, 15], strides = [1, 1]} : vector<4x256xf32> to vector<4x15xf32>
    %130 = tpu.concatenate %128, %129 in 1 : vector<4x241xf32>, vector<4x15xf32> -> vector<4x256xf32>
    %131 = vector.extract_strided_slice %6 {offsets = [0, 15], sizes = [32, 241], strides = [1, 1]} : vector<32x256xf32> to vector<32x241xf32>
    %132 = vector.extract_strided_slice %6 {offsets = [0, 0], sizes = [32, 15], strides = [1, 1]} : vector<32x256xf32> to vector<32x15xf32>
    %133 = tpu.concatenate %131, %132 in 1 : vector<32x241xf32>, vector<32x15xf32> -> vector<32x256xf32>
    %c6 = arith.constant 6 : index
    %c0_64 = arith.constant 0 : index
    %c0_65 = arith.constant 0 : index
    %134 = vector.load %arg6[%c6, %c0_64, %c0_65] : memref<9x1x256xf32, #tpu.memory_space<vmem>>, vector<1x1x256xf32>
    %135 = vector.shape_cast %134 : vector<1x1x256xf32> to vector<1x256xf32>
    %136 = vector.broadcast %135 : vector<1x256xf32> to vector<4x256xf32>
    %137 = arith.mulf %130, %136 : vector<4x256xf32>
    %138 = vector.broadcast %135 : vector<1x256xf32> to vector<32x256xf32>
    %139 = arith.mulf %133, %138 : vector<32x256xf32>
    %c6_66 = arith.constant 6 : index
    %c0_67 = arith.constant 0 : index
    %c0_68 = arith.constant 0 : index
    %140 = vector.load %arg3[%c6_66, %c0_67, %c0_68] : memref<9x128x4xbf16, #tpu.memory_space<vmem>>, vector<1x128x4xbf16>
    %141 = vector.shape_cast %140 : vector<1x128x4xbf16> to vector<128x4xbf16>
    %142 = arith.truncf %137 : vector<4x256xf32> to vector<4x256xbf16>
    %cst_69 = arith.constant dense<0.000000e+00> : vector<128x256xf32>
    %143 = tpu.matmul %141, %142, %cst_69 {dimension_numbers = #tpu.dot_dimension_numbers<[1], [0], [0], [1], [0, 0, 1, 1], [], []>} : vector<128x4xbf16>, vector<4x256xbf16>, vector<128x256xf32> -> vector<128x256xf32>
    %144 = arith.addf %127, %143 : vector<128x256xf32>
    %c6_70 = arith.constant 6 : index
    %c0_71 = arith.constant 0 : index
    %c0_72 = arith.constant 0 : index
    %145 = vector.load %arg4[%c6_70, %c0_71, %c0_72] : memref<9x128x32xbf16, #tpu.memory_space<vmem>>, vector<1x128x32xbf16>
    %146 = vector.shape_cast %145 : vector<1x128x32xbf16> to vector<128x32xbf16>
    %147 = arith.truncf %139 : vector<32x256xf32> to vector<32x256xbf16>
    %cst_73 = arith.constant dense<0.000000e+00> : vector<128x256xf32>
    %148 = tpu.matmul %146, %147, %cst_73 {dimension_numbers = #tpu.dot_dimension_numbers<[1], [0], [0], [1], [0, 0, 1, 1], [], []>} : vector<128x32xbf16>, vector<32x256xbf16>, vector<128x256xf32> -> vector<128x256xf32>
    %149 = arith.addf %144, %148 : vector<128x256xf32>
    %150 = vector.extract_strided_slice %5 {offsets = [0, 16], sizes = [4, 240], strides = [1, 1]} : vector<4x256xf32> to vector<4x240xf32>
    %151 = vector.extract_strided_slice %5 {offsets = [0, 0], sizes = [4, 16], strides = [1, 1]} : vector<4x256xf32> to vector<4x16xf32>
    %152 = tpu.concatenate %150, %151 in 1 : vector<4x240xf32>, vector<4x16xf32> -> vector<4x256xf32>
    %153 = vector.extract_strided_slice %6 {offsets = [0, 16], sizes = [32, 240], strides = [1, 1]} : vector<32x256xf32> to vector<32x240xf32>
    %154 = vector.extract_strided_slice %6 {offsets = [0, 0], sizes = [32, 16], strides = [1, 1]} : vector<32x256xf32> to vector<32x16xf32>
    %155 = tpu.concatenate %153, %154 in 1 : vector<32x240xf32>, vector<32x16xf32> -> vector<32x256xf32>
    %c7 = arith.constant 7 : index
    %c0_74 = arith.constant 0 : index
    %c0_75 = arith.constant 0 : index
    %156 = vector.load %arg6[%c7, %c0_74, %c0_75] : memref<9x1x256xf32, #tpu.memory_space<vmem>>, vector<1x1x256xf32>
    %157 = vector.shape_cast %156 : vector<1x1x256xf32> to vector<1x256xf32>
    %158 = vector.broadcast %157 : vector<1x256xf32> to vector<4x256xf32>
    %159 = arith.mulf %152, %158 : vector<4x256xf32>
    %160 = vector.broadcast %157 : vector<1x256xf32> to vector<32x256xf32>
    %161 = arith.mulf %155, %160 : vector<32x256xf32>
    %c7_76 = arith.constant 7 : index
    %c0_77 = arith.constant 0 : index
    %c0_78 = arith.constant 0 : index
    %162 = vector.load %arg3[%c7_76, %c0_77, %c0_78] : memref<9x128x4xbf16, #tpu.memory_space<vmem>>, vector<1x128x4xbf16>
    %163 = vector.shape_cast %162 : vector<1x128x4xbf16> to vector<128x4xbf16>
    %164 = arith.truncf %159 : vector<4x256xf32> to vector<4x256xbf16>
    %cst_79 = arith.constant dense<0.000000e+00> : vector<128x256xf32>
    %165 = tpu.matmul %163, %164, %cst_79 {dimension_numbers = #tpu.dot_dimension_numbers<[1], [0], [0], [1], [0, 0, 1, 1], [], []>} : vector<128x4xbf16>, vector<4x256xbf16>, vector<128x256xf32> -> vector<128x256xf32>
    %166 = arith.addf %149, %165 : vector<128x256xf32>
    %c7_80 = arith.constant 7 : index
    %c0_81 = arith.constant 0 : index
    %c0_82 = arith.constant 0 : index
    %167 = vector.load %arg4[%c7_80, %c0_81, %c0_82] : memref<9x128x32xbf16, #tpu.memory_space<vmem>>, vector<1x128x32xbf16>
    %168 = vector.shape_cast %167 : vector<1x128x32xbf16> to vector<128x32xbf16>
    %169 = arith.truncf %161 : vector<32x256xf32> to vector<32x256xbf16>
    %cst_83 = arith.constant dense<0.000000e+00> : vector<128x256xf32>
    %170 = tpu.matmul %168, %169, %cst_83 {dimension_numbers = #tpu.dot_dimension_numbers<[1], [0], [0], [1], [0, 0, 1, 1], [], []>} : vector<128x32xbf16>, vector<32x256xbf16>, vector<128x256xf32> -> vector<128x256xf32>
    %171 = arith.addf %166, %170 : vector<128x256xf32>
    %172 = vector.extract_strided_slice %5 {offsets = [0, 17], sizes = [4, 239], strides = [1, 1]} : vector<4x256xf32> to vector<4x239xf32>
    %173 = vector.extract_strided_slice %5 {offsets = [0, 0], sizes = [4, 17], strides = [1, 1]} : vector<4x256xf32> to vector<4x17xf32>
    %174 = tpu.concatenate %172, %173 in 1 : vector<4x239xf32>, vector<4x17xf32> -> vector<4x256xf32>
    %175 = vector.extract_strided_slice %6 {offsets = [0, 17], sizes = [32, 239], strides = [1, 1]} : vector<32x256xf32> to vector<32x239xf32>
    %176 = vector.extract_strided_slice %6 {offsets = [0, 0], sizes = [32, 17], strides = [1, 1]} : vector<32x256xf32> to vector<32x17xf32>
    %177 = tpu.concatenate %175, %176 in 1 : vector<32x239xf32>, vector<32x17xf32> -> vector<32x256xf32>
    %c8 = arith.constant 8 : index
    %c0_84 = arith.constant 0 : index
    %c0_85 = arith.constant 0 : index
    %178 = vector.load %arg6[%c8, %c0_84, %c0_85] : memref<9x1x256xf32, #tpu.memory_space<vmem>>, vector<1x1x256xf32>
    %179 = vector.shape_cast %178 : vector<1x1x256xf32> to vector<1x256xf32>
    %180 = vector.broadcast %179 : vector<1x256xf32> to vector<4x256xf32>
    %181 = arith.mulf %174, %180 : vector<4x256xf32>
    %182 = vector.broadcast %179 : vector<1x256xf32> to vector<32x256xf32>
    %183 = arith.mulf %177, %182 : vector<32x256xf32>
    %c8_86 = arith.constant 8 : index
    %c0_87 = arith.constant 0 : index
    %c0_88 = arith.constant 0 : index
    %184 = vector.load %arg3[%c8_86, %c0_87, %c0_88] : memref<9x128x4xbf16, #tpu.memory_space<vmem>>, vector<1x128x4xbf16>
    %185 = vector.shape_cast %184 : vector<1x128x4xbf16> to vector<128x4xbf16>
    %186 = arith.truncf %181 : vector<4x256xf32> to vector<4x256xbf16>
    %cst_89 = arith.constant dense<0.000000e+00> : vector<128x256xf32>
    %187 = tpu.matmul %185, %186, %cst_89 {dimension_numbers = #tpu.dot_dimension_numbers<[1], [0], [0], [1], [0, 0, 1, 1], [], []>} : vector<128x4xbf16>, vector<4x256xbf16>, vector<128x256xf32> -> vector<128x256xf32>
    %188 = arith.addf %171, %187 : vector<128x256xf32>
    %c8_90 = arith.constant 8 : index
    %c0_91 = arith.constant 0 : index
    %c0_92 = arith.constant 0 : index
    %189 = vector.load %arg4[%c8_90, %c0_91, %c0_92] : memref<9x128x32xbf16, #tpu.memory_space<vmem>>, vector<1x128x32xbf16>
    %190 = vector.shape_cast %189 : vector<1x128x32xbf16> to vector<128x32xbf16>
    %191 = arith.truncf %183 : vector<32x256xf32> to vector<32x256xbf16>
    %cst_93 = arith.constant dense<0.000000e+00> : vector<128x256xf32>
    %192 = tpu.matmul %190, %191, %cst_93 {dimension_numbers = #tpu.dot_dimension_numbers<[1], [0], [0], [1], [0, 0, 1, 1], [], []>} : vector<128x32xbf16>, vector<32x256xbf16>, vector<128x256xf32> -> vector<128x256xf32>
    %193 = arith.addf %188, %192 : vector<128x256xf32>
    %c0_94 = arith.constant 0 : index
    %c0_95 = arith.constant 0 : index
    %194 = vector.load %arg5[%c0_94, %c0_95] : memref<128x1xf32, #tpu.memory_space<vmem>>, vector<128x1xf32>
    %195 = vector.broadcast %194 : vector<128x1xf32> to vector<128x256xf32>
    %196 = arith.addf %193, %195 : vector<128x256xf32>
    %197 = vector.extract_strided_slice %196 {offsets = [0, 0], sizes = [32, 256], strides = [1, 1]} : vector<128x256xf32> to vector<32x256xf32>
    %198 = arith.negf %197 : vector<32x256xf32>
    %199 = math.exp %198 : vector<32x256xf32>
    %cst_96 = arith.constant 1.000000e+00 : f32
    %200 = vector.broadcast %cst_96 : f32 to vector<32x256xf32>
    %201 = arith.addf %200, %199 : vector<32x256xf32>
    %202 = arith.divf %200, %201 : vector<32x256xf32>
    %203 = vector.extract_strided_slice %196 {offsets = [32, 0], sizes = [32, 256], strides = [1, 1]} : vector<128x256xf32> to vector<32x256xf32>
    %204 = arith.negf %203 : vector<32x256xf32>
    %205 = math.exp %204 : vector<32x256xf32>
    %cst_97 = arith.constant 1.000000e+00 : f32
    %206 = vector.broadcast %cst_97 : f32 to vector<32x256xf32>
    %207 = arith.addf %206, %205 : vector<32x256xf32>
    %208 = arith.divf %206, %207 : vector<32x256xf32>
    %209 = vector.extract_strided_slice %196 {offsets = [64, 0], sizes = [32, 256], strides = [1, 1]} : vector<128x256xf32> to vector<32x256xf32>
    %210 = arith.negf %209 : vector<32x256xf32>
    %211 = math.exp %210 : vector<32x256xf32>
    %cst_98 = arith.constant 1.000000e+00 : f32
    %212 = vector.broadcast %cst_98 : f32 to vector<32x256xf32>
    %213 = arith.addf %212, %211 : vector<32x256xf32>
    %214 = arith.divf %212, %213 : vector<32x256xf32>
    %215 = vector.extract_strided_slice %196 {offsets = [96, 0], sizes = [32, 256], strides = [1, 1]} : vector<128x256xf32> to vector<32x256xf32>
    %216 = math.tanh %215 : vector<32x256xf32>
    %c0_99 = arith.constant 0 : index
    %c0_100 = arith.constant 0 : index
    %217 = vector.load %arg10[%c0_99, %c0_100] : memref<32x256xf32, #tpu.memory_space<vmem>>, vector<32x256xf32>
    %218 = arith.mulf %208, %217 : vector<32x256xf32>
    %219 = arith.mulf %202, %216 : vector<32x256xf32>
    %220 = arith.addf %218, %219 : vector<32x256xf32>
    %221 = math.tanh %220 : vector<32x256xf32>
    %222 = arith.mulf %214, %221 : vector<32x256xf32>
    %c0_101 = arith.constant 0 : index
    %c0_102 = arith.constant 0 : index
    %223 = vector.load %arg10[%c0_101, %c0_102] : memref<32x256xf32, #tpu.memory_space<vmem>>, vector<32x256xf32>
    tpu.vector_store %arg10[%c0_101, %c0_102], %220 {strides = array<i32>} : memref<32x256xf32, #tpu.memory_space<vmem>>, vector<32x256xf32>,
    %c0_103 = arith.constant 0 : index
    %c0_104 = arith.constant 0 : index
    %224 = vector.load %arg9[%c0_103, %c0_104] : memref<32x256xf32, #tpu.memory_space<vmem>>, vector<32x256xf32>
    tpu.vector_store %arg9[%c0_103, %c0_104], %222 {strides = array<i32>} : memref<32x256xf32, #tpu.memory_space<vmem>>, vector<32x256xf32>,
    %c0_105 = arith.constant 0 : index
    %c0_106 = arith.constant 0 : index
    %c0_107 = arith.constant 0 : index
    %c0_108 = arith.constant 0 : index
    %225 = vector.load %arg7[%c0_105, %c0_106, %c0_107, %c0_108] : memref<1x1x32x256xf32, #tpu.memory_space<vmem>>, vector<1x1x32x256xf32>
    %226 = vector.shape_cast %225 : vector<1x1x32x256xf32> to vector<32x256xf32>
    %227 = vector.shape_cast %222 : vector<32x256xf32> to vector<1x1x32x256xf32>
    tpu.vector_store %arg7[%c0_105, %c0_106, %c0_107, %c0_108], %227 {strides = array<i32>} : memref<1x1x32x256xf32, #tpu.memory_space<vmem>>, vector<1x1x32x256xf32>,
    %c0_109 = arith.constant 0 : index
    %c0_110 = arith.constant 0 : index
    %c0_111 = arith.constant 0 : index
    %228 = vector.load %arg8[%c0_109, %c0_110, %c0_111] : memref<1x32x256xf32, #tpu.memory_space<vmem>>, vector<1x32x256xf32>
    %229 = vector.shape_cast %228 : vector<1x32x256xf32> to vector<32x256xf32>
    %230 = vector.shape_cast %220 : vector<32x256xf32> to vector<1x32x256xf32>
    tpu.vector_store %arg8[%c0_109, %c0_110, %c0_111], %230 {strides = array<i32>} : memref<1x32x256xf32, #tpu.memory_space<vmem>>, vector<1x32x256xf32>,
    return
  }
  func.func @transform_0(%arg0: i32, %arg1: i32) -> (i32, i32, i32, i32) {
    %c0_i32 = arith.constant 0 : i32
    %c0_i32_0 = arith.constant 0 : i32
    %c0_i32_1 = arith.constant 0 : i32
    return %arg0, %arg1, %c0_i32, %c0_i32_0 : i32, i32, i32, i32
  }
  func.func @transform_1(%arg0: i32, %arg1: i32) -> (i32, i32, i32) {
    %c0_i32 = arith.constant 0 : i32
    %c0_i32_0 = arith.constant 0 : i32
    %c0_i32_1 = arith.constant 0 : i32
    %c0_i32_2 = arith.constant 0 : i32
    return %c0_i32, %c0_i32_0, %c0_i32_1 : i32, i32, i32
  }
  func.func @transform_2(%arg0: i32, %arg1: i32) -> (i32, i32, i32) {
    %c0_i32 = arith.constant 0 : i32
    %c0_i32_0 = arith.constant 0 : i32
    %c0_i32_1 = arith.constant 0 : i32
    %c0_i32_2 = arith.constant 0 : i32
    return %c0_i32, %c0_i32_0, %c0_i32_1 : i32, i32, i32
  }
  func.func @transform_3(%arg0: i32, %arg1: i32) -> (i32, i32) {
    %c0_i32 = arith.constant 0 : i32
    %c0_i32_0 = arith.constant 0 : i32
    %c0_i32_1 = arith.constant 0 : i32
    return %c0_i32, %c0_i32_0 : i32, i32
  }
  func.func @transform_4(%arg0: i32, %arg1: i32) -> (i32, i32, i32) {
    %c0_i32 = arith.constant 0 : i32
    %c0_i32_0 = arith.constant 0 : i32
    %c0_i32_1 = arith.constant 0 : i32
    %c0_i32_2 = arith.constant 0 : i32
    return %c0_i32, %c0_i32_0, %c0_i32_1 : i32, i32, i32
  }
  func.func @transform_5(%arg0: i32, %arg1: i32) -> (i32, i32, i32, i32) {
    %c0_i32 = arith.constant 0 : i32
    %c0_i32_0 = arith.constant 0 : i32
    %c0_i32_1 = arith.constant 0 : i32
    return %arg0, %arg1, %c0_i32, %c0_i32_0 : i32, i32, i32, i32
  }
  func.func @transform_6(%arg0: i32, %arg1: i32) -> (i32, i32, i32) {
    %c0_i32 = arith.constant 0 : i32
    %c0_i32_0 = arith.constant 0 : i32
    %c0_i32_1 = arith.constant 0 : i32
    return %arg0, %c0_i32, %c0_i32_0 : i32, i32, i32
  }
}

</mosaic_0001>

<llo_original>
// kernel: tpu_custom_call.1
$region0: #{tpu_custom_call.1}
  #allocation0 [shape = 'u32[]', space=smem, size = 0x4, offset = 0x4, fixed_abs, tag = 'smem constant byte address 0x4 - core index']
  #allocation1 [shape = 'u32[144,128]{1,0:T(1,128)}', space=vmem, size = 0x12000, scoped, tag = 'internal scratch']
  #allocation2 [shape = 'f32[32,256]{1,0:T(8,128)}', space=vmem, size = 0x8000, scoped, tag = 'scratch operand']
  #allocation3 [shape = 'f32[32,256]{1,0:T(8,128)}', space=vmem, size = 0x8000, scoped, tag = 'scratch operand']
  %s0 = inlined_call_operand.vmem [shape: bf16[2,8,4,256], index: 0, kind: input, shape index: {}]
  %s1 = inlined_call_operand.vmem [shape: bf16[9,128,4], index: 1, kind: input, shape index: {}]
  %s2 = inlined_call_operand.vmem [shape: bf16[9,128,32], index: 2, kind: input, shape index: {}]
  %s3 = inlined_call_operand.vmem [shape: f32[128,1], index: 3, kind: input, shape index: {}]
  %s4 = inlined_call_operand.vmem [shape: f32[9,1,256], index: 4, kind: input, shape index: {}]
  %s5 = inlined_call_operand.hbm [shape: f32[2,8,32,256], index: 5, kind: output, shape index: {0}]
  %s6 = inlined_call_operand.hbm [shape: f32[2,32,256], index: 6, kind: output, shape index: {1}]
  %7 = xla_tuple %s5, %s6
  %s8 = sld [smem:[#allocation0]]
  $region65: #{tpu_custom_call.1} parent=0
    _
  %s10 = ssub.s32 1, %s8
  %s11 = scalar_select 0, %s10, %s8
  $region1: #{tpu_custom_call.1} parent=0
    #allocation4 [shape = 'u8[65536]{0}', space=vmem, size = 0x10000, scoped, tag = 'output window, operand 0']
    #allocation5 [shape = 's32[2]{0}', space=sflag, size = 0x8, scoped, tag = 'scoped memory for tpu_custom_call.1']
    #allocation6 [shape = 'u8[65536]{0}', space=vmem, size = 0x10000, scoped, tag = 'output window, operand 1']
    #allocation7 [shape = 's32[2]{0}', space=sflag, size = 0x8, scoped, tag = 'scoped memory for tpu_custom_call.1']
    %12 = vsyncpa [#allocation5], 0
    %s13 = scalar_lea.sflag [#allocation5], 1
    %14 = vsyncpa %s13, 0
    %15 = vsyncpa [#allocation7], 0
    %s16 = scalar_lea.sflag [#allocation7], 1
    %17 = vsyncpa %s16, 0
    loop: start=0, step=1, limit=18
    $region2: #{tpu_custom_call.1} parent=1 // loop_pre_header
      _
    $region3: #{tpu_custom_call.1} parent=1 // loop_header
      %s19 = sphi 0, %s23
      %p20 = scmp.ge.s32.totalorder %s19, 18
      %s26 = sphi 0, %s38
      %s27 = sphi 0, %s34
      %s28 = sphi 0, %s26
      %s29 = sphi 0, %s27
      %s30 = sphi 0, %s28
      %s31 = sphi 0, %s29
      %s43 = sphi 0, %s45
      %s46 = sphi 0, %s43
      %s47 = sphi 0, %s46
      %s63 = sphi 0, %s47
      %s67 = sphi 0, %s67
      %s69 = sphi 0, %s67
      %s70 = sphi 0, %s69
      %s84 = sphi 0, %s70
      %s88 = sphi 0, %s88
      %s90 = sphi 0, %s88
      %s91 = sphi 0, %s90
      %s105 = sphi 0, %s91
      %s109 = sphi 0, %s109
      %s111 = sphi 0, %s109
      %s112 = sphi 0, %s111
      %s126 = sphi 0, %s112
      %s130 = sphi 0, %s130
      %s132 = sphi 0, %s130
      %s133 = sphi 0, %s132
      %s147 = sphi 0, %s133
      %s155 = sphi 0, %s157
      %s158 = sphi 0, %s155
      %s159 = sphi 0, %s158
      %s175 = sphi 0, %s159
      %s181 = sphi 0, %s183
      %s184 = sphi 0, %s181
      %s185 = sphi 0, %s184
      %s201 = sphi 0, %s185
    $region4: #{tpu_custom_call.1} parent=1 // loop_header_branch
      %22 = sbr.rel (%p20) target = $region8
    $region5: #{tpu_custom_call.1} parent=1 // loop_body
      %s24 = ssub.s32 %s19, 1
      %s25 = ssub.s32 %s19, 2
      %s32 = sadd.s32 1, %s27
      %p33 = scmp.ge.s32.totalorder %s32, 8
      %s34 = scalar_select %p33, 0, %s32
      %s35 = sadd.s32 1, %s26
      %s36 = scalar_select %p33, %s35, %s26
      %p37 = scmp.ge.s32.totalorder %s36, 2
      %s38 = scalar_select %p37, 0, %s36
      %s39 = ssub.s32 %s26, %s38
      %s40 = ssub.s32 %s27, %s34
      %s41 = sor.u32 %s39, %s40
      %p42 = scmp.eq.s32.totalorder %s41, 0
      %s44 = sadd.s32 %s43, 1
      %s45 = scalar_select %p42, %s43, %s44
      %p48 = pneg %p42
      %p49 = scmp.eq.s32.totalorder %s19, 15
      %p50 = por %p48, %p49
      %p51 = scmp.ne.s32.totalorder %s43, %s46
      %p52 = scmp.eq.s32.totalorder %s19, 0
      %p53 = por %p51, %p52
      %p54 = scmp.ne.s32.totalorder %s43, %s46
      %p55 = scmp.eq.s32.totalorder %s24, 15
      %p56 = por %p54, %p55
      %p57 = scmp.ne.s32.totalorder %s46, %s47
      %p58 = scmp.eq.s32.totalorder %s24, 0
      %p59 = por %p57, %p58
      %p60 = scmp.ne.s32.totalorder %s46, %s47
      %p61 = scmp.eq.s32.totalorder %s25, 15
      %p62 = por %p60, %p61
      %p64 = scmp.ne.s32.totalorder %s47, %s63
      %p65 = scmp.eq.s32.totalorder %s25, 0
      %p66 = por %p64, %p65
      %s68 = sadd.s32 %s67, 1
      %p71 = scmp.eq.s32.totalorder %s19, 15
      %p72 = scmp.ne.s32.totalorder %s67, %s69
      %p73 = scmp.eq.s32.totalorder %s19, 0
      %p74 = por %p72, %p73
      %p75 = scmp.ne.s32.totalorder %s67, %s69
      %p76 = scmp.eq.s32.totalorder %s24, 15
      %p77 = por %p75, %p76
      %p78 = scmp.ne.s32.totalorder %s69, %s70
      %p79 = scmp.eq.s32.totalorder %s24, 0
      %p80 = por %p78, %p79
      %p81 = scmp.ne.s32.totalorder %s69, %s70
      %p82 = scmp.eq.s32.totalorder %s25, 15
      %p83 = por %p81, %p82
      %p85 = scmp.ne.s32.totalorder %s70, %s84
      %p86 = scmp.eq.s32.totalorder %s25, 0
      %p87 = por %p85, %p86
      %s89 = sadd.s32 %s88, 1
      %p92 = scmp.eq.s32.totalorder %s19, 15
      %p93 = scmp.ne.s32.totalorder %s88, %s90
      %p94 = scmp.eq.s32.totalorder %s19, 0
      %p95 = por %p93, %p94
      %p96 = scmp.ne.s32.totalorder %s88, %s90
      %p97 = scmp.eq.s32.totalorder %s24, 15
      %p98 = por %p96, %p97
      %p99 = scmp.ne.s32.totalorder %s90, %s91
      %p100 = scmp.eq.s32.totalorder %s24, 0
      %p101 = por %p99, %p100
      %p102 = scmp.ne.s32.totalorder %s90, %s91
      %p103 = scmp.eq.s32.totalorder %s25, 15
      %p104 = por %p102, %p103
      %p106 = scmp.ne.s32.totalorder %s91, %s105
      %p107 = scmp.eq.s32.totalorder %s25, 0
      %p108 = por %p106, %p107
      %s110 = sadd.s32 %s109, 1
      %p113 = scmp.eq.s32.totalorder %s19, 15
      %p114 = scmp.ne.s32.totalorder %s109, %s111
      %p115 = scmp.eq.s32.totalorder %s19, 0
      %p116 = por %p114, %p115
      %p117 = scmp.ne.s32.totalorder %s109, %s111
      %p118 = scmp.eq.s32.totalorder %s24, 15
      %p119 = por %p117, %p118
      %p120 = scmp.ne.s32.totalorder %s111, %s112
      %p121 = scmp.eq.s32.totalorder %s24, 0
      %p122 = por %p120, %p121
      %p123 = scmp.ne.s32.totalorder %s111, %s112
      %p124 = scmp.eq.s32.totalorder %s25, 15
      %p125 = por %p123, %p124
      %p127 = scmp.ne.s32.totalorder %s112, %s126
      %p128 = scmp.eq.s32.totalorder %s25, 0
      %p129 = por %p127, %p128
      %s131 = sadd.s32 %s130, 1
      %p134 = scmp.eq.s32.totalorder %s19, 15
      %p135 = scmp.ne.s32.totalorder %s130, %s132
      %p136 = scmp.eq.s32.totalorder %s19, 0
      %p137 = por %p135, %p136
      %p138 = scmp.ne.s32.totalorder %s130, %s132
      %p139 = scmp.eq.s32.totalorder %s24, 15
      %p140 = por %p138, %p139
      %p141 = scmp.ne.s32.totalorder %s132, %s133
      %p142 = scmp.eq.s32.totalorder %s24, 0
      %p143 = por %p141, %p142
      %p144 = scmp.ne.s32.totalorder %s132, %s133
      %p145 = scmp.eq.s32.totalorder %s25, 15
      %p146 = por %p144, %p145
      %p148 = scmp.ne.s32.totalorder %s133, %s147
      %p149 = scmp.eq.s32.totalorder %s25, 0
      %p150 = por %p148, %p149
      %s151 = ssub.s32 %s26, %s38
      %s152 = ssub.s32 %s27, %s34
      %s153 = sor.u32 %s151, %s152
      %p154 = scmp.eq.s32.totalorder %s153, 0
      %s156 = sadd.s32 %s155, 1
      %s157 = scalar_select %p154, %s155, %s156
      %p160 = pneg %p154
      %p161 = scmp.eq.s32.totalorder %s19, 15
      %p162 = por %p160, %p161
      %p163 = scmp.ne.s32.totalorder %s155, %s158
      %p164 = scmp.eq.s32.totalorder %s19, 0
      %p165 = por %p163, %p164
      %p166 = scmp.ne.s32.totalorder %s155, %s158
      %p167 = scmp.eq.s32.totalorder %s24, 15
      %p168 = por %p166, %p167
      %p169 = scmp.ne.s32.totalorder %s158, %s159
      %p170 = scmp.eq.s32.totalorder %s24, 0
      %p171 = por %p169, %p170
      %p172 = scmp.ne.s32.totalorder %s158, %s159
      %p173 = scmp.eq.s32.totalorder %s25, 15
      %p174 = por %p172, %p173
      %p176 = scmp.ne.s32.totalorder %s159, %s175
      %p177 = scmp.eq.s32.totalorder %s25, 0
      %p178 = por %p176, %p177
      %s179 = ssub.s32 %s26, %s38
      %p180 = scmp.eq.s32.totalorder %s179, 0
      %s182 = sadd.s32 %s181, 1
      %s183 = scalar_select %p180, %s181, %s182
      %p186 = pneg %p180
      %p187 = scmp.eq.s32.totalorder %s19, 15
      %p188 = por %p186, %p187
      %p189 = scmp.ne.s32.totalorder %s181, %s184
      %p190 = scmp.eq.s32.totalorder %s19, 0
      %p191 = por %p189, %p190
      %p192 = scmp.ne.s32.totalorder %s181, %s184
      %p193 = scmp.eq.s32.totalorder %s24, 15
      %p194 = por %p192, %p193
      %p195 = scmp.ne.s32.totalorder %s184, %s185
      %p196 = scmp.eq.s32.totalorder %s24, 0
      %p197 = por %p195, %p196
      %p198 = scmp.ne.s32.totalorder %s184, %s185
      %p199 = scmp.eq.s32.totalorder %s25, 15
      %p200 = por %p198, %p199
      %p202 = scmp.ne.s32.totalorder %s185, %s201
      %p203 = scmp.eq.s32.totalorder %s25, 0
      %p204 = por %p202, %p203
      %p205 = scmp.le.s32.totalorder 1, %s19
      %p206 = scmp.lt.s32.totalorder %s19, 17
      %p207 = pnand %p205, %p206
      %p208 = pneg %p207
      // Predicated region
      $region9: #{tpu_custom_call.1} parent=5 // pred_check
        _
      $region10: #{tpu_custom_call.1} parent=5 // pred_check_branch
        %210 = sbr.rel (%p207) target = $region12
      $region11: #{tpu_custom_call.1} parent=5 // pred_region
        %s211 = ssub.s32 %s19, 1
        // Predicated region
        $region13: #{tpu_custom_call.1} parent=11 // pred_check
          %p212 = pneg %p80
        $region14: #{tpu_custom_call.1} parent=11 // pred_check_branch
          %214 = sbr.rel (%p212) target = $region16
        $region15: #{tpu_custom_call.1} parent=11 // pred_region
          _
        $region16: #{tpu_custom_call.1} parent=11 // pred_fallthru
          _
        // Predicated region
        $region17: #{tpu_custom_call.1} parent=11 // pred_check
          %p215 = pneg %p101
        $region18: #{tpu_custom_call.1} parent=11 // pred_check_branch
          %217 = sbr.rel (%p215) target = $region20
        $region19: #{tpu_custom_call.1} parent=11 // pred_region
          _
        $region20: #{tpu_custom_call.1} parent=11 // pred_fallthru
          _
        // Predicated region
        $region21: #{tpu_custom_call.1} parent=11 // pred_check
          %p218 = pneg %p122
        $region22: #{tpu_custom_call.1} parent=11 // pred_check_branch
          %220 = sbr.rel (%p218) target = $region24
        $region23: #{tpu_custom_call.1} parent=11 // pred_region
          _
        $region24: #{tpu_custom_call.1} parent=11 // pred_fallthru
          _
        // Predicated region
        $region25: #{tpu_custom_call.1} parent=11 // pred_check
          %p221 = pneg %p143
        $region26: #{tpu_custom_call.1} parent=11 // pred_check_branch
          %223 = sbr.rel (%p221) target = $region28
        $region27: #{tpu_custom_call.1} parent=11 // pred_region
          _
        $region28: #{tpu_custom_call.1} parent=11 // pred_fallthru
          _
      $region12: #{tpu_custom_call.1} parent=5 // pred_fallthru
        _
      %p224 = scmp.lt.s32.totalorder %s19, 16
      // Predicated region
      $region29: #{tpu_custom_call.1} parent=5 // pred_check
        %p225 = pneg %p224
      $region30: #{tpu_custom_call.1} parent=5 // pred_check_branch
        %227 = sbr.rel (%p225) target = $region32
      $region31: #{tpu_custom_call.1} parent=5 // pred_region
        // Predicated region
        $region33: #{tpu_custom_call.1} parent=31 // pred_check
          %p228 = pneg %p53
        $region34: #{tpu_custom_call.1} parent=31 // pred_check_branch
          %230 = sbr.rel (%p228) target = $region36
        $region35: #{tpu_custom_call.1} parent=31 // pred_region
          %p231 = scmp.lt.s32.totalorder %s26, 1
          %s232 = scalar_select %p231, %s26, 1
          %p233 = scmp.lt.s32.totalorder %s27, 7
          %s234 = scalar_select %p233, %s27, 7
          %s235 = smul.addr %s234, 2
          %s236 = smul.addr %s232, 16
          %s237 = sadd.s32 %s235, %s236
          %s238 = smul.addr %s237, 2
          %s239 = scalar_lea.vmem %s0, %s238
        $region36: #{tpu_custom_call.1} parent=31 // pred_fallthru
          _
      $region32: #{tpu_custom_call.1} parent=5 // pred_fallthru
        _
      %p240 = scmp.le.s32.totalorder 1, %s19
      %p241 = scmp.lt.s32.totalorder %s19, 17
      %p242 = pnand %p240, %p241
      %p243 = pneg %p242
      // Predicated region
      $region37: #{tpu_custom_call.1} parent=5 // pred_check
        _
      $region38: #{tpu_custom_call.1} parent=5 // pred_check_branch
        %245 = sbr.rel (%p242) target = $region40
      $region39: #{tpu_custom_call.1} parent=5 // pred_region
        %s246 = ssub.s32 %s19, 1
        %p247 = scmp.lt.s32.totalorder %s28, 1
        %s248 = scalar_select %p247, %s28, 1
        %p249 = scmp.lt.s32.totalorder %s29, 7
        %s250 = scalar_select %p249, %s29, 7
        %s251 = smul.addr %s250, 2
        %s252 = smul.addr %s248, 16
        %s253 = sadd.s32 %s251, %s252
        %s254 = smul.addr %s253, 2
        %s255 = scalar_lea.vmem %s0, %s254
        %p256 = pneg %p59
        %p257 = pneg %p56
        %p258 = pneg %p80
        %p259 = pneg %p77
        %p260 = pneg %p101
        %p261 = pneg %p98
        %p262 = pneg %p122
        %p263 = pneg %p119
        %p264 = pneg %p143
        %p265 = pneg %p140
        %p266 = pneg %p171
        %p267 = pneg %p168
        %s268 = sand.u32 %s158, 1
        %s269 = scalar_lea.sflag [#allocation5], %s268
        %s270 = sand.u32 %s158, 1
        %s271 = smul.addr %s270, 64
        %s272 = scalar_lea.vmem [#allocation4], %s271
        %p273 = pneg %p197
        %p274 = pneg %p194
        %s275 = sand.u32 %s184, 1
        %s276 = scalar_lea.sflag [#allocation7], %s275
        %s277 = sand.u32 %s184, 1
        %s278 = smul.addr %s277, 64
        %s279 = scalar_lea.vmem [#allocation6], %s278
        %p280 = scmp.lt.s32.totalorder %s28, 1
        %s281 = scalar_select %p280, %s28, 1
        %p282 = scmp.lt.s32.totalorder %s29, 7
        %s283 = scalar_select %p282, %s29, 7
        %s284 = smul.addr %s283, 2
        %s285 = smul.addr %s281, 16
        %s286 = sadd.s32 %s284, %s285
        %s287 = smul.addr %s286, 2
        %s288 = scalar_lea.vmem %s0, %s287
        %p290 = scmp.eq.s32.totalorder %s29, 0
        // Predicated region
        $region41: #{tpu_custom_call.1} parent=39 // pred_check
          %p291 = pneg %p290
        $region42: #{tpu_custom_call.1} parent=39 // pred_check_branch
          %293 = sbr.rel (%p291) target = $region44
        $region43: #{tpu_custom_call.1} parent=39 // pred_region
          %294 = vst [vmem:[#allocation2] sm:$0xff] 0.0
          %295 = vst [vmem:[#allocation2 + $0x8] sm:$0xff] 0.0
          %296 = vst [vmem:[#allocation2 + $0x10] sm:$0xff] 0.0
          %297 = vst [vmem:[#allocation2 + $0x18] sm:$0xff] 0.0
          %298 = vst [vmem:[#allocation2 + $0x20] sm:$0xff] 0.0
          %299 = vst [vmem:[#allocation2 + $0x28] sm:$0xff] 0.0
          %300 = vst [vmem:[#allocation2 + $0x30] sm:$0xff] 0.0
          %301 = vst [vmem:[#allocation2 + $0x38] sm:$0xff] 0.0
          %302 = vst [vmem:[#allocation3] sm:$0xff] 0.0
          %303 = vst [vmem:[#allocation3 + $0x8] sm:$0xff] 0.0
          %304 = vst [vmem:[#allocation3 + $0x10] sm:$0xff] 0.0
          %305 = vst [vmem:[#allocation3 + $0x18] sm:$0xff] 0.0
          %306 = vst [vmem:[#allocation3 + $0x20] sm:$0xff] 0.0
          %307 = vst [vmem:[#allocation3 + $0x28] sm:$0xff] 0.0
          %308 = vst [vmem:[#allocation3 + $0x30] sm:$0xff] 0.0
          %309 = vst [vmem:[#allocation3 + $0x38] sm:$0xff] 0.0
        $region44: #{tpu_custom_call.1} parent=39 // pred_fallthru
          _
        %v310 = vld [vmem:[%s288] sm:$0xf]
        %v311 = vunpack.c.l.bf16 %v310
        %v312 = vld [vmem:[#allocation2] sm:$0xff]
        %v313 = vld [vmem:[#allocation2 + $0x8] sm:$0xff]
        %v314 = vld [vmem:[#allocation2 + $0x10] sm:$0xff]
        %v315 = vld [vmem:[#allocation2 + $0x18] sm:$0xff]
        %v316 = vld [vmem:[#allocation2 + $0x20] sm:$0xff]
        %v317 = vld [vmem:[#allocation2 + $0x28] sm:$0xff]
        %v318 = vld [vmem:[#allocation2 + $0x30] sm:$0xff]
        %v319 = vld [vmem:[#allocation2 + $0x38] sm:$0xff]
        %v321 = vcombine.high %v311, %v311
        %322 = vrot.lane.b32.xlu0 %v321, 17
        %v323 = vpop.permute.xlu0 %322
        %325 = vrot.lane.b32.xlu0 %v311, 17
        %v326 = vpop.permute.xlu0 %325
        %vm327 = vcmask 138240
        %v328 = vsel %vm327, %v326, %v323
        %v331 = vsel %vm327, %v323, %v326
        %336 = vrot.lane.b32.xlu0 %v313, 17
        %v337 = vpop.permute.xlu0 %336
        %338 = vrot.lane.b32.xlu0 %v315, 17
        %v339 = vpop.permute.xlu0 %338
        %340 = vrot.lane.b32.xlu0 %v317, 17
        %v341 = vpop.permute.xlu0 %340
        %342 = vrot.lane.b32.xlu0 %v319, 17
        %v343 = vpop.permute.xlu0 %342
        %352 = vrot.lane.b32.xlu0 %v312, 17
        %v353 = vpop.permute.xlu0 %352
        %354 = vrot.lane.b32.xlu0 %v314, 17
        %v355 = vpop.permute.xlu0 %354
        %356 = vrot.lane.b32.xlu0 %v316, 17
        %v357 = vpop.permute.xlu0 %356
        %358 = vrot.lane.b32.xlu0 %v318, 17
        %v359 = vpop.permute.xlu0 %358
        %v360 = vsel %vm327, %v353, %v337
        %v361 = vsel %vm327, %v355, %v339
        %v362 = vsel %vm327, %v357, %v341
        %v363 = vsel %vm327, %v359, %v343
        %v372 = vsel %vm327, %v337, %v353
        %v373 = vsel %vm327, %v339, %v355
        %v374 = vsel %vm327, %v341, %v357
        %v375 = vsel %vm327, %v343, %v359
        %v376 = vld [vmem:[%s4] sm:$0x3]
        %v378 = vlaneseq
        %v379 = vshrl.u32 %v378, 7
        %v380 = vsub.s32 0, %v379
        %v381 = vrot.slane %v376, %v380
        %v382 = vlaneseq
        %v383 = vshrl.u32 %v382, 7
        %v384 = vsub.s32 1, %v383
        %v385 = vrot.slane %v376, %v384
        %v388 = vmul.f32 %v331, %v381
        %v389 = vmul.f32 %v328, %v385
        %v390 = vmul.f32 %v372, %v381
        %v391 = vmul.f32 %v360, %v385
        %v392 = vmul.f32 %v373, %v381
        %v393 = vmul.f32 %v361, %v385
        %v394 = vmul.f32 %v374, %v381
        %v395 = vmul.f32 %v362, %v385
        %v396 = vmul.f32 %v375, %v381
        %v397 = vmul.f32 %v363, %v385
        %v398 = vld [vmem:[%s1] sm:$0xf]
        %v399 = vld [vmem:[%s1 + $0x4] sm:$0xf]
        %v400 = vld [vmem:[%s1 + $0x8] sm:$0xf]
        %v401 = vld [vmem:[%s1 + $0xc] sm:$0xf]
        %v402 = vld [vmem:[%s1 + $0x10] sm:$0xf]
        %v403 = vld [vmem:[%s1 + $0x14] sm:$0xf]
        %v404 = vld [vmem:[%s1 + $0x18] sm:$0xf]
        %v405 = vld [vmem:[%s1 + $0x1c] sm:$0xf]
        %v406 = vld [vmem:[%s1 + $0x20] sm:$0xf]
        %v407 = vld [vmem:[%s1 + $0x24] sm:$0xf]
        %v408 = vld [vmem:[%s1 + $0x28] sm:$0xf]
        %v409 = vld [vmem:[%s1 + $0x2c] sm:$0xf]
        %v410 = vld [vmem:[%s1 + $0x30] sm:$0xf]
        %v411 = vld [vmem:[%s1 + $0x34] sm:$0xf]
        %v412 = vld [vmem:[%s1 + $0x38] sm:$0xf]
        %v413 = vld [vmem:[%s1 + $0x3c] sm:$0xf]
        %v414 = vpack.c.bf16 %v388, %v388
        %v415 = vpack.c.bf16 %v389, %v389
        %v416 = vld [vmem:[%s2] sm:$0xf]
        %v417 = vld [vmem:[%s2 + $0x4] sm:$0xf]
        %v418 = vld [vmem:[%s2 + $0x8] sm:$0xf]
        %v419 = vld [vmem:[%s2 + $0xc] sm:$0xf]
        %v420 = vld [vmem:[%s2 + $0x10] sm:$0xf]
        %v421 = vld [vmem:[%s2 + $0x14] sm:$0xf]
        %v422 = vld [vmem:[%s2 + $0x18] sm:$0xf]
        %v423 = vld [vmem:[%s2 + $0x1c] sm:$0xf]
        %v424 = vld [vmem:[%s2 + $0x20] sm:$0xf]
        %v425 = vld [vmem:[%s2 + $0x24] sm:$0xf]
        %v426 = vld [vmem:[%s2 + $0x28] sm:$0xf]
        %v427 = vld [vmem:[%s2 + $0x2c] sm:$0xf]
        %v428 = vld [vmem:[%s2 + $0x30] sm:$0xf]
        %v429 = vld [vmem:[%s2 + $0x34] sm:$0xf]
        %v430 = vld [vmem:[%s2 + $0x38] sm:$0xf]
        %v431 = vld [vmem:[%s2 + $0x3c] sm:$0xf]
        %v432 = vpack.c.bf16 %v392, %v390
        %v433 = vpack.c.bf16 %v393, %v391
        %v434 = vpack.c.bf16 %v396, %v394
        %v435 = vpack.c.bf16 %v397, %v395
        %v452 = vunpack.c.l.b16 %v416
        %v453 = vunpack.c.l.b16 %v417
        %v454 = vunpack.c.l.b16 %v418
        %v455 = vunpack.c.l.b16 %v419
        %v456 = vunpack.c.l.b16 %v420
        %v457 = vunpack.c.l.b16 %v421
        %v458 = vunpack.c.l.b16 %v422
        %v459 = vunpack.c.l.b16 %v423
        %v460 = vunpack.c.l.b16 %v424
        %v461 = vunpack.c.l.b16 %v425
        %v462 = vunpack.c.l.b16 %v426
        %v463 = vunpack.c.l.b16 %v427
        %v464 = vunpack.c.l.b16 %v428
        %v465 = vunpack.c.l.b16 %v429
        %v466 = vunpack.c.l.b16 %v430
        %v467 = vunpack.c.l.b16 %v431
        %v468 = vpack.c.b16 %v453, %v452
        %v469 = vpack.c.b16 %v455, %v454
        %v470 = vpack.c.b16 %v457, %v456
        %v471 = vpack.c.b16 %v459, %v458
        %v472 = vpack.c.b16 %v461, %v460
        %v473 = vpack.c.b16 %v463, %v462
        %v474 = vpack.c.b16 %v465, %v464
        %v475 = vpack.c.b16 %v467, %v466
        %vm476 = vcmask 261120
        %v478 = vsel %vm476, %v468, 0
        %v481 = vsel %vm476, %v469, 0
        %v484 = vsel %vm476, %v470, 0
        %v487 = vsel %vm476, %v471, 0
        %v490 = vsel %vm476, %v472, 0
        %v493 = vsel %vm476, %v473, 0
        %v496 = vsel %vm476, %v474, 0
        %v499 = vsel %vm476, %v475, 0
        %501 = vmatprep.subr.bf16.mxu0 %v433
        %502 = vmatpush1.bf16.msra.mxu0 %v432
        %503 = vmatprep.subr.bf16.mxu0 %v435
        %504 = vmatpush1.bf16.msra.mxu0 %v434
        %505 = vmatprep.subr.bf16.mxu0 0
        %506 = vmatpush1.bf16.msra.mxu0 0
        %507 = vmatprep.subr.bf16.mxu0 0
        %508 = vmatpush1.bf16.msra.mxu0 0
        %509 = vmatprep.subr.bf16.mxu0 0
        %510 = vmatpush1.bf16.msra.mxu0 0
        %511 = vmatprep.subr.bf16.mxu0 0
        %512 = vmatpush1.bf16.msra.mxu0 0
        %513 = vmatprep.subr.bf16.mxu0 0
        %514 = vmatpush1.bf16.msra.mxu0 0
        %515 = vmatprep.subr.bf16.mxu0 0
        %516 = vmatpush1.bf16.msra.mxu0 0
        %517 = vmatprep.subr.bf16.mxu0 0
        %518 = vmatpush1.bf16.msra.mxu0 0
        %519 = vmatprep.subr.bf16.mxu0 0
        %520 = vmatpush1.bf16.msra.mxu0 0
        %521 = vmatprep.subr.bf16.mxu0 0
        %522 = vmatpush1.bf16.msra.mxu0 0
        %523 = vmatprep.subr.bf16.mxu0 0
        %524 = vmatpush1.bf16.msra.mxu0 0
        %525 = vmatprep.subr.bf16.mxu0 0
        %526 = vmatpush1.bf16.msra.mxu0 0
        %527 = vmatprep.subr.bf16.mxu0 0
        %528 = vmatpush1.bf16.msra.mxu0 0
        %529 = vmatprep.subr.bf16.mxu0 0
        %530 = vmatpush1.bf16.msra.mxu0 0
        %531 = vmatprep.subr.bf16.mxu0 0
        %532 = vmatpush1.bf16.msra.mxu0 0
        %533 = vmatprep.mubr.bf16.mxu0 0
        %534 = vmatmul.mubr.bf16.gmra.mrb[0].mxu0 %v478
        %v535 = vpop.f32.mrb[0].mxu0
        %v536 = vadd.f32 0.0, %v535
        %v537 = vpop.f32.mrb[0].mxu0
        %v538 = vadd.f32 0.0, %v537
        %v539 = vpop.f32.mrb[0].mxu0
        %v540 = vadd.f32 0.0, %v539
        %v541 = vpop.f32.mrb[0].mxu0
        %v542 = vadd.f32 0.0, %v541
        %543 = vmatprep.mubr.bf16.mxu0 0
        %544 = vmatmul.mubr.bf16.gmra.mrb[0].mxu0 %v481
        %v545 = vpop.f32.mrb[0].mxu0
        %v546 = vadd.f32 0.0, %v545
        %v547 = vpop.f32.mrb[0].mxu0
        %v548 = vadd.f32 0.0, %v547
        %v549 = vpop.f32.mrb[0].mxu0
        %v550 = vadd.f32 0.0, %v549
        %v551 = vpop.f32.mrb[0].mxu0
        %v552 = vadd.f32 0.0, %v551
        %553 = vmatprep.mubr.bf16.mxu0 0
        %554 = vmatmul.mubr.bf16.gmra.mrb[0].mxu0 %v484
        %v555 = vpop.f32.mrb[0].mxu0
        %v556 = vadd.f32 0.0, %v555
        %v557 = vpop.f32.mrb[0].mxu0
        %v558 = vadd.f32 0.0, %v557
        %v559 = vpop.f32.mrb[0].mxu0
        %v560 = vadd.f32 0.0, %v559
        %v561 = vpop.f32.mrb[0].mxu0
        %v562 = vadd.f32 0.0, %v561
        %563 = vmatprep.mubr.bf16.mxu0 0
        %564 = vmatmul.mubr.bf16.gmra.mrb[0].mxu0 %v487
        %v565 = vpop.f32.mrb[0].mxu0
        %v566 = vadd.f32 0.0, %v565
        %v567 = vpop.f32.mrb[0].mxu0
        %v568 = vadd.f32 0.0, %v567
        %v569 = vpop.f32.mrb[0].mxu0
        %v570 = vadd.f32 0.0, %v569
        %v571 = vpop.f32.mrb[0].mxu0
        %v572 = vadd.f32 0.0, %v571
        %573 = vmatprep.mubr.bf16.mxu0 0
        %574 = vmatmul.mubr.bf16.gmra.mrb[0].mxu0 %v490
        %v575 = vpop.f32.mrb[0].mxu0
        %v576 = vadd.f32 0.0, %v575
        %v577 = vpop.f32.mrb[0].mxu0
        %v578 = vadd.f32 0.0, %v577
        %v579 = vpop.f32.mrb[0].mxu0
        %v580 = vadd.f32 0.0, %v579
        %v581 = vpop.f32.mrb[0].mxu0
        %v582 = vadd.f32 0.0, %v581
        %583 = vmatprep.mubr.bf16.mxu0 0
        %584 = vmatmul.mubr.bf16.gmra.mrb[0].mxu0 %v493
        %v585 = vpop.f32.mrb[0].mxu0
        %v586 = vadd.f32 0.0, %v585
        %v587 = vpop.f32.mrb[0].mxu0
        %v588 = vadd.f32 0.0, %v587
        %v589 = vpop.f32.mrb[0].mxu0
        %v590 = vadd.f32 0.0, %v589
        %v591 = vpop.f32.mrb[0].mxu0
        %v592 = vadd.f32 0.0, %v591
        %593 = vmatprep.mubr.bf16.mxu0 0
        %594 = vmatmul.mubr.bf16.gmra.mrb[0].mxu0 %v496
        %v595 = vpop.f32.mrb[0].mxu0
        %v596 = vadd.f32 0.0, %v595
        %v597 = vpop.f32.mrb[0].mxu0
        %v598 = vadd.f32 0.0, %v597
        %v599 = vpop.f32.mrb[0].mxu0
        %v600 = vadd.f32 0.0, %v599
        %v601 = vpop.f32.mrb[0].mxu0
        %v602 = vadd.f32 0.0, %v601
        %603 = vmatprep.mubr.bf16.mxu0 0
        %604 = vmatmul.mubr.bf16.gmra.mrb[0].mxu0 %v499
        %v605 = vpop.f32.mrb[0].mxu0
        %v606 = vadd.f32 0.0, %v605
        %v607 = vpop.f32.mrb[0].mxu0
        %v608 = vadd.f32 0.0, %v607
        %v609 = vpop.f32.mrb[0].mxu0
        %v610 = vadd.f32 0.0, %v609
        %v611 = vpop.f32.mrb[0].mxu0
        %v612 = vadd.f32 0.0, %v611
        %613 = vdwg.mxu0
        %v630 = vunpack.c.l.b16 %v398
        %v631 = vunpack.c.l.b16 %v399
        %v632 = vunpack.c.l.b16 %v400
        %v633 = vunpack.c.l.b16 %v401
        %v634 = vunpack.c.l.b16 %v402
        %v635 = vunpack.c.l.b16 %v403
        %v636 = vunpack.c.l.b16 %v404
        %v637 = vunpack.c.l.b16 %v405
        %v638 = vunpack.c.l.b16 %v406
        %v639 = vunpack.c.l.b16 %v407
        %v640 = vunpack.c.l.b16 %v408
        %v641 = vunpack.c.l.b16 %v409
        %v642 = vunpack.c.l.b16 %v410
        %v643 = vunpack.c.l.b16 %v411
        %v644 = vunpack.c.l.b16 %v412
        %v645 = vunpack.c.l.b16 %v413
        %v646 = vpack.c.b16 %v631, %v630
        %v647 = vpack.c.b16 %v633, %v632
        %v648 = vpack.c.b16 %v635, %v634
        %v649 = vpack.c.b16 %v637, %v636
        %v650 = vpack.c.b16 %v639, %v638
        %v651 = vpack.c.b16 %v641, %v640
        %v652 = vpack.c.b16 %v643, %v642
        %v653 = vpack.c.b16 %v645, %v644
        %vm654 = vcmask 31744
        %v656 = vsel %vm654, %v646, 0
        %v659 = vsel %vm654, %v647, 0
        %v662 = vsel %vm654, %v648, 0
        %v665 = vsel %vm654, %v649, 0
        %v668 = vsel %vm654, %v650, 0
        %v671 = vsel %vm654, %v651, 0
        %v674 = vsel %vm654, %v652, 0
        %v677 = vsel %vm654, %v653, 0
        %vm679 = vcmask 1041408
        %v681 = vsel %vm679, %v414, 0
        %v684 = vsel %vm679, %v415, 0
        %686 = vmatprep.subr.bf16.mxu0 %v684
        %687 = vmatpush1.bf16.msra.mxu0 %v681
        %688 = vmatprep.subr.bf16.mxu0 0
        %689 = vmatpush1.bf16.msra.mxu0 0
        %690 = vmatprep.subr.bf16.mxu0 0
        %691 = vmatpush1.bf16.msra.mxu0 0
        %692 = vmatprep.subr.bf16.mxu0 0
        %693 = vmatpush1.bf16.msra.mxu0 0
        %694 = vmatprep.subr.bf16.mxu0 0
        %695 = vmatpush1.bf16.msra.mxu0 0
        %696 = vmatprep.subr.bf16.mxu0 0
        %697 = vmatpush1.bf16.msra.mxu0 0
        %698 = vmatprep.subr.bf16.mxu0 0
        %699 = vmatpush1.bf16.msra.mxu0 0
        %700 = vmatprep.subr.bf16.mxu0 0
        %701 = vmatpush1.bf16.msra.mxu0 0
        %702 = vmatprep.subr.bf16.mxu0 0
        %703 = vmatpush1.bf16.msra.mxu0 0
        %704 = vmatprep.subr.bf16.mxu0 0
        %705 = vmatpush1.bf16.msra.mxu0 0
        %706 = vmatprep.subr.bf16.mxu0 0
        %707 = vmatpush1.bf16.msra.mxu0 0
        %708 = vmatprep.subr.bf16.mxu0 0
        %709 = vmatpush1.bf16.msra.mxu0 0
        %710 = vmatprep.subr.bf16.mxu0 0
        %711 = vmatpush1.bf16.msra.mxu0 0
        %712 = vmatprep.subr.bf16.mxu0 0
        %713 = vmatpush1.bf16.msra.mxu0 0
        %714 = vmatprep.subr.bf16.mxu0 0
        %715 = vmatpush1.bf16.msra.mxu0 0
        %716 = vmatprep.subr.bf16.mxu0 0
        %717 = vmatpush1.bf16.msra.mxu0 0
        %718 = vmatprep.mubr.bf16.mxu0 0
        %719 = vmatmul.mubr.bf16.gmra.mrb[0].mxu0 %v656
        %v720 = vpop.f32.mrb[0].mxu0
        %v721 = vadd.f32 %v536, %v720
        %v722 = vpop.f32.mrb[0].mxu0
        %v723 = vadd.f32 %v538, %v722
        %v724 = vpop.f32.mrb[0].mxu0
        %v725 = vadd.f32 %v540, %v724
        %v726 = vpop.f32.mrb[0].mxu0
        %v727 = vadd.f32 %v542, %v726
        %728 = vmatprep.mubr.bf16.mxu0 0
        %729 = vmatmul.mubr.bf16.gmra.mrb[0].mxu0 %v659
        %v730 = vpop.f32.mrb[0].mxu0
        %v731 = vadd.f32 %v546, %v730
        %v732 = vpop.f32.mrb[0].mxu0
        %v733 = vadd.f32 %v548, %v732
        %v734 = vpop.f32.mrb[0].mxu0
        %v735 = vadd.f32 %v550, %v734
        %v736 = vpop.f32.mrb[0].mxu0
        %v737 = vadd.f32 %v552, %v736
        %738 = vmatprep.mubr.bf16.mxu0 0
        %739 = vmatmul.mubr.bf16.gmra.mrb[0].mxu0 %v662
        %v740 = vpop.f32.mrb[0].mxu0
        %v741 = vadd.f32 %v556, %v740
        %v742 = vpop.f32.mrb[0].mxu0
        %v743 = vadd.f32 %v558, %v742
        %v744 = vpop.f32.mrb[0].mxu0
        %v745 = vadd.f32 %v560, %v744
        %v746 = vpop.f32.mrb[0].mxu0
        %v747 = vadd.f32 %v562, %v746
        %748 = vmatprep.mubr.bf16.mxu0 0
        %749 = vmatmul.mubr.bf16.gmra.mrb[0].mxu0 %v665
        %v750 = vpop.f32.mrb[0].mxu0
        %v751 = vadd.f32 %v566, %v750
        %v752 = vpop.f32.mrb[0].mxu0
        %v753 = vadd.f32 %v568, %v752
        %v754 = vpop.f32.mrb[0].mxu0
        %v755 = vadd.f32 %v570, %v754
        %v756 = vpop.f32.mrb[0].mxu0
        %v757 = vadd.f32 %v572, %v756
        %758 = vmatprep.mubr.bf16.mxu0 0
        %759 = vmatmul.mubr.bf16.gmra.mrb[0].mxu0 %v668
        %v760 = vpop.f32.mrb[0].mxu0
        %v761 = vadd.f32 %v576, %v760
        %v762 = vpop.f32.mrb[0].mxu0
        %v763 = vadd.f32 %v578, %v762
        %v764 = vpop.f32.mrb[0].mxu0
        %v765 = vadd.f32 %v580, %v764
        %v766 = vpop.f32.mrb[0].mxu0
        %v767 = vadd.f32 %v582, %v766
        %768 = vmatprep.mubr.bf16.mxu0 0
        %769 = vmatmul.mubr.bf16.gmra.mrb[0].mxu0 %v671
        %v770 = vpop.f32.mrb[0].mxu0
        %v771 = vadd.f32 %v586, %v770
        %v772 = vpop.f32.mrb[0].mxu0
        %v773 = vadd.f32 %v588, %v772
        %v774 = vpop.f32.mrb[0].mxu0
        %v775 = vadd.f32 %v590, %v774
        %v776 = vpop.f32.mrb[0].mxu0
        %v777 = vadd.f32 %v592, %v776
        %778 = vmatprep.mubr.bf16.mxu0 0
        %779 = vmatmul.mubr.bf16.gmra.mrb[0].mxu0 %v674
        %v780 = vpop.f32.mrb[0].mxu0
        %v781 = vadd.f32 %v596, %v780
        %v782 = vpop.f32.mrb[0].mxu0
        %v783 = vadd.f32 %v598, %v782
        %v784 = vpop.f32.mrb[0].mxu0
        %v785 = vadd.f32 %v600, %v784
        %v786 = vpop.f32.mrb[0].mxu0
        %v787 = vadd.f32 %v602, %v786
        %788 = vmatprep.mubr.bf16.mxu0 0
        %789 = vmatmul.mubr.bf16.gmra.mrb[0].mxu0 %v677
        %v790 = vpop.f32.mrb[0].mxu0
        %v791 = vadd.f32 %v606, %v790
        %v792 = vpop.f32.mrb[0].mxu0
        %v793 = vadd.f32 %v608, %v792
        %v794 = vpop.f32.mrb[0].mxu0
        %v795 = vadd.f32 %v610, %v794
        %v796 = vpop.f32.mrb[0].mxu0
        %v797 = vadd.f32 %v612, %v796
        %798 = vdwg.mxu0
        %799 = vrot.lane.b32.xlu0 %v321, 16
        %v800 = vpop.permute.xlu0 %799
        %802 = vrot.lane.b32.xlu0 %v311, 16
        %v803 = vpop.permute.xlu0 %802
        %vm804 = vcmask 130048
        %v805 = vsel %vm804, %v803, %v800
        %v808 = vsel %vm804, %v800, %v803
        %809 = vrot.lane.b32.xlu0 %v313, 16
        %v810 = vpop.permute.xlu0 %809
        %811 = vrot.lane.b32.xlu0 %v315, 16
        %v812 = vpop.permute.xlu0 %811
        %813 = vrot.lane.b32.xlu0 %v317, 16
        %v814 = vpop.permute.xlu0 %813
        %815 = vrot.lane.b32.xlu0 %v319, 16
        %v816 = vpop.permute.xlu0 %815
        %821 = vrot.lane.b32.xlu0 %v312, 16
        %v822 = vpop.permute.xlu0 %821
        %823 = vrot.lane.b32.xlu0 %v314, 16
        %v824 = vpop.permute.xlu0 %823
        %825 = vrot.lane.b32.xlu0 %v316, 16
        %v826 = vpop.permute.xlu0 %825
        %827 = vrot.lane.b32.xlu0 %v318, 16
        %v828 = vpop.permute.xlu0 %827
        %v829 = vsel %vm804, %v822, %v810
        %v830 = vsel %vm804, %v824, %v812
        %v831 = vsel %vm804, %v826, %v814
        %v832 = vsel %vm804, %v828, %v816
        %v841 = vsel %vm804, %v810, %v822
        %v842 = vsel %vm804, %v812, %v824
        %v843 = vsel %vm804, %v814, %v826
        %v844 = vsel %vm804, %v816, %v828
        %s845 = scalar_lea.vmem %s4, 2
        %v846 = vld [vmem:[%s845] sm:$0x3]
        %v848 = vlaneseq
        %v849 = vshrl.u32 %v848, 7
        %v850 = vsub.s32 0, %v849
        %v851 = vrot.slane %v846, %v850
        %v852 = vlaneseq
        %v853 = vshrl.u32 %v852, 7
        %v854 = vsub.s32 1, %v853
        %v855 = vrot.slane %v846, %v854
        %v858 = vmul.f32 %v808, %v851
        %v859 = vmul.f32 %v805, %v855
        %v860 = vmul.f32 %v841, %v851
        %v861 = vmul.f32 %v829, %v855
        %v862 = vmul.f32 %v842, %v851
        %v863 = vmul.f32 %v830, %v855
        %v864 = vmul.f32 %v843, %v851
        %v865 = vmul.f32 %v831, %v855
        %v866 = vmul.f32 %v844, %v851
        %v867 = vmul.f32 %v832, %v855
        %s868 = scalar_lea.vmem %s1, 64
        %v869 = vld [vmem:[%s868] sm:$0xf]
        %v870 = vld [vmem:[%s868 + $0x4] sm:$0xf]
        %v871 = vld [vmem:[%s868 + $0x8] sm:$0xf]
        %v872 = vld [vmem:[%s868 + $0xc] sm:$0xf]
        %v873 = vld [vmem:[%s868 + $0x10] sm:$0xf]
        %v874 = vld [vmem:[%s868 + $0x14] sm:$0xf]
        %v875 = vld [vmem:[%s868 + $0x18] sm:$0xf]
        %v876 = vld [vmem:[%s868 + $0x1c] sm:$0xf]
        %v877 = vld [vmem:[%s868 + $0x20] sm:$0xf]
        %v878 = vld [vmem:[%s868 + $0x24] sm:$0xf]
        %v879 = vld [vmem:[%s868 + $0x28] sm:$0xf]
        %v880 = vld [vmem:[%s868 + $0x2c] sm:$0xf]
        %v881 = vld [vmem:[%s868 + $0x30] sm:$0xf]
        %v882 = vld [vmem:[%s868 + $0x34] sm:$0xf]
        %v883 = vld [vmem:[%s868 + $0x38] sm:$0xf]
        %v884 = vld [vmem:[%s868 + $0x3c] sm:$0xf]
        %v885 = vpack.c.bf16 %v858, %v858
        %v886 = vpack.c.bf16 %v859, %v859
        %v903 = vunpack.c.l.b16 %v869
        %v904 = vunpack.c.l.b16 %v870
        %v905 = vunpack.c.l.b16 %v871
        %v906 = vunpack.c.l.b16 %v872
        %v907 = vunpack.c.l.b16 %v873
        %v908 = vunpack.c.l.b16 %v874
        %v909 = vunpack.c.l.b16 %v875
        %v910 = vunpack.c.l.b16 %v876
        %v911 = vunpack.c.l.b16 %v877
        %v912 = vunpack.c.l.b16 %v878
        %v913 = vunpack.c.l.b16 %v879
        %v914 = vunpack.c.l.b16 %v880
        %v915 = vunpack.c.l.b16 %v881
        %v916 = vunpack.c.l.b16 %v882
        %v917 = vunpack.c.l.b16 %v883
        %v918 = vunpack.c.l.b16 %v884
        %v919 = vpack.c.b16 %v904, %v903
        %v920 = vpack.c.b16 %v906, %v905
        %v921 = vpack.c.b16 %v908, %v907
        %v922 = vpack.c.b16 %v910, %v909
        %v923 = vpack.c.b16 %v912, %v911
        %v924 = vpack.c.b16 %v914, %v913
        %v925 = vpack.c.b16 %v916, %v915
        %v926 = vpack.c.b16 %v918, %v917
        %v928 = vsel %vm654, %v919, 0
        %v931 = vsel %vm654, %v920, 0
        %v934 = vsel %vm654, %v921, 0
        %v937 = vsel %vm654, %v922, 0
        %v940 = vsel %vm654, %v923, 0
        %v943 = vsel %vm654, %v924, 0
        %v946 = vsel %vm654, %v925, 0
        %v949 = vsel %vm654, %v926, 0
        %v952 = vsel %vm679, %v885, 0
        %v955 = vsel %vm679, %v886, 0
        %957 = vmatprep.subr.bf16.mxu0 %v955
        %958 = vmatpush1.bf16.msra.mxu0 %v952
        %959 = vmatprep.subr.bf16.mxu0 0
        %960 = vmatpush1.bf16.msra.mxu0 0
        %961 = vmatprep.subr.bf16.mxu0 0
        %962 = vmatpush1.bf16.msra.mxu0 0
        %963 = vmatprep.subr.bf16.mxu0 0
        %964 = vmatpush1.bf16.msra.mxu0 0
        %965 = vmatprep.subr.bf16.mxu0 0
        %966 = vmatpush1.bf16.msra.mxu0 0
        %967 = vmatprep.subr.bf16.mxu0 0
        %968 = vmatpush1.bf16.msra.mxu0 0
        %969 = vmatprep.subr.bf16.mxu0 0
        %970 = vmatpush1.bf16.msra.mxu0 0
        %971 = vmatprep.subr.bf16.mxu0 0
        %972 = vmatpush1.bf16.msra.mxu0 0
        %973 = vmatprep.subr.bf16.mxu0 0
        %974 = vmatpush1.bf16.msra.mxu0 0
        %975 = vmatprep.subr.bf16.mxu0 0
        %976 = vmatpush1.bf16.msra.mxu0 0
        %977 = vmatprep.subr.bf16.mxu0 0
        %978 = vmatpush1.bf16.msra.mxu0 0
        %979 = vmatprep.subr.bf16.mxu0 0
        %980 = vmatpush1.bf16.msra.mxu0 0
        %981 = vmatprep.subr.bf16.mxu0 0
        %982 = vmatpush1.bf16.msra.mxu0 0
        %983 = vmatprep.subr.bf16.mxu0 0
        %984 = vmatpush1.bf16.msra.mxu0 0
        %985 = vmatprep.subr.bf16.mxu0 0
        %986 = vmatpush1.bf16.msra.mxu0 0
        %987 = vmatprep.subr.bf16.mxu0 0
        %988 = vmatpush1.bf16.msra.mxu0 0
        %989 = vmatprep.mubr.bf16.mxu0 0
        %990 = vmatmul.mubr.bf16.gmra.mrb[0].mxu0 %v928
        %v991 = vpop.f32.mrb[0].mxu0
        %v992 = vadd.f32 0.0, %v991
        %v993 = vpop.f32.mrb[0].mxu0
        %v994 = vadd.f32 0.0, %v993
        %v995 = vpop.f32.mrb[0].mxu0
        %v996 = vadd.f32 0.0, %v995
        %v997 = vpop.f32.mrb[0].mxu0
        %v998 = vadd.f32 0.0, %v997
        %999 = vmatprep.mubr.bf16.mxu0 0
        %1000 = vmatmul.mubr.bf16.gmra.mrb[0].mxu0 %v931
        %v1001 = vpop.f32.mrb[0].mxu0
        %v1002 = vadd.f32 0.0, %v1001
        %v1003 = vpop.f32.mrb[0].mxu0
        %v1004 = vadd.f32 0.0, %v1003
        %v1005 = vpop.f32.mrb[0].mxu0
        %v1006 = vadd.f32 0.0, %v1005
        %v1007 = vpop.f32.mrb[0].mxu0
        %v1008 = vadd.f32 0.0, %v1007
        %1009 = vmatprep.mubr.bf16.mxu0 0
        %1010 = vmatmul.mubr.bf16.gmra.mrb[0].mxu0 %v934
        %v1011 = vpop.f32.mrb[0].mxu0
        %v1012 = vadd.f32 0.0, %v1011
        %v1013 = vpop.f32.mrb[0].mxu0
        %v1014 = vadd.f32 0.0, %v1013
        %v1015 = vpop.f32.mrb[0].mxu0
        %v1016 = vadd.f32 0.0, %v1015
        %v1017 = vpop.f32.mrb[0].mxu0
        %v1018 = vadd.f32 0.0, %v1017
        %1019 = vmatprep.mubr.bf16.mxu0 0
        %1020 = vmatmul.mubr.bf16.gmra.mrb[0].mxu0 %v937
        %v1021 = vpop.f32.mrb[0].mxu0
        %v1022 = vadd.f32 0.0, %v1021
        %v1023 = vpop.f32.mrb[0].mxu0
        %v1024 = vadd.f32 0.0, %v1023
        %v1025 = vpop.f32.mrb[0].mxu0
        %v1026 = vadd.f32 0.0, %v1025
        %v1027 = vpop.f32.mrb[0].mxu0
        %v1028 = vadd.f32 0.0, %v1027
        %1029 = vmatprep.mubr.bf16.mxu0 0
        %1030 = vmatmul.mubr.bf16.gmra.mrb[0].mxu0 %v940
        %v1031 = vpop.f32.mrb[0].mxu0
        %v1032 = vadd.f32 0.0, %v1031
        %v1033 = vpop.f32.mrb[0].mxu0
        %v1034 = vadd.f32 0.0, %v1033
        %v1035 = vpop.f32.mrb[0].mxu0
        %v1036 = vadd.f32 0.0, %v1035
        %v1037 = vpop.f32.mrb[0].mxu0
        %v1038 = vadd.f32 0.0, %v1037
        %1039 = vmatprep.mubr.bf16.mxu0 0
        %1040 = vmatmul.mubr.bf16.gmra.mrb[0].mxu0 %v943
        %v1041 = vpop.f32.mrb[0].mxu0
        %v1042 = vadd.f32 0.0, %v1041
        %v1043 = vpop.f32.mrb[0].mxu0
        %v1044 = vadd.f32 0.0, %v1043
        %v1045 = vpop.f32.mrb[0].mxu0
        %v1046 = vadd.f32 0.0, %v1045
        %v1047 = vpop.f32.mrb[0].mxu0
        %v1048 = vadd.f32 0.0, %v1047
        %1049 = vmatprep.mubr.bf16.mxu0 0
        %1050 = vmatmul.mubr.bf16.gmra.mrb[0].mxu0 %v946
        %v1051 = vpop.f32.mrb[0].mxu0
        %v1052 = vadd.f32 0.0, %v1051
        %v1053 = vpop.f32.mrb[0].mxu0
        %v1054 = vadd.f32 0.0, %v1053
        %v1055 = vpop.f32.mrb[0].mxu0
        %v1056 = vadd.f32 0.0, %v1055
        %v1057 = vpop.f32.mrb[0].mxu0
        %v1058 = vadd.f32 0.0, %v1057
        %1059 = vmatprep.mubr.bf16.mxu0 0
        %1060 = vmatmul.mubr.bf16.gmra.mrb[0].mxu0 %v949
        %v1061 = vpop.f32.mrb[0].mxu0
        %v1062 = vadd.f32 0.0, %v1061
        %v1063 = vpop.f32.mrb[0].mxu0
        %v1064 = vadd.f32 0.0, %v1063
        %v1065 = vpop.f32.mrb[0].mxu0
        %v1066 = vadd.f32 0.0, %v1065
        %v1067 = vpop.f32.mrb[0].mxu0
        %v1068 = vadd.f32 0.0, %v1067
        %1069 = vdwg.mxu0
        %v1070 = vadd.f32 %v721, %v992
        %v1071 = vadd.f32 %v723, %v994
        %v1072 = vadd.f32 %v725, %v996
        %v1073 = vadd.f32 %v727, %v998
        %v1074 = vadd.f32 %v731, %v1002
        %v1075 = vadd.f32 %v733, %v1004
        %v1076 = vadd.f32 %v735, %v1006
        %v1077 = vadd.f32 %v737, %v1008
        %v1078 = vadd.f32 %v741, %v1012
        %v1079 = vadd.f32 %v743, %v1014
        %v1080 = vadd.f32 %v745, %v1016
        %v1081 = vadd.f32 %v747, %v1018
        %v1082 = vadd.f32 %v751, %v1022
        %v1083 = vadd.f32 %v753, %v1024
        %v1084 = vadd.f32 %v755, %v1026
        %v1085 = vadd.f32 %v757, %v1028
        %v1086 = vadd.f32 %v761, %v1032
        %v1087 = vadd.f32 %v763, %v1034
        %v1088 = vadd.f32 %v765, %v1036
        %v1089 = vadd.f32 %v767, %v1038
        %v1090 = vadd.f32 %v771, %v1042
        %v1091 = vadd.f32 %v773, %v1044
        %v1092 = vadd.f32 %v775, %v1046
        %v1093 = vadd.f32 %v777, %v1048
        %v1094 = vadd.f32 %v781, %v1052
        %v1095 = vadd.f32 %v783, %v1054
        %v1096 = vadd.f32 %v785, %v1056
        %v1097 = vadd.f32 %v787, %v1058
        %v1098 = vadd.f32 %v791, %v1062
        %v1099 = vadd.f32 %v793, %v1064
        %v1100 = vadd.f32 %v795, %v1066
        %v1101 = vadd.f32 %v797, %v1068
        %s1102 = scalar_lea.vmem %s2, 64
        %v1103 = vld [vmem:[%s1102] sm:$0xf]
        %v1104 = vld [vmem:[%s1102 + $0x4] sm:$0xf]
        %v1105 = vld [vmem:[%s1102 + $0x8] sm:$0xf]
        %v1106 = vld [vmem:[%s1102 + $0xc] sm:$0xf]
        %v1107 = vld [vmem:[%s1102 + $0x10] sm:$0xf]
        %v1108 = vld [vmem:[%s1102 + $0x14] sm:$0xf]
        %v1109 = vld [vmem:[%s1102 + $0x18] sm:$0xf]
        %v1110 = vld [vmem:[%s1102 + $0x1c] sm:$0xf]
        %v1111 = vld [vmem:[%s1102 + $0x20] sm:$0xf]
        %v1112 = vld [vmem:[%s1102 + $0x24] sm:$0xf]
        %v1113 = vld [vmem:[%s1102 + $0x28] sm:$0xf]
        %v1114 = vld [vmem:[%s1102 + $0x2c] sm:$0xf]
        %v1115 = vld [vmem:[%s1102 + $0x30] sm:$0xf]
        %v1116 = vld [vmem:[%s1102 + $0x34] sm:$0xf]
        %v1117 = vld [vmem:[%s1102 + $0x38] sm:$0xf]
        %v1118 = vld [vmem:[%s1102 + $0x3c] sm:$0xf]
        %v1119 = vpack.c.bf16 %v862, %v860
        %v1120 = vpack.c.bf16 %v863, %v861
        %v1121 = vpack.c.bf16 %v866, %v864
        %v1122 = vpack.c.bf16 %v867, %v865
        %v1139 = vunpack.c.l.b16 %v1103
        %v1140 = vunpack.c.l.b16 %v1104
        %v1141 = vunpack.c.l.b16 %v1105
        %v1142 = vunpack.c.l.b16 %v1106
        %v1143 = vunpack.c.l.b16 %v1107
        %v1144 = vunpack.c.l.b16 %v1108
        %v1145 = vunpack.c.l.b16 %v1109
        %v1146 = vunpack.c.l.b16 %v1110
        %v1147 = vunpack.c.l.b16 %v1111
        %v1148 = vunpack.c.l.b16 %v1112
        %v1149 = vunpack.c.l.b16 %v1113
        %v1150 = vunpack.c.l.b16 %v1114
        %v1151 = vunpack.c.l.b16 %v1115
        %v1152 = vunpack.c.l.b16 %v1116
        %v1153 = vunpack.c.l.b16 %v1117
        %v1154 = vunpack.c.l.b16 %v1118
        %v1155 = vpack.c.b16 %v1140, %v1139
        %v1156 = vpack.c.b16 %v1142, %v1141
        %v1157 = vpack.c.b16 %v1144, %v1143
        %v1158 = vpack.c.b16 %v1146, %v1145
        %v1159 = vpack.c.b16 %v1148, %v1147
        %v1160 = vpack.c.b16 %v1150, %v1149
        %v1161 = vpack.c.b16 %v1152, %v1151
        %v1162 = vpack.c.b16 %v1154, %v1153
        %v1164 = vsel %vm476, %v1155, 0
        %v1167 = vsel %vm476, %v1156, 0
        %v1170 = vsel %vm476, %v1157, 0
        %v1173 = vsel %vm476, %v1158, 0
        %v1176 = vsel %vm476, %v1159, 0
        %v1179 = vsel %vm476, %v1160, 0
        %v1182 = vsel %vm476, %v1161, 0
        %v1185 = vsel %vm476, %v1162, 0
        %1187 = vmatprep.subr.bf16.mxu0 %v1120
        %1188 = vmatpush1.bf16.msra.mxu0 %v1119
        %1189 = vmatprep.subr.bf16.mxu0 %v1122
        %1190 = vmatpush1.bf16.msra.mxu0 %v1121
        %1191 = vmatprep.subr.bf16.mxu0 0
        %1192 = vmatpush1.bf16.msra.mxu0 0
        %1193 = vmatprep.subr.bf16.mxu0 0
        %1194 = vmatpush1.bf16.msra.mxu0 0
        %1195 = vmatprep.subr.bf16.mxu0 0
        %1196 = vmatpush1.bf16.msra.mxu0 0
        %1197 = vmatprep.subr.bf16.mxu0 0
        %1198 = vmatpush1.bf16.msra.mxu0 0
        %1199 = vmatprep.subr.bf16.mxu0 0
        %1200 = vmatpush1.bf16.msra.mxu0 0
        %1201 = vmatprep.subr.bf16.mxu0 0
        %1202 = vmatpush1.bf16.msra.mxu0 0
        %1203 = vmatprep.subr.bf16.mxu0 0
        %1204 = vmatpush1.bf16.msra.mxu0 0
        %1205 = vmatprep.subr.bf16.mxu0 0
        %1206 = vmatpush1.bf16.msra.mxu0 0
        %1207 = vmatprep.subr.bf16.mxu0 0
        %1208 = vmatpush1.bf16.msra.mxu0 0
        %1209 = vmatprep.subr.bf16.mxu0 0
        %1210 = vmatpush1.bf16.msra.mxu0 0
        %1211 = vmatprep.subr.bf16.mxu0 0
        %1212 = vmatpush1.bf16.msra.mxu0 0
        %1213 = vmatprep.subr.bf16.mxu0 0
        %1214 = vmatpush1.bf16.msra.mxu0 0
        %1215 = vmatprep.subr.bf16.mxu0 0
        %1216 = vmatpush1.bf16.msra.mxu0 0
        %1217 = vmatprep.subr.bf16.mxu0 0
        %1218 = vmatpush1.bf16.msra.mxu0 0
        %1219 = vmatprep.mubr.bf16.mxu0 0
        %1220 = vmatmul.mubr.bf16.gmra.mrb[0].mxu0 %v1164
        %v1221 = vpop.f32.mrb[0].mxu0
        %v1222 = vadd.f32 0.0, %v1221
        %v1223 = vpop.f32.mrb[0].mxu0
        %v1224 = vadd.f32 0.0, %v1223
        %v1225 = vpop.f32.mrb[0].mxu0
        %v1226 = vadd.f32 0.0, %v1225
        %v1227 = vpop.f32.mrb[0].mxu0
        %v1228 = vadd.f32 0.0, %v1227
        %1229 = vmatprep.mubr.bf16.mxu0 0
        %1230 = vmatmul.mubr.bf16.gmra.mrb[0].mxu0 %v1167
        %v1231 = vpop.f32.mrb[0].mxu0
        %v1232 = vadd.f32 0.0, %v1231
        %v1233 = vpop.f32.mrb[0].mxu0
        %v1234 = vadd.f32 0.0, %v1233
        %v1235 = vpop.f32.mrb[0].mxu0
        %v1236 = vadd.f32 0.0, %v1235
        %v1237 = vpop.f32.mrb[0].mxu0
        %v1238 = vadd.f32 0.0, %v1237
        %1239 = vmatprep.mubr.bf16.mxu0 0
        %1240 = vmatmul.mubr.bf16.gmra.mrb[0].mxu0 %v1170
        %v1241 = vpop.f32.mrb[0].mxu0
        %v1242 = vadd.f32 0.0, %v1241
        %v1243 = vpop.f32.mrb[0].mxu0
        %v1244 = vadd.f32 0.0, %v1243
        %v1245 = vpop.f32.mrb[0].mxu0
        %v1246 = vadd.f32 0.0, %v1245
        %v1247 = vpop.f32.mrb[0].mxu0
        %v1248 = vadd.f32 0.0, %v1247
        %1249 = vmatprep.mubr.bf16.mxu0 0
        %1250 = vmatmul.mubr.bf16.gmra.mrb[0].mxu0 %v1173
        %v1251 = vpop.f32.mrb[0].mxu0
        %v1252 = vadd.f32 0.0, %v1251
        %v1253 = vpop.f32.mrb[0].mxu0
        %v1254 = vadd.f32 0.0, %v1253
        %v1255 = vpop.f32.mrb[0].mxu0
        %v1256 = vadd.f32 0.0, %v1255
        %v1257 = vpop.f32.mrb[0].mxu0
        %v1258 = vadd.f32 0.0, %v1257
        %1259 = vmatprep.mubr.bf16.mxu0 0
        %1260 = vmatmul.mubr.bf16.gmra.mrb[0].mxu0 %v1176
        %v1261 = vpop.f32.mrb[0].mxu0
        %v1262 = vadd.f32 0.0, %v1261
        %v1263 = vpop.f32.mrb[0].mxu0
        %v1264 = vadd.f32 0.0, %v1263
        %v1265 = vpop.f32.mrb[0].mxu0
        %v1266 = vadd.f32 0.0, %v1265
        %v1267 = vpop.f32.mrb[0].mxu0
        %v1268 = vadd.f32 0.0, %v1267
        %1269 = vmatprep.mubr.bf16.mxu0 0
        %1270 = vmatmul.mubr.bf16.gmra.mrb[0].mxu0 %v1179
        %v1271 = vpop.f32.mrb[0].mxu0
        %v1272 = vadd.f32 0.0, %v1271
        %v1273 = vpop.f32.mrb[0].mxu0
        %v1274 = vadd.f32 0.0, %v1273
        %v1275 = vpop.f32.mrb[0].mxu0
        %v1276 = vadd.f32 0.0, %v1275
        %v1277 = vpop.f32.mrb[0].mxu0
        %v1278 = vadd.f32 0.0, %v1277
        %1279 = vmatprep.mubr.bf16.mxu0 0
        %1280 = vmatmul.mubr.bf16.gmra.mrb[0].mxu0 %v1182
        %v1281 = vpop.f32.mrb[0].mxu0
        %v1282 = vadd.f32 0.0, %v1281
        %v1283 = vpop.f32.mrb[0].mxu0
        %v1284 = vadd.f32 0.0, %v1283
        %v1285 = vpop.f32.mrb[0].mxu0
        %v1286 = vadd.f32 0.0, %v1285
        %v1287 = vpop.f32.mrb[0].mxu0
        %v1288 = vadd.f32 0.0, %v1287
        %1289 = vmatprep.mubr.bf16.mxu0 0
        %1290 = vmatmul.mubr.bf16.gmra.mrb[0].mxu0 %v1185
        %v1291 = vpop.f32.mrb[0].mxu0
        %v1292 = vadd.f32 0.0, %v1291
        %v1293 = vpop.f32.mrb[0].mxu0
        %v1294 = vadd.f32 0.0, %v1293
        %v1295 = vpop.f32.mrb[0].mxu0
        %v1296 = vadd.f32 0.0, %v1295
        %v1297 = vpop.f32.mrb[0].mxu0
        %v1298 = vadd.f32 0.0, %v1297
        %1299 = vdwg.mxu0
        %v1300 = vadd.f32 %v1070, %v1222
        %v1301 = vadd.f32 %v1071, %v1224
        %v1302 = vadd.f32 %v1072, %v1226
        %v1303 = vadd.f32 %v1073, %v1228
        %v1304 = vadd.f32 %v1074, %v1232
        %v1305 = vadd.f32 %v1075, %v1234
        %v1306 = vadd.f32 %v1076, %v1236
        %v1307 = vadd.f32 %v1077, %v1238
        %v1308 = vadd.f32 %v1078, %v1242
        %v1309 = vadd.f32 %v1079, %v1244
        %v1310 = vadd.f32 %v1080, %v1246
        %v1311 = vadd.f32 %v1081, %v1248
        %v1312 = vadd.f32 %v1082, %v1252
        %v1313 = vadd.f32 %v1083, %v1254
        %v1314 = vadd.f32 %v1084, %v1256
        %v1315 = vadd.f32 %v1085, %v1258
        %v1316 = vadd.f32 %v1086, %v1262
        %v1317 = vadd.f32 %v1087, %v1264
        %v1318 = vadd.f32 %v1088, %v1266
        %v1319 = vadd.f32 %v1089, %v1268
        %v1320 = vadd.f32 %v1090, %v1272
        %v1321 = vadd.f32 %v1091, %v1274
        %v1322 = vadd.f32 %v1092, %v1276
        %v1323 = vadd.f32 %v1093, %v1278
        %v1324 = vadd.f32 %v1094, %v1282
        %v1325 = vadd.f32 %v1095, %v1284
        %v1326 = vadd.f32 %v1096, %v1286
        %v1327 = vadd.f32 %v1097, %v1288
        %v1328 = vadd.f32 %v1098, %v1292
        %v1329 = vadd.f32 %v1099, %v1294
        %v1330 = vadd.f32 %v1100, %v1296
        %v1331 = vadd.f32 %v1101, %v1298
        %1332 = vrot.lane.b32.xlu0 %v321, 15
        %v1333 = vpop.permute.xlu0 %1332
        %1335 = vrot.lane.b32.xlu0 %v311, 15
        %v1336 = vpop.permute.xlu0 %1335
        %vm1337 = vcmask 121856
        %v1338 = vsel %vm1337, %v1336, %v1333
        %v1341 = vsel %vm1337, %v1333, %v1336
        %1342 = vrot.lane.b32.xlu0 %v313, 15
        %v1343 = vpop.permute.xlu0 %1342
        %1344 = vrot.lane.b32.xlu0 %v315, 15
        %v1345 = vpop.permute.xlu0 %1344
        %1346 = vrot.lane.b32.xlu0 %v317, 15
        %v1347 = vpop.permute.xlu0 %1346
        %1348 = vrot.lane.b32.xlu0 %v319, 15
        %v1349 = vpop.permute.xlu0 %1348
        %1354 = vrot.lane.b32.xlu0 %v312, 15
        %v1355 = vpop.permute.xlu0 %1354
        %1356 = vrot.lane.b32.xlu0 %v314, 15
        %v1357 = vpop.permute.xlu0 %1356
        %1358 = vrot.lane.b32.xlu0 %v316, 15
        %v1359 = vpop.permute.xlu0 %1358
        %1360 = vrot.lane.b32.xlu0 %v318, 15
        %v1361 = vpop.permute.xlu0 %1360
        %v1362 = vsel %vm1337, %v1355, %v1343
        %v1363 = vsel %vm1337, %v1357, %v1345
        %v1364 = vsel %vm1337, %v1359, %v1347
        %v1365 = vsel %vm1337, %v1361, %v1349
        %v1374 = vsel %vm1337, %v1343, %v1355
        %v1375 = vsel %vm1337, %v1345, %v1357
        %v1376 = vsel %vm1337, %v1347, %v1359
        %v1377 = vsel %vm1337, %v1349, %v1361
        %s1378 = scalar_lea.vmem %s4, 4
        %v1379 = vld [vmem:[%s1378] sm:$0x3]
        %v1381 = vlaneseq
        %v1382 = vshrl.u32 %v1381, 7
        %v1383 = vsub.s32 0, %v1382
        %v1384 = vrot.slane %v1379, %v1383
        %v1385 = vlaneseq
        %v1386 = vshrl.u32 %v1385, 7
        %v1387 = vsub.s32 1, %v1386
        %v1388 = vrot.slane %v1379, %v1387
        %v1391 = vmul.f32 %v1341, %v1384
        %v1392 = vmul.f32 %v1338, %v1388
        %v1393 = vmul.f32 %v1374, %v1384
        %v1394 = vmul.f32 %v1362, %v1388
        %v1395 = vmul.f32 %v1375, %v1384
        %v1396 = vmul.f32 %v1363, %v1388
        %v1397 = vmul.f32 %v1376, %v1384
        %v1398 = vmul.f32 %v1364, %v1388
        %v1399 = vmul.f32 %v1377, %v1384
        %v1400 = vmul.f32 %v1365, %v1388
        %s1401 = scalar_lea.vmem %s1, 128
        %v1402 = vld [vmem:[%s1401] sm:$0xf]
        %v1403 = vld [vmem:[%s1401 + $0x4] sm:$0xf]
        %v1404 = vld [vmem:[%s1401 + $0x8] sm:$0xf]
        %v1405 = vld [vmem:[%s1401 + $0xc] sm:$0xf]
        %v1406 = vld [vmem:[%s1401 + $0x10] sm:$0xf]
        %v1407 = vld [vmem:[%s1401 + $0x14] sm:$0xf]
        %v1408 = vld [vmem:[%s1401 + $0x18] sm:$0xf]
        %v1409 = vld [vmem:[%s1401 + $0x1c] sm:$0xf]
        %v1410 = vld [vmem:[%s1401 + $0x20] sm:$0xf]
        %v1411 = vld [vmem:[%s1401 + $0x24] sm:$0xf]
        %v1412 = vld [vmem:[%s1401 + $0x28] sm:$0xf]
        %v1413 = vld [vmem:[%s1401 + $0x2c] sm:$0xf]
        %v1414 = vld [vmem:[%s1401 + $0x30] sm:$0xf]
        %v1415 = vld [vmem:[%s1401 + $0x34] sm:$0xf]
        %v1416 = vld [vmem:[%s1401 + $0x38] sm:$0xf]
        %v1417 = vld [vmem:[%s1401 + $0x3c] sm:$0xf]
        %v1418 = vpack.c.bf16 %v1391, %v1391
        %v1419 = vpack.c.bf16 %v1392, %v1392
        %v1436 = vunpack.c.l.b16 %v1402
        %v1437 = vunpack.c.l.b16 %v1403
        %v1438 = vunpack.c.l.b16 %v1404
        %v1439 = vunpack.c.l.b16 %v1405
        %v1440 = vunpack.c.l.b16 %v1406
        %v1441 = vunpack.c.l.b16 %v1407
        %v1442 = vunpack.c.l.b16 %v1408
        %v1443 = vunpack.c.l.b16 %v1409
        %v1444 = vunpack.c.l.b16 %v1410
        %v1445 = vunpack.c.l.b16 %v1411
        %v1446 = vunpack.c.l.b16 %v1412
        %v1447 = vunpack.c.l.b16 %v1413
        %v1448 = vunpack.c.l.b16 %v1414
        %v1449 = vunpack.c.l.b16 %v1415
        %v1450 = vunpack.c.l.b16 %v1416
        %v1451 = vunpack.c.l.b16 %v1417
        %v1452 = vpack.c.b16 %v1437, %v1436
        %v1453 = vpack.c.b16 %v1439, %v1438
        %v1454 = vpack.c.b16 %v1441, %v1440
        %v1455 = vpack.c.b16 %v1443, %v1442
        %v1456 = vpack.c.b16 %v1445, %v1444
        %v1457 = vpack.c.b16 %v1447, %v1446
        %v1458 = vpack.c.b16 %v1449, %v1448
        %v1459 = vpack.c.b16 %v1451, %v1450
        %v1461 = vsel %vm654, %v1452, 0
        %v1464 = vsel %vm654, %v1453, 0
        %v1467 = vsel %vm654, %v1454, 0
        %v1470 = vsel %vm654, %v1455, 0
        %v1473 = vsel %vm654, %v1456, 0
        %v1476 = vsel %vm654, %v1457, 0
        %v1479 = vsel %vm654, %v1458, 0
        %v1482 = vsel %vm654, %v1459, 0
        %v1485 = vsel %vm679, %v1418, 0
        %v1488 = vsel %vm679, %v1419, 0
        %1490 = vmatprep.subr.bf16.mxu0 %v1488
        %1491 = vmatpush1.bf16.msra.mxu0 %v1485
        %1492 = vmatprep.subr.bf16.mxu0 0
        %1493 = vmatpush1.bf16.msra.mxu0 0
        %1494 = vmatprep.subr.bf16.mxu0 0
        %1495 = vmatpush1.bf16.msra.mxu0 0
        %1496 = vmatprep.subr.bf16.mxu0 0
        %1497 = vmatpush1.bf16.msra.mxu0 0
        %1498 = vmatprep.subr.bf16.mxu0 0
        %1499 = vmatpush1.bf16.msra.mxu0 0
        %1500 = vmatprep.subr.bf16.mxu0 0
        %1501 = vmatpush1.bf16.msra.mxu0 0
        %1502 = vmatprep.subr.bf16.mxu0 0
        %1503 = vmatpush1.bf16.msra.mxu0 0
        %1504 = vmatprep.subr.bf16.mxu0 0
        %1505 = vmatpush1.bf16.msra.mxu0 0
        %1506 = vmatprep.subr.bf16.mxu0 0
        %1507 = vmatpush1.bf16.msra.mxu0 0
        %1508 = vmatprep.subr.bf16.mxu0 0
        %1509 = vmatpush1.bf16.msra.mxu0 0
        %1510 = vmatprep.subr.bf16.mxu0 0
        %1511 = vmatpush1.bf16.msra.mxu0 0
        %1512 = vmatprep.subr.bf16.mxu0 0
        %1513 = vmatpush1.bf16.msra.mxu0 0
        %1514 = vmatprep.subr.bf16.mxu0 0
        %1515 = vmatpush1.bf16.msra.mxu0 0
        %1516 = vmatprep.subr.bf16.mxu0 0
        %1517 = vmatpush1.bf16.msra.mxu0 0
        %1518 = vmatprep.subr.bf16.mxu0 0
        %1519 = vmatpush1.bf16.msra.mxu0 0
        %1520 = vmatprep.subr.bf16.mxu0 0
        %1521 = vmatpush1.bf16.msra.mxu0 0
        %1522 = vmatprep.mubr.bf16.mxu0 0
        %1523 = vmatmul.mubr.bf16.gmra.mrb[0].mxu0 %v1461
        %v1524 = vpop.f32.mrb[0].mxu0
        %v1525 = vadd.f32 0.0, %v1524
        %v1526 = vpop.f32.mrb[0].mxu0
        %v1527 = vadd.f32 0.0, %v1526
        %v1528 = vpop.f32.mrb[0].mxu0
        %v1529 = vadd.f32 0.0, %v1528
        %v1530 = vpop.f32.mrb[0].mxu0
        %v1531 = vadd.f32 0.0, %v1530
        %1532 = vmatprep.mubr.bf16.mxu0 0
        %1533 = vmatmul.mubr.bf16.gmra.mrb[0].mxu0 %v1464
        %v1534 = vpop.f32.mrb[0].mxu0
        %v1535 = vadd.f32 0.0, %v1534
        %v1536 = vpop.f32.mrb[0].mxu0
        %v1537 = vadd.f32 0.0, %v1536
        %v1538 = vpop.f32.mrb[0].mxu0
        %v1539 = vadd.f32 0.0, %v1538
        %v1540 = vpop.f32.mrb[0].mxu0
        %v1541 = vadd.f32 0.0, %v1540
        %1542 = vmatprep.mubr.bf16.mxu0 0
        %1543 = vmatmul.mubr.bf16.gmra.mrb[0].mxu0 %v1467
        %v1544 = vpop.f32.mrb[0].mxu0
        %v1545 = vadd.f32 0.0, %v1544
        %v1546 = vpop.f32.mrb[0].mxu0
        %v1547 = vadd.f32 0.0, %v1546
        %v1548 = vpop.f32.mrb[0].mxu0
        %v1549 = vadd.f32 0.0, %v1548
        %v1550 = vpop.f32.mrb[0].mxu0
        %v1551 = vadd.f32 0.0, %v1550
        %1552 = vmatprep.mubr.bf16.mxu0 0
        %1553 = vmatmul.mubr.bf16.gmra.mrb[0].mxu0 %v1470
        %v1554 = vpop.f32.mrb[0].mxu0
        %v1555 = vadd.f32 0.0, %v1554
        %v1556 = vpop.f32.mrb[0].mxu0
        %v1557 = vadd.f32 0.0, %v1556
        %v1558 = vpop.f32.mrb[0].mxu0
        %v1559 = vadd.f32 0.0, %v1558
        %v1560 = vpop.f32.mrb[0].mxu0
        %v1561 = vadd.f32 0.0, %v1560
        %1562 = vmatprep.mubr.bf16.mxu0 0
        %1563 = vmatmul.mubr.bf16.gmra.mrb[0].mxu0 %v1473
        %v1564 = vpop.f32.mrb[0].mxu0
        %v1565 = vadd.f32 0.0, %v1564
        %v1566 = vpop.f32.mrb[0].mxu0
        %v1567 = vadd.f32 0.0, %v1566
        %v1568 = vpop.f32.mrb[0].mxu0
        %v1569 = vadd.f32 0.0, %v1568
        %v1570 = vpop.f32.mrb[0].mxu0
        %v1571 = vadd.f32 0.0, %v1570
        %1572 = vmatprep.mubr.bf16.mxu0 0
        %1573 = vmatmul.mubr.bf16.gmra.mrb[0].mxu0 %v1476
        %v1574 = vpop.f32.mrb[0].mxu0
        %v1575 = vadd.f32 0.0, %v1574
        %v1576 = vpop.f32.mrb[0].mxu0
        %v1577 = vadd.f32 0.0, %v1576
        %v1578 = vpop.f32.mrb[0].mxu0
        %v1579 = vadd.f32 0.0, %v1578
        %v1580 = vpop.f32.mrb[0].mxu0
        %v1581 = vadd.f32 0.0, %v1580
        %1582 = vmatprep.mubr.bf16.mxu0 0
        %1583 = vmatmul.mubr.bf16.gmra.mrb[0].mxu0 %v1479
        %v1584 = vpop.f32.mrb[0].mxu0
        %v1585 = vadd.f32 0.0, %v1584
        %v1586 = vpop.f32.mrb[0].mxu0
        %v1587 = vadd.f32 0.0, %v1586
        %v1588 = vpop.f32.mrb[0].mxu0
        %v1589 = vadd.f32 0.0, %v1588
        %v1590 = vpop.f32.mrb[0].mxu0
        %v1591 = vadd.f32 0.0, %v1590
        %1592 = vmatprep.mubr.bf16.mxu0 0
        %1593 = vmatmul.mubr.bf16.gmra.mrb[0].mxu0 %v1482
        %v1594 = vpop.f32.mrb[0].mxu0
        %v1595 = vadd.f32 0.0, %v1594
        %v1596 = vpop.f32.mrb[0].mxu0
        %v1597 = vadd.f32 0.0, %v1596
        %v1598 = vpop.f32.mrb[0].mxu0
        %v1599 = vadd.f32 0.0, %v1598
        %v1600 = vpop.f32.mrb[0].mxu0
        %v1601 = vadd.f32 0.0, %v1600
        %1602 = vdwg.mxu0
        %v1603 = vadd.f32 %v1300, %v1525
        %v1604 = vadd.f32 %v1301, %v1527
        %v1605 = vadd.f32 %v1302, %v1529
        %v1606 = vadd.f32 %v1303, %v1531
        %v1607 = vadd.f32 %v1304, %v1535
        %v1608 = vadd.f32 %v1305, %v1537
        %v1609 = vadd.f32 %v1306, %v1539
        %v1610 = vadd.f32 %v1307, %v1541
        %v1611 = vadd.f32 %v1308, %v1545
        %v1612 = vadd.f32 %v1309, %v1547
        %v1613 = vadd.f32 %v1310, %v1549
        %v1614 = vadd.f32 %v1311, %v1551
        %v1615 = vadd.f32 %v1312, %v1555
        %v1616 = vadd.f32 %v1313, %v1557
        %v1617 = vadd.f32 %v1314, %v1559
        %v1618 = vadd.f32 %v1315, %v1561
        %v1619 = vadd.f32 %v1316, %v1565
        %v1620 = vadd.f32 %v1317, %v1567
        %v1621 = vadd.f32 %v1318, %v1569
        %v1622 = vadd.f32 %v1319, %v1571
        %v1623 = vadd.f32 %v1320, %v1575
        %v1624 = vadd.f32 %v1321, %v1577
        %v1625 = vadd.f32 %v1322, %v1579
        %v1626 = vadd.f32 %v1323, %v1581
        %v1627 = vadd.f32 %v1324, %v1585
        %v1628 = vadd.f32 %v1325, %v1587
        %v1629 = vadd.f32 %v1326, %v1589
        %v1630 = vadd.f32 %v1327, %v1591
        %v1631 = vadd.f32 %v1328, %v1595
        %v1632 = vadd.f32 %v1329, %v1597
        %v1633 = vadd.f32 %v1330, %v1599
        %v1634 = vadd.f32 %v1331, %v1601
        %s1635 = scalar_lea.vmem %s2, 128
        %v1636 = vld [vmem:[%s1635] sm:$0xf]
        %v1637 = vld [vmem:[%s1635 + $0x4] sm:$0xf]
        %v1638 = vld [vmem:[%s1635 + $0x8] sm:$0xf]
        %v1639 = vld [vmem:[%s1635 + $0xc] sm:$0xf]
        %v1640 = vld [vmem:[%s1635 + $0x10] sm:$0xf]
        %v1641 = vld [vmem:[%s1635 + $0x14] sm:$0xf]
        %v1642 = vld [vmem:[%s1635 + $0x18] sm:$0xf]
        %v1643 = vld [vmem:[%s1635 + $0x1c] sm:$0xf]
        %v1644 = vld [vmem:[%s1635 + $0x20] sm:$0xf]
        %v1645 = vld [vmem:[%s1635 + $0x24] sm:$0xf]
        %v1646 = vld [vmem:[%s1635 + $0x28] sm:$0xf]
        %v1647 = vld [vmem:[%s1635 + $0x2c] sm:$0xf]
        %v1648 = vld [vmem:[%s1635 + $0x30] sm:$0xf]
        %v1649 = vld [vmem:[%s1635 + $0x34] sm:$0xf]
        %v1650 = vld [vmem:[%s1635 + $0x38] sm:$0xf]
        %v1651 = vld [vmem:[%s1635 + $0x3c] sm:$0xf]
        %v1652 = vpack.c.bf16 %v1395, %v1393
        %v1653 = vpack.c.bf16 %v1396, %v1394
        %v1654 = vpack.c.bf16 %v1399, %v1397
        %v1655 = vpack.c.bf16 %v1400, %v1398
        %v1672 = vunpack.c.l.b16 %v1636
        %v1673 = vunpack.c.l.b16 %v1637
        %v1674 = vunpack.c.l.b16 %v1638
        %v1675 = vunpack.c.l.b16 %v1639
        %v1676 = vunpack.c.l.b16 %v1640
        %v1677 = vunpack.c.l.b16 %v1641
        %v1678 = vunpack.c.l.b16 %v1642
        %v1679 = vunpack.c.l.b16 %v1643
        %v1680 = vunpack.c.l.b16 %v1644
        %v1681 = vunpack.c.l.b16 %v1645
        %v1682 = vunpack.c.l.b16 %v1646
        %v1683 = vunpack.c.l.b16 %v1647
        %v1684 = vunpack.c.l.b16 %v1648
        %v1685 = vunpack.c.l.b16 %v1649
        %v1686 = vunpack.c.l.b16 %v1650
        %v1687 = vunpack.c.l.b16 %v1651
        %v1688 = vpack.c.b16 %v1673, %v1672
        %v1689 = vpack.c.b16 %v1675, %v1674
        %v1690 = vpack.c.b16 %v1677, %v1676
        %v1691 = vpack.c.b16 %v1679, %v1678
        %v1692 = vpack.c.b16 %v1681, %v1680
        %v1693 = vpack.c.b16 %v1683, %v1682
        %v1694 = vpack.c.b16 %v1685, %v1684
        %v1695 = vpack.c.b16 %v1687, %v1686
        %v1697 = vsel %vm476, %v1688, 0
        %v1700 = vsel %vm476, %v1689, 0
        %v1703 = vsel %vm476, %v1690, 0
        %v1706 = vsel %vm476, %v1691, 0
        %v1709 = vsel %vm476, %v1692, 0
        %v1712 = vsel %vm476, %v1693, 0
        %v1715 = vsel %vm476, %v1694, 0
        %v1718 = vsel %vm476, %v1695, 0
        %1720 = vmatprep.subr.bf16.mxu0 %v1653
        %1721 = vmatpush1.bf16.msra.mxu0 %v1652
        %1722 = vmatprep.subr.bf16.mxu0 %v1655
        %1723 = vmatpush1.bf16.msra.mxu0 %v1654
        %1724 = vmatprep.subr.bf16.mxu0 0
        %1725 = vmatpush1.bf16.msra.mxu0 0
        %1726 = vmatprep.subr.bf16.mxu0 0
        %1727 = vmatpush1.bf16.msra.mxu0 0
        %1728 = vmatprep.subr.bf16.mxu0 0
        %1729 = vmatpush1.bf16.msra.mxu0 0
        %1730 = vmatprep.subr.bf16.mxu0 0
        %1731 = vmatpush1.bf16.msra.mxu0 0
        %1732 = vmatprep.subr.bf16.mxu0 0
        %1733 = vmatpush1.bf16.msra.mxu0 0
        %1734 = vmatprep.subr.bf16.mxu0 0
        %1735 = vmatpush1.bf16.msra.mxu0 0
        %1736 = vmatprep.subr.bf16.mxu0 0
        %1737 = vmatpush1.bf16.msra.mxu0 0
        %1738 = vmatprep.subr.bf16.mxu0 0
        %1739 = vmatpush1.bf16.msra.mxu0 0
        %1740 = vmatprep.subr.bf16.mxu0 0
        %1741 = vmatpush1.bf16.msra.mxu0 0
        %1742 = vmatprep.subr.bf16.mxu0 0
        %1743 = vmatpush1.bf16.msra.mxu0 0
        %1744 = vmatprep.subr.bf16.mxu0 0
        %1745 = vmatpush1.bf16.msra.mxu0 0
        %1746 = vmatprep.subr.bf16.mxu0 0
        %1747 = vmatpush1.bf16.msra.mxu0 0
        %1748 = vmatprep.subr.bf16.mxu0 0
        %1749 = vmatpush1.bf16.msra.mxu0 0
        %1750 = vmatprep.subr.bf16.mxu0 0
        %1751 = vmatpush1.bf16.msra.mxu0 0
        %1752 = vmatprep.mubr.bf16.mxu0 0
        %1753 = vmatmul.mubr.bf16.gmra.mrb[0].mxu0 %v1697
        %v1754 = vpop.f32.mrb[0].mxu0
        %v1755 = vadd.f32 0.0, %v1754
        %v1756 = vpop.f32.mrb[0].mxu0
        %v1757 = vadd.f32 0.0, %v1756
        %v1758 = vpop.f32.mrb[0].mxu0
        %v1759 = vadd.f32 0.0, %v1758
        %v1760 = vpop.f32.mrb[0].mxu0
        %v1761 = vadd.f32 0.0, %v1760
        %1762 = vmatprep.mubr.bf16.mxu0 0
        %1763 = vmatmul.mubr.bf16.gmra.mrb[0].mxu0 %v1700
        %v1764 = vpop.f32.mrb[0].mxu0
        %v1765 = vadd.f32 0.0, %v1764
        %v1766 = vpop.f32.mrb[0].mxu0
        %v1767 = vadd.f32 0.0, %v1766
        %v1768 = vpop.f32.mrb[0].mxu0
        %v1769 = vadd.f32 0.0, %v1768
        %v1770 = vpop.f32.mrb[0].mxu0
        %v1771 = vadd.f32 0.0, %v1770
        %1772 = vmatprep.mubr.bf16.mxu0 0
        %1773 = vmatmul.mubr.bf16.gmra.mrb[0].mxu0 %v1703
        %v1774 = vpop.f32.mrb[0].mxu0
        %v1775 = vadd.f32 0.0, %v1774
        %v1776 = vpop.f32.mrb[0].mxu0
        %v1777 = vadd.f32 0.0, %v1776
        %v1778 = vpop.f32.mrb[0].mxu0
        %v1779 = vadd.f32 0.0, %v1778
        %v1780 = vpop.f32.mrb[0].mxu0
        %v1781 = vadd.f32 0.0, %v1780
        %1782 = vmatprep.mubr.bf16.mxu0 0
        %1783 = vmatmul.mubr.bf16.gmra.mrb[0].mxu0 %v1706
        %v1784 = vpop.f32.mrb[0].mxu0
        %v1785 = vadd.f32 0.0, %v1784
        %v1786 = vpop.f32.mrb[0].mxu0
        %v1787 = vadd.f32 0.0, %v1786
        %v1788 = vpop.f32.mrb[0].mxu0
        %v1789 = vadd.f32 0.0, %v1788
        %v1790 = vpop.f32.mrb[0].mxu0
        %v1791 = vadd.f32 0.0, %v1790
        %1792 = vmatprep.mubr.bf16.mxu0 0
        %1793 = vmatmul.mubr.bf16.gmra.mrb[0].mxu0 %v1709
        %v1794 = vpop.f32.mrb[0].mxu0
        %v1795 = vadd.f32 0.0, %v1794
        %v1796 = vpop.f32.mrb[0].mxu0
        %v1797 = vadd.f32 0.0, %v1796
        %v1798 = vpop.f32.mrb[0].mxu0
        %v1799 = vadd.f32 0.0, %v1798
        %v1800 = vpop.f32.mrb[0].mxu0
        %v1801 = vadd.f32 0.0, %v1800
        %1802 = vmatprep.mubr.bf16.mxu0 0
        %1803 = vmatmul.mubr.bf16.gmra.mrb[0].mxu0 %v1712
        %v1804 = vpop.f32.mrb[0].mxu0
        %v1805 = vadd.f32 0.0, %v1804
        %v1806 = vpop.f32.mrb[0].mxu0
        %v1807 = vadd.f32 0.0, %v1806
        %v1808 = vpop.f32.mrb[0].mxu0
        %v1809 = vadd.f32 0.0, %v1808
        %v1810 = vpop.f32.mrb[0].mxu0
        %v1811 = vadd.f32 0.0, %v1810
        %1812 = vmatprep.mubr.bf16.mxu0 0
        %1813 = vmatmul.mubr.bf16.gmra.mrb[0].mxu0 %v1715
        %v1814 = vpop.f32.mrb[0].mxu0
        %v1815 = vadd.f32 0.0, %v1814
        %v1816 = vpop.f32.mrb[0].mxu0
        %v1817 = vadd.f32 0.0, %v1816
        %v1818 = vpop.f32.mrb[0].mxu0
        %v1819 = vadd.f32 0.0, %v1818
        %v1820 = vpop.f32.mrb[0].mxu0
        %v1821 = vadd.f32 0.0, %v1820
        %1822 = vmatprep.mubr.bf16.mxu0 0
        %1823 = vmatmul.mubr.bf16.gmra.mrb[0].mxu0 %v1718
        %v1824 = vpop.f32.mrb[0].mxu0
        %v1825 = vadd.f32 0.0, %v1824
        %v1826 = vpop.f32.mrb[0].mxu0
        %v1827 = vadd.f32 0.0, %v1826
        %v1828 = vpop.f32.mrb[0].mxu0
        %v1829 = vadd.f32 0.0, %v1828
        %v1830 = vpop.f32.mrb[0].mxu0
        %v1831 = vadd.f32 0.0, %v1830
        %1832 = vdwg.mxu0
        %v1833 = vadd.f32 %v1603, %v1755
        %v1834 = vadd.f32 %v1604, %v1757
        %v1835 = vadd.f32 %v1605, %v1759
        %v1836 = vadd.f32 %v1606, %v1761
        %v1837 = vadd.f32 %v1607, %v1765
        %v1838 = vadd.f32 %v1608, %v1767
        %v1839 = vadd.f32 %v1609, %v1769
        %v1840 = vadd.f32 %v1610, %v1771
        %v1841 = vadd.f32 %v1611, %v1775
        %v1842 = vadd.f32 %v1612, %v1777
        %v1843 = vadd.f32 %v1613, %v1779
        %v1844 = vadd.f32 %v1614, %v1781
        %v1845 = vadd.f32 %v1615, %v1785
        %v1846 = vadd.f32 %v1616, %v1787
        %v1847 = vadd.f32 %v1617, %v1789
        %v1848 = vadd.f32 %v1618, %v1791
        %v1849 = vadd.f32 %v1619, %v1795
        %v1850 = vadd.f32 %v1620, %v1797
        %v1851 = vadd.f32 %v1621, %v1799
        %v1852 = vadd.f32 %v1622, %v1801
        %v1853 = vadd.f32 %v1623, %v1805
        %v1854 = vadd.f32 %v1624, %v1807
        %v1855 = vadd.f32 %v1625, %v1809
        %v1856 = vadd.f32 %v1626, %v1811
        %v1857 = vadd.f32 %v1627, %v1815
        %v1858 = vadd.f32 %v1628, %v1817
        %v1859 = vadd.f32 %v1629, %v1819
        %v1860 = vadd.f32 %v1630, %v1821
        %v1861 = vadd.f32 %v1631, %v1825
        %v1862 = vadd.f32 %v1632, %v1827
        %v1863 = vadd.f32 %v1633, %v1829
        %v1864 = vadd.f32 %v1634, %v1831
        %1865 = vrot.lane.b32.xlu0 %v321, 1
        %v1866 = vpop.permute.xlu0 %1865
        %1868 = vrot.lane.b32.xlu0 %v311, 1
        %v1869 = vpop.permute.xlu0 %1868
        %vm1870 = vcmask 7168
        %v1871 = vsel %vm1870, %v1869, %v1866
        %v1874 = vsel %vm1870, %v1866, %v1869
        %1875 = vrot.lane.b32.xlu0 %v313, 1
        %v1876 = vpop.permute.xlu0 %1875
        %1877 = vrot.lane.b32.xlu0 %v315, 1
        %v1878 = vpop.permute.xlu0 %1877
        %1879 = vrot.lane.b32.xlu0 %v317, 1
        %v1880 = vpop.permute.xlu0 %1879
        %1881 = vrot.lane.b32.xlu0 %v319, 1
        %v1882 = vpop.permute.xlu0 %1881
        %1887 = vrot.lane.b32.xlu0 %v312, 1
        %v1888 = vpop.permute.xlu0 %1887
        %1889 = vrot.lane.b32.xlu0 %v314, 1
        %v1890 = vpop.permute.xlu0 %1889
        %1891 = vrot.lane.b32.xlu0 %v316, 1
        %v1892 = vpop.permute.xlu0 %1891
        %1893 = vrot.lane.b32.xlu0 %v318, 1
        %v1894 = vpop.permute.xlu0 %1893
        %v1895 = vsel %vm1870, %v1888, %v1876
        %v1896 = vsel %vm1870, %v1890, %v1878
        %v1897 = vsel %vm1870, %v1892, %v1880
        %v1898 = vsel %vm1870, %v1894, %v1882
        %v1907 = vsel %vm1870, %v1876, %v1888
        %v1908 = vsel %vm1870, %v1878, %v1890
        %v1909 = vsel %vm1870, %v1880, %v1892
        %v1910 = vsel %vm1870, %v1882, %v1894
        %s1911 = scalar_lea.vmem %s4, 6
        %v1912 = vld [vmem:[%s1911] sm:$0x3]
        %v1914 = vlaneseq
        %v1915 = vshrl.u32 %v1914, 7
        %v1916 = vsub.s32 0, %v1915
        %v1917 = vrot.slane %v1912, %v1916
        %v1918 = vlaneseq
        %v1919 = vshrl.u32 %v1918, 7
        %v1920 = vsub.s32 1, %v1919
        %v1921 = vrot.slane %v1912, %v1920
        %v1924 = vmul.f32 %v1874, %v1917
        %v1925 = vmul.f32 %v1871, %v1921
        %v1926 = vmul.f32 %v1907, %v1917
        %v1927 = vmul.f32 %v1895, %v1921
        %v1928 = vmul.f32 %v1908, %v1917
        %v1929 = vmul.f32 %v1896, %v1921
        %v1930 = vmul.f32 %v1909, %v1917
        %v1931 = vmul.f32 %v1897, %v1921
        %v1932 = vmul.f32 %v1910, %v1917
        %v1933 = vmul.f32 %v1898, %v1921
        %s1934 = scalar_lea.vmem %s1, 192
        %v1935 = vld [vmem:[%s1934] sm:$0xf]
        %v1936 = vld [vmem:[%s1934 + $0x4] sm:$0xf]
        %v1937 = vld [vmem:[%s1934 + $0x8] sm:$0xf]
        %v1938 = vld [vmem:[%s1934 + $0xc] sm:$0xf]
        %v1939 = vld [vmem:[%s1934 + $0x10] sm:$0xf]
        %v1940 = vld [vmem:[%s1934 + $0x14] sm:$0xf]
        %v1941 = vld [vmem:[%s1934 + $0x18] sm:$0xf]
        %v1942 = vld [vmem:[%s1934 + $0x1c] sm:$0xf]
        %v1943 = vld [vmem:[%s1934 + $0x20] sm:$0xf]
        %v1944 = vld [vmem:[%s1934 + $0x24] sm:$0xf]
        %v1945 = vld [vmem:[%s1934 + $0x28] sm:$0xf]
        %v1946 = vld [vmem:[%s1934 + $0x2c] sm:$0xf]
        %v1947 = vld [vmem:[%s1934 + $0x30] sm:$0xf]
        %v1948 = vld [vmem:[%s1934 + $0x34] sm:$0xf]
        %v1949 = vld [vmem:[%s1934 + $0x38] sm:$0xf]
        %v1950 = vld [vmem:[%s1934 + $0x3c] sm:$0xf]
        %v1951 = vpack.c.bf16 %v1924, %v1924
        %v1952 = vpack.c.bf16 %v1925, %v1925
        %v1969 = vunpack.c.l.b16 %v1935
        %v1970 = vunpack.c.l.b16 %v1936
        %v1971 = vunpack.c.l.b16 %v1937
        %v1972 = vunpack.c.l.b16 %v1938
        %v1973 = vunpack.c.l.b16 %v1939
        %v1974 = vunpack.c.l.b16 %v1940
        %v1975 = vunpack.c.l.b16 %v1941
        %v1976 = vunpack.c.l.b16 %v1942
        %v1977 = vunpack.c.l.b16 %v1943
        %v1978 = vunpack.c.l.b16 %v1944
        %v1979 = vunpack.c.l.b16 %v1945
        %v1980 = vunpack.c.l.b16 %v1946
        %v1981 = vunpack.c.l.b16 %v1947
        %v1982 = vunpack.c.l.b16 %v1948
        %v1983 = vunpack.c.l.b16 %v1949
        %v1984 = vunpack.c.l.b16 %v1950
        %v1985 = vpack.c.b16 %v1970, %v1969
        %v1986 = vpack.c.b16 %v1972, %v1971
        %v1987 = vpack.c.b16 %v1974, %v1973
        %v1988 = vpack.c.b16 %v1976, %v1975
        %v1989 = vpack.c.b16 %v1978, %v1977
        %v1990 = vpack.c.b16 %v1980, %v1979
        %v1991 = vpack.c.b16 %v1982, %v1981
        %v1992 = vpack.c.b16 %v1984, %v1983
        %v1994 = vsel %vm654, %v1985, 0
        %v1997 = vsel %vm654, %v1986, 0
        %v2000 = vsel %vm654, %v1987, 0
        %v2003 = vsel %vm654, %v1988, 0
        %v2006 = vsel %vm654, %v1989, 0
        %v2009 = vsel %vm654, %v1990, 0
        %v2012 = vsel %vm654, %v1991, 0
        %v2015 = vsel %vm654, %v1992, 0
        %v2018 = vsel %vm679, %v1951, 0
        %v2021 = vsel %vm679, %v1952, 0
        %2023 = vmatprep.subr.bf16.mxu0 %v2021
        %2024 = vmatpush1.bf16.msra.mxu0 %v2018
        %2025 = vmatprep.subr.bf16.mxu0 0
        %2026 = vmatpush1.bf16.msra.mxu0 0
        %2027 = vmatprep.subr.bf16.mxu0 0
        %2028 = vmatpush1.bf16.msra.mxu0 0
        %2029 = vmatprep.subr.bf16.mxu0 0
        %2030 = vmatpush1.bf16.msra.mxu0 0
        %2031 = vmatprep.subr.bf16.mxu0 0
        %2032 = vmatpush1.bf16.msra.mxu0 0
        %2033 = vmatprep.subr.bf16.mxu0 0
        %2034 = vmatpush1.bf16.msra.mxu0 0
        %2035 = vmatprep.subr.bf16.mxu0 0
        %2036 = vmatpush1.bf16.msra.mxu0 0
        %2037 = vmatprep.subr.bf16.mxu0 0
        %2038 = vmatpush1.bf16.msra.mxu0 0
        %2039 = vmatprep.subr.bf16.mxu0 0
        %2040 = vmatpush1.bf16.msra.mxu0 0
        %2041 = vmatprep.subr.bf16.mxu0 0
        %2042 = vmatpush1.bf16.msra.mxu0 0
        %2043 = vmatprep.subr.bf16.mxu0 0
        %2044 = vmatpush1.bf16.msra.mxu0 0
        %2045 = vmatprep.subr.bf16.mxu0 0
        %2046 = vmatpush1.bf16.msra.mxu0 0
        %2047 = vmatprep.subr.bf16.mxu0 0
        %2048 = vmatpush1.bf16.msra.mxu0 0
        %2049 = vmatprep.subr.bf16.mxu0 0
        %2050 = vmatpush1.bf16.msra.mxu0 0
        %2051 = vmatprep.subr.bf16.mxu0 0
        %2052 = vmatpush1.bf16.msra.mxu0 0
        %2053 = vmatprep.subr.bf16.mxu0 0
        %2054 = vmatpush1.bf16.msra.mxu0 0
        %2055 = vmatprep.mubr.bf16.mxu0 0
        %2056 = vmatmul.mubr.bf16.gmra.mrb[0].mxu0 %v1994
        %v2057 = vpop.f32.mrb[0].mxu0
        %v2058 = vadd.f32 0.0, %v2057
        %v2059 = vpop.f32.mrb[0].mxu0
        %v2060 = vadd.f32 0.0, %v2059
        %v2061 = vpop.f32.mrb[0].mxu0
        %v2062 = vadd.f32 0.0, %v2061
        %v2063 = vpop.f32.mrb[0].mxu0
        %v2064 = vadd.f32 0.0, %v2063
        %2065 = vmatprep.mubr.bf16.mxu0 0
        %2066 = vmatmul.mubr.bf16.gmra.mrb[0].mxu0 %v1997
        %v2067 = vpop.f32.mrb[0].mxu0
        %v2068 = vadd.f32 0.0, %v2067
        %v2069 = vpop.f32.mrb[0].mxu0
        %v2070 = vadd.f32 0.0, %v2069
        %v2071 = vpop.f32.mrb[0].mxu0
        %v2072 = vadd.f32 0.0, %v2071
        %v2073 = vpop.f32.mrb[0].mxu0
        %v2074 = vadd.f32 0.0, %v2073
        %2075 = vmatprep.mubr.bf16.mxu0 0
        %2076 = vmatmul.mubr.bf16.gmra.mrb[0].mxu0 %v2000
        %v2077 = vpop.f32.mrb[0].mxu0
        %v2078 = vadd.f32 0.0, %v2077
        %v2079 = vpop.f32.mrb[0].mxu0
        %v2080 = vadd.f32 0.0, %v2079
        %v2081 = vpop.f32.mrb[0].mxu0
        %v2082 = vadd.f32 0.0, %v2081
        %v2083 = vpop.f32.mrb[0].mxu0
        %v2084 = vadd.f32 0.0, %v2083
        %2085 = vmatprep.mubr.bf16.mxu0 0
        %2086 = vmatmul.mubr.bf16.gmra.mrb[0].mxu0 %v2003
        %v2087 = vpop.f32.mrb[0].mxu0
        %v2088 = vadd.f32 0.0, %v2087
        %v2089 = vpop.f32.mrb[0].mxu0
        %v2090 = vadd.f32 0.0, %v2089
        %v2091 = vpop.f32.mrb[0].mxu0
        %v2092 = vadd.f32 0.0, %v2091
        %v2093 = vpop.f32.mrb[0].mxu0
        %v2094 = vadd.f32 0.0, %v2093
        %2095 = vmatprep.mubr.bf16.mxu0 0
        %2096 = vmatmul.mubr.bf16.gmra.mrb[0].mxu0 %v2006
        %v2097 = vpop.f32.mrb[0].mxu0
        %v2098 = vadd.f32 0.0, %v2097
        %v2099 = vpop.f32.mrb[0].mxu0
        %v2100 = vadd.f32 0.0, %v2099
        %v2101 = vpop.f32.mrb[0].mxu0
        %v2102 = vadd.f32 0.0, %v2101
        %v2103 = vpop.f32.mrb[0].mxu0
        %v2104 = vadd.f32 0.0, %v2103
        %2105 = vmatprep.mubr.bf16.mxu0 0
        %2106 = vmatmul.mubr.bf16.gmra.mrb[0].mxu0 %v2009
        %v2107 = vpop.f32.mrb[0].mxu0
        %v2108 = vadd.f32 0.0, %v2107
        %v2109 = vpop.f32.mrb[0].mxu0
        %v2110 = vadd.f32 0.0, %v2109
        %v2111 = vpop.f32.mrb[0].mxu0
        %v2112 = vadd.f32 0.0, %v2111
        %v2113 = vpop.f32.mrb[0].mxu0
        %v2114 = vadd.f32 0.0, %v2113
        %2115 = vmatprep.mubr.bf16.mxu0 0
        %2116 = vmatmul.mubr.bf16.gmra.mrb[0].mxu0 %v2012
        %v2117 = vpop.f32.mrb[0].mxu0
        %v2118 = vadd.f32 0.0, %v2117
        %v2119 = vpop.f32.mrb[0].mxu0
        %v2120 = vadd.f32 0.0, %v2119
        %v2121 = vpop.f32.mrb[0].mxu0
        %v2122 = vadd.f32 0.0, %v2121
        %v2123 = vpop.f32.mrb[0].mxu0
        %v2124 = vadd.f32 0.0, %v2123
        %2125 = vmatprep.mubr.bf16.mxu0 0
        %2126 = vmatmul.mubr.bf16.gmra.mrb[0].mxu0 %v2015
        %v2127 = vpop.f32.mrb[0].mxu0
        %v2128 = vadd.f32 0.0, %v2127
        %v2129 = vpop.f32.mrb[0].mxu0
        %v2130 = vadd.f32 0.0, %v2129
        %v2131 = vpop.f32.mrb[0].mxu0
        %v2132 = vadd.f32 0.0, %v2131
        %v2133 = vpop.f32.mrb[0].mxu0
        %v2134 = vadd.f32 0.0, %v2133
        %2135 = vdwg.mxu0
        %v2136 = vadd.f32 %v1833, %v2058
        %v2137 = vadd.f32 %v1834, %v2060
        %v2138 = vadd.f32 %v1835, %v2062
        %v2139 = vadd.f32 %v1836, %v2064
        %v2140 = vadd.f32 %v1837, %v2068
        %v2141 = vadd.f32 %v1838, %v2070
        %v2142 = vadd.f32 %v1839, %v2072
        %v2143 = vadd.f32 %v1840, %v2074
        %v2144 = vadd.f32 %v1841, %v2078
        %v2145 = vadd.f32 %v1842, %v2080
        %v2146 = vadd.f32 %v1843, %v2082
        %v2147 = vadd.f32 %v1844, %v2084
        %v2148 = vadd.f32 %v1845, %v2088
        %v2149 = vadd.f32 %v1846, %v2090
        %v2150 = vadd.f32 %v1847, %v2092
        %v2151 = vadd.f32 %v1848, %v2094
        %v2152 = vadd.f32 %v1849, %v2098
        %v2153 = vadd.f32 %v1850, %v2100
        %v2154 = vadd.f32 %v1851, %v2102
        %v2155 = vadd.f32 %v1852, %v2104
        %v2156 = vadd.f32 %v1853, %v2108
        %v2157 = vadd.f32 %v1854, %v2110
        %v2158 = vadd.f32 %v1855, %v2112
        %v2159 = vadd.f32 %v1856, %v2114
        %v2160 = vadd.f32 %v1857, %v2118
        %v2161 = vadd.f32 %v1858, %v2120
        %v2162 = vadd.f32 %v1859, %v2122
        %v2163 = vadd.f32 %v1860, %v2124
        %v2164 = vadd.f32 %v1861, %v2128
        %v2165 = vadd.f32 %v1862, %v2130
        %v2166 = vadd.f32 %v1863, %v2132
        %v2167 = vadd.f32 %v1864, %v2134
        %s2168 = scalar_lea.vmem %s2, 192
        %v2169 = vld [vmem:[%s2168] sm:$0xf]
        %v2170 = vld [vmem:[%s2168 + $0x4] sm:$0xf]
        %v2171 = vld [vmem:[%s2168 + $0x8] sm:$0xf]
        %v2172 = vld [vmem:[%s2168 + $0xc] sm:$0xf]
        %v2173 = vld [vmem:[%s2168 + $0x10] sm:$0xf]
        %v2174 = vld [vmem:[%s2168 + $0x14] sm:$0xf]
        %v2175 = vld [vmem:[%s2168 + $0x18] sm:$0xf]
        %v2176 = vld [vmem:[%s2168 + $0x1c] sm:$0xf]
        %v2177 = vld [vmem:[%s2168 + $0x20] sm:$0xf]
        %v2178 = vld [vmem:[%s2168 + $0x24] sm:$0xf]
        %v2179 = vld [vmem:[%s2168 + $0x28] sm:$0xf]
        %v2180 = vld [vmem:[%s2168 + $0x2c] sm:$0xf]
        %v2181 = vld [vmem:[%s2168 + $0x30] sm:$0xf]
        %v2182 = vld [vmem:[%s2168 + $0x34] sm:$0xf]
        %v2183 = vld [vmem:[%s2168 + $0x38] sm:$0xf]
        %v2184 = vld [vmem:[%s2168 + $0x3c] sm:$0xf]
        %v2185 = vpack.c.bf16 %v1928, %v1926
        %v2186 = vpack.c.bf16 %v1929, %v1927
        %v2187 = vpack.c.bf16 %v1932, %v1930
        %v2188 = vpack.c.bf16 %v1933, %v1931
        %v2205 = vunpack.c.l.b16 %v2169
        %v2206 = vunpack.c.l.b16 %v2170
        %v2207 = vunpack.c.l.b16 %v2171
        %v2208 = vunpack.c.l.b16 %v2172
        %v2209 = vunpack.c.l.b16 %v2173
        %v2210 = vunpack.c.l.b16 %v2174
        %v2211 = vunpack.c.l.b16 %v2175
        %v2212 = vunpack.c.l.b16 %v2176
        %v2213 = vunpack.c.l.b16 %v2177
        %v2214 = vunpack.c.l.b16 %v2178
        %v2215 = vunpack.c.l.b16 %v2179
        %v2216 = vunpack.c.l.b16 %v2180
        %v2217 = vunpack.c.l.b16 %v2181
        %v2218 = vunpack.c.l.b16 %v2182
        %v2219 = vunpack.c.l.b16 %v2183
        %v2220 = vunpack.c.l.b16 %v2184
        %v2221 = vpack.c.b16 %v2206, %v2205
        %v2222 = vpack.c.b16 %v2208, %v2207
        %v2223 = vpack.c.b16 %v2210, %v2209
        %v2224 = vpack.c.b16 %v2212, %v2211
        %v2225 = vpack.c.b16 %v2214, %v2213
        %v2226 = vpack.c.b16 %v2216, %v2215
        %v2227 = vpack.c.b16 %v2218, %v2217
        %v2228 = vpack.c.b16 %v2220, %v2219
        %v2230 = vsel %vm476, %v2221, 0
        %v2233 = vsel %vm476, %v2222, 0
        %v2236 = vsel %vm476, %v2223, 0
        %v2239 = vsel %vm476, %v2224, 0
        %v2242 = vsel %vm476, %v2225, 0
        %v2245 = vsel %vm476, %v2226, 0
        %v2248 = vsel %vm476, %v2227, 0
        %v2251 = vsel %vm476, %v2228, 0
        %2253 = vmatprep.subr.bf16.mxu0 %v2186
        %2254 = vmatpush1.bf16.msra.mxu0 %v2185
        %2255 = vmatprep.subr.bf16.mxu0 %v2188
        %2256 = vmatpush1.bf16.msra.mxu0 %v2187
        %2257 = vmatprep.subr.bf16.mxu0 0
        %2258 = vmatpush1.bf16.msra.mxu0 0
        %2259 = vmatprep.subr.bf16.mxu0 0
        %2260 = vmatpush1.bf16.msra.mxu0 0
        %2261 = vmatprep.subr.bf16.mxu0 0
        %2262 = vmatpush1.bf16.msra.mxu0 0
        %2263 = vmatprep.subr.bf16.mxu0 0
        %2264 = vmatpush1.bf16.msra.mxu0 0
        %2265 = vmatprep.subr.bf16.mxu0 0
        %2266 = vmatpush1.bf16.msra.mxu0 0
        %2267 = vmatprep.subr.bf16.mxu0 0
        %2268 = vmatpush1.bf16.msra.mxu0 0
        %2269 = vmatprep.subr.bf16.mxu0 0
        %2270 = vmatpush1.bf16.msra.mxu0 0
        %2271 = vmatprep.subr.bf16.mxu0 0
        %2272 = vmatpush1.bf16.msra.mxu0 0
        %2273 = vmatprep.subr.bf16.mxu0 0
        %2274 = vmatpush1.bf16.msra.mxu0 0
        %2275 = vmatprep.subr.bf16.mxu0 0
        %2276 = vmatpush1.bf16.msra.mxu0 0
        %2277 = vmatprep.subr.bf16.mxu0 0
        %2278 = vmatpush1.bf16.msra.mxu0 0
        %2279 = vmatprep.subr.bf16.mxu0 0
        %2280 = vmatpush1.bf16.msra.mxu0 0
        %2281 = vmatprep.subr.bf16.mxu0 0
        %2282 = vmatpush1.bf16.msra.mxu0 0
        %2283 = vmatprep.subr.bf16.mxu0 0
        %2284 = vmatpush1.bf16.msra.mxu0 0
        %2285 = vmatprep.mubr.bf16.mxu0 0
        %2286 = vmatmul.mubr.bf16.gmra.mrb[0].mxu0 %v2230
        %v2287 = vpop.f32.mrb[0].mxu0
        %v2288 = vadd.f32 0.0, %v2287
        %v2289 = vpop.f32.mrb[0].mxu0
        %v2290 = vadd.f32 0.0, %v2289
        %v2291 = vpop.f32.mrb[0].mxu0
        %v2292 = vadd.f32 0.0, %v2291
        %v2293 = vpop.f32.mrb[0].mxu0
        %v2294 = vadd.f32 0.0, %v2293
        %2295 = vmatprep.mubr.bf16.mxu0 0
        %2296 = vmatmul.mubr.bf16.gmra.mrb[0].mxu0 %v2233
        %v2297 = vpop.f32.mrb[0].mxu0
        %v2298 = vadd.f32 0.0, %v2297
        %v2299 = vpop.f32.mrb[0].mxu0
        %v2300 = vadd.f32 0.0, %v2299
        %v2301 = vpop.f32.mrb[0].mxu0
        %v2302 = vadd.f32 0.0, %v2301
        %v2303 = vpop.f32.mrb[0].mxu0
        %v2304 = vadd.f32 0.0, %v2303
        %2305 = vmatprep.mubr.bf16.mxu0 0
        %2306 = vmatmul.mubr.bf16.gmra.mrb[0].mxu0 %v2236
        %v2307 = vpop.f32.mrb[0].mxu0
        %v2308 = vadd.f32 0.0, %v2307
        %v2309 = vpop.f32.mrb[0].mxu0
        %v2310 = vadd.f32 0.0, %v2309
        %v2311 = vpop.f32.mrb[0].mxu0
        %v2312 = vadd.f32 0.0, %v2311
        %v2313 = vpop.f32.mrb[0].mxu0
        %v2314 = vadd.f32 0.0, %v2313
        %2315 = vmatprep.mubr.bf16.mxu0 0
        %2316 = vmatmul.mubr.bf16.gmra.mrb[0].mxu0 %v2239
        %v2317 = vpop.f32.mrb[0].mxu0
        %v2318 = vadd.f32 0.0, %v2317
        %v2319 = vpop.f32.mrb[0].mxu0
        %v2320 = vadd.f32 0.0, %v2319
        %v2321 = vpop.f32.mrb[0].mxu0
        %v2322 = vadd.f32 0.0, %v2321
        %v2323 = vpop.f32.mrb[0].mxu0
        %v2324 = vadd.f32 0.0, %v2323
        %2325 = vmatprep.mubr.bf16.mxu0 0
        %2326 = vmatmul.mubr.bf16.gmra.mrb[0].mxu0 %v2242
        %v2327 = vpop.f32.mrb[0].mxu0
        %v2328 = vadd.f32 0.0, %v2327
        %v2329 = vpop.f32.mrb[0].mxu0
        %v2330 = vadd.f32 0.0, %v2329
        %v2331 = vpop.f32.mrb[0].mxu0
        %v2332 = vadd.f32 0.0, %v2331
        %v2333 = vpop.f32.mrb[0].mxu0
        %v2334 = vadd.f32 0.0, %v2333
        %2335 = vmatprep.mubr.bf16.mxu0 0
        %2336 = vmatmul.mubr.bf16.gmra.mrb[0].mxu0 %v2245
        %v2337 = vpop.f32.mrb[0].mxu0
        %v2338 = vadd.f32 0.0, %v2337
        %v2339 = vpop.f32.mrb[0].mxu0
        %v2340 = vadd.f32 0.0, %v2339
        %v2341 = vpop.f32.mrb[0].mxu0
        %v2342 = vadd.f32 0.0, %v2341
        %v2343 = vpop.f32.mrb[0].mxu0
        %v2344 = vadd.f32 0.0, %v2343
        %2345 = vmatprep.mubr.bf16.mxu0 0
        %2346 = vmatmul.mubr.bf16.gmra.mrb[0].mxu0 %v2248
        %v2347 = vpop.f32.mrb[0].mxu0
        %v2348 = vadd.f32 0.0, %v2347
        %v2349 = vpop.f32.mrb[0].mxu0
        %v2350 = vadd.f32 0.0, %v2349
        %v2351 = vpop.f32.mrb[0].mxu0
        %v2352 = vadd.f32 0.0, %v2351
        %v2353 = vpop.f32.mrb[0].mxu0
        %v2354 = vadd.f32 0.0, %v2353
        %2355 = vmatprep.mubr.bf16.mxu0 0
        %2356 = vmatmul.mubr.bf16.gmra.mrb[0].mxu0 %v2251
        %v2357 = vpop.f32.mrb[0].mxu0
        %v2358 = vadd.f32 0.0, %v2357
        %v2359 = vpop.f32.mrb[0].mxu0
        %v2360 = vadd.f32 0.0, %v2359
        %v2361 = vpop.f32.mrb[0].mxu0
        %v2362 = vadd.f32 0.0, %v2361
        %v2363 = vpop.f32.mrb[0].mxu0
        %v2364 = vadd.f32 0.0, %v2363
        %2365 = vdwg.mxu0
        %v2366 = vadd.f32 %v2136, %v2288
        %v2367 = vadd.f32 %v2137, %v2290
        %v2368 = vadd.f32 %v2138, %v2292
        %v2369 = vadd.f32 %v2139, %v2294
        %v2370 = vadd.f32 %v2140, %v2298
        %v2371 = vadd.f32 %v2141, %v2300
        %v2372 = vadd.f32 %v2142, %v2302
        %v2373 = vadd.f32 %v2143, %v2304
        %v2374 = vadd.f32 %v2144, %v2308
        %v2375 = vadd.f32 %v2145, %v2310
        %v2376 = vadd.f32 %v2146, %v2312
        %v2377 = vadd.f32 %v2147, %v2314
        %v2378 = vadd.f32 %v2148, %v2318
        %v2379 = vadd.f32 %v2149, %v2320
        %v2380 = vadd.f32 %v2150, %v2322
        %v2381 = vadd.f32 %v2151, %v2324
        %v2382 = vadd.f32 %v2152, %v2328
        %v2383 = vadd.f32 %v2153, %v2330
        %v2384 = vadd.f32 %v2154, %v2332
        %v2385 = vadd.f32 %v2155, %v2334
        %v2386 = vadd.f32 %v2156, %v2338
        %v2387 = vadd.f32 %v2157, %v2340
        %v2388 = vadd.f32 %v2158, %v2342
        %v2389 = vadd.f32 %v2159, %v2344
        %v2390 = vadd.f32 %v2160, %v2348
        %v2391 = vadd.f32 %v2161, %v2350
        %v2392 = vadd.f32 %v2162, %v2352
        %v2393 = vadd.f32 %v2163, %v2354
        %v2394 = vadd.f32 %v2164, %v2358
        %v2395 = vadd.f32 %v2165, %v2360
        %v2396 = vadd.f32 %v2166, %v2362
        %v2397 = vadd.f32 %v2167, %v2364
        %s2398 = scalar_lea.vmem %s1, 256
        %v2399 = vld [vmem:[%s2398] sm:$0xf]
        %v2400 = vld [vmem:[%s2398 + $0x4] sm:$0xf]
        %v2401 = vld [vmem:[%s2398 + $0x8] sm:$0xf]
        %v2402 = vld [vmem:[%s2398 + $0xc] sm:$0xf]
        %v2403 = vld [vmem:[%s2398 + $0x10] sm:$0xf]
        %v2404 = vld [vmem:[%s2398 + $0x14] sm:$0xf]
        %v2405 = vld [vmem:[%s2398 + $0x18] sm:$0xf]
        %v2406 = vld [vmem:[%s2398 + $0x1c] sm:$0xf]
        %v2407 = vld [vmem:[%s2398 + $0x20] sm:$0xf]
        %v2408 = vld [vmem:[%s2398 + $0x24] sm:$0xf]
        %v2409 = vld [vmem:[%s2398 + $0x28] sm:$0xf]
        %v2410 = vld [vmem:[%s2398 + $0x2c] sm:$0xf]
        %v2411 = vld [vmem:[%s2398 + $0x30] sm:$0xf]
        %v2412 = vld [vmem:[%s2398 + $0x34] sm:$0xf]
        %v2413 = vld [vmem:[%s2398 + $0x38] sm:$0xf]
        %v2414 = vld [vmem:[%s2398 + $0x3c] sm:$0xf]
        %v2431 = vunpack.c.l.b16 %v2399
        %v2432 = vunpack.c.l.b16 %v2400
        %v2433 = vunpack.c.l.b16 %v2401
        %v2434 = vunpack.c.l.b16 %v2402
        %v2435 = vunpack.c.l.b16 %v2403
        %v2436 = vunpack.c.l.b16 %v2404
        %v2437 = vunpack.c.l.b16 %v2405
        %v2438 = vunpack.c.l.b16 %v2406
        %v2439 = vunpack.c.l.b16 %v2407
        %v2440 = vunpack.c.l.b16 %v2408
        %v2441 = vunpack.c.l.b16 %v2409
        %v2442 = vunpack.c.l.b16 %v2410
        %v2443 = vunpack.c.l.b16 %v2411
        %v2444 = vunpack.c.l.b16 %v2412
        %v2445 = vunpack.c.l.b16 %v2413
        %v2446 = vunpack.c.l.b16 %v2414
        %v2447 = vpack.c.b16 %v2432, %v2431
        %v2448 = vpack.c.b16 %v2434, %v2433
        %v2449 = vpack.c.b16 %v2436, %v2435
        %v2450 = vpack.c.b16 %v2438, %v2437
        %v2451 = vpack.c.b16 %v2440, %v2439
        %v2452 = vpack.c.b16 %v2442, %v2441
        %v2453 = vpack.c.b16 %v2444, %v2443
        %v2454 = vpack.c.b16 %v2446, %v2445
        %v2457 = vunpack.c.l.s4 1983009808
        %v2458 = vunpack.c.0.s8 %v2457
        %v2459 = vlaneseq
        %v2460 = vshrl.u32 %v2459, 7
        %v2461 = vsub.s32 %v2458, %v2460
        %v2462 = vrot.slane %v310, %v2461
        %v2463 = vcombine.high %v2462, %v2462
        %v2465 = vsel %vm654, %v2447, 0
        %v2468 = vsel %vm654, %v2448, 0
        %v2471 = vsel %vm654, %v2449, 0
        %v2474 = vsel %vm654, %v2450, 0
        %v2477 = vsel %vm654, %v2451, 0
        %v2480 = vsel %vm654, %v2452, 0
        %v2483 = vsel %vm654, %v2453, 0
        %v2486 = vsel %vm654, %v2454, 0
        %v2489 = vsel %vm679, %v2462, 0
        %v2492 = vsel %vm679, %v2463, 0
        %2494 = vmatprep.subr.bf16.mxu0 %v2492
        %2495 = vmatpush1.bf16.msra.mxu0 %v2489
        %2496 = vmatprep.subr.bf16.mxu0 0
        %2497 = vmatpush1.bf16.msra.mxu0 0
        %2498 = vmatprep.subr.bf16.mxu0 0
        %2499 = vmatpush1.bf16.msra.mxu0 0
        %2500 = vmatprep.subr.bf16.mxu0 0
        %2501 = vmatpush1.bf16.msra.mxu0 0
        %2502 = vmatprep.subr.bf16.mxu0 0
        %2503 = vmatpush1.bf16.msra.mxu0 0
        %2504 = vmatprep.subr.bf16.mxu0 0
        %2505 = vmatpush1.bf16.msra.mxu0 0
        %2506 = vmatprep.subr.bf16.mxu0 0
        %2507 = vmatpush1.bf16.msra.mxu0 0
        %2508 = vmatprep.subr.bf16.mxu0 0
        %2509 = vmatpush1.bf16.msra.mxu0 0
        %2510 = vmatprep.subr.bf16.mxu0 0
        %2511 = vmatpush1.bf16.msra.mxu0 0
        %2512 = vmatprep.subr.bf16.mxu0 0
        %2513 = vmatpush1.bf16.msra.mxu0 0
        %2514 = vmatprep.subr.bf16.mxu0 0
        %2515 = vmatpush1.bf16.msra.mxu0 0
        %2516 = vmatprep.subr.bf16.mxu0 0
        %2517 = vmatpush1.bf16.msra.mxu0 0
        %2518 = vmatprep.subr.bf16.mxu0 0
        %2519 = vmatpush1.bf16.msra.mxu0 0
        %2520 = vmatprep.subr.bf16.mxu0 0
        %2521 = vmatpush1.bf16.msra.mxu0 0
        %2522 = vmatprep.subr.bf16.mxu0 0
        %2523 = vmatpush1.bf16.msra.mxu0 0
        %2524 = vmatprep.subr.bf16.mxu0 0
        %2525 = vmatpush1.bf16.msra.mxu0 0
        %2526 = vmatprep.mubr.bf16.mxu0 0
        %2527 = vmatmul.mubr.bf16.gmra.mrb[0].mxu0 %v2465
        %v2528 = vpop.f32.mrb[0].mxu0
        %v2529 = vadd.f32 0.0, %v2528
        %v2530 = vpop.f32.mrb[0].mxu0
        %v2531 = vadd.f32 0.0, %v2530
        %v2532 = vpop.f32.mrb[0].mxu0
        %v2533 = vadd.f32 0.0, %v2532
        %v2534 = vpop.f32.mrb[0].mxu0
        %v2535 = vadd.f32 0.0, %v2534
        %2536 = vmatprep.mubr.bf16.mxu0 0
        %2537 = vmatmul.mubr.bf16.gmra.mrb[0].mxu0 %v2468
        %v2538 = vpop.f32.mrb[0].mxu0
        %v2539 = vadd.f32 0.0, %v2538
        %v2540 = vpop.f32.mrb[0].mxu0
        %v2541 = vadd.f32 0.0, %v2540
        %v2542 = vpop.f32.mrb[0].mxu0
        %v2543 = vadd.f32 0.0, %v2542
        %v2544 = vpop.f32.mrb[0].mxu0
        %v2545 = vadd.f32 0.0, %v2544
        %2546 = vmatprep.mubr.bf16.mxu0 0
        %2547 = vmatmul.mubr.bf16.gmra.mrb[0].mxu0 %v2471
        %v2548 = vpop.f32.mrb[0].mxu0
        %v2549 = vadd.f32 0.0, %v2548
        %v2550 = vpop.f32.mrb[0].mxu0
        %v2551 = vadd.f32 0.0, %v2550
        %v2552 = vpop.f32.mrb[0].mxu0
        %v2553 = vadd.f32 0.0, %v2552
        %v2554 = vpop.f32.mrb[0].mxu0
        %v2555 = vadd.f32 0.0, %v2554
        %2556 = vmatprep.mubr.bf16.mxu0 0
        %2557 = vmatmul.mubr.bf16.gmra.mrb[0].mxu0 %v2474
        %v2558 = vpop.f32.mrb[0].mxu0
        %v2559 = vadd.f32 0.0, %v2558
        %v2560 = vpop.f32.mrb[0].mxu0
        %v2561 = vadd.f32 0.0, %v2560
        %v2562 = vpop.f32.mrb[0].mxu0
        %v2563 = vadd.f32 0.0, %v2562
        %v2564 = vpop.f32.mrb[0].mxu0
        %v2565 = vadd.f32 0.0, %v2564
        %2566 = vmatprep.mubr.bf16.mxu0 0
        %2567 = vmatmul.mubr.bf16.gmra.mrb[0].mxu0 %v2477
        %v2568 = vpop.f32.mrb[0].mxu0
        %v2569 = vadd.f32 0.0, %v2568
        %v2570 = vpop.f32.mrb[0].mxu0
        %v2571 = vadd.f32 0.0, %v2570
        %v2572 = vpop.f32.mrb[0].mxu0
        %v2573 = vadd.f32 0.0, %v2572
        %v2574 = vpop.f32.mrb[0].mxu0
        %v2575 = vadd.f32 0.0, %v2574
        %2576 = vmatprep.mubr.bf16.mxu0 0
        %2577 = vmatmul.mubr.bf16.gmra.mrb[0].mxu0 %v2480
        %v2578 = vpop.f32.mrb[0].mxu0
        %v2579 = vadd.f32 0.0, %v2578
        %v2580 = vpop.f32.mrb[0].mxu0
        %v2581 = vadd.f32 0.0, %v2580
        %v2582 = vpop.f32.mrb[0].mxu0
        %v2583 = vadd.f32 0.0, %v2582
        %v2584 = vpop.f32.mrb[0].mxu0
        %v2585 = vadd.f32 0.0, %v2584
        %2586 = vmatprep.mubr.bf16.mxu0 0
        %2587 = vmatmul.mubr.bf16.gmra.mrb[0].mxu0 %v2483
        %v2588 = vpop.f32.mrb[0].mxu0
        %v2589 = vadd.f32 0.0, %v2588
        %v2590 = vpop.f32.mrb[0].mxu0
        %v2591 = vadd.f32 0.0, %v2590
        %v2592 = vpop.f32.mrb[0].mxu0
        %v2593 = vadd.f32 0.0, %v2592
        %v2594 = vpop.f32.mrb[0].mxu0
        %v2595 = vadd.f32 0.0, %v2594
        %2596 = vmatprep.mubr.bf16.mxu0 0
        %2597 = vmatmul.mubr.bf16.gmra.mrb[0].mxu0 %v2486
        %v2598 = vpop.f32.mrb[0].mxu0
        %v2599 = vadd.f32 0.0, %v2598
        %v2600 = vpop.f32.mrb[0].mxu0
        %v2601 = vadd.f32 0.0, %v2600
        %v2602 = vpop.f32.mrb[0].mxu0
        %v2603 = vadd.f32 0.0, %v2602
        %v2604 = vpop.f32.mrb[0].mxu0
        %v2605 = vadd.f32 0.0, %v2604
        %2606 = vdwg.mxu0
        %v2607 = vadd.f32 %v2366, %v2529
        %v2608 = vadd.f32 %v2367, %v2531
        %v2609 = vadd.f32 %v2368, %v2533
        %v2610 = vadd.f32 %v2369, %v2535
        %v2611 = vadd.f32 %v2370, %v2539
        %v2612 = vadd.f32 %v2371, %v2541
        %v2613 = vadd.f32 %v2372, %v2543
        %v2614 = vadd.f32 %v2373, %v2545
        %v2615 = vadd.f32 %v2374, %v2549
        %v2616 = vadd.f32 %v2375, %v2551
        %v2617 = vadd.f32 %v2376, %v2553
        %v2618 = vadd.f32 %v2377, %v2555
        %v2619 = vadd.f32 %v2378, %v2559
        %v2620 = vadd.f32 %v2379, %v2561
        %v2621 = vadd.f32 %v2380, %v2563
        %v2622 = vadd.f32 %v2381, %v2565
        %v2623 = vadd.f32 %v2382, %v2569
        %v2624 = vadd.f32 %v2383, %v2571
        %v2625 = vadd.f32 %v2384, %v2573
        %v2626 = vadd.f32 %v2385, %v2575
        %v2627 = vadd.f32 %v2386, %v2579
        %v2628 = vadd.f32 %v2387, %v2581
        %v2629 = vadd.f32 %v2388, %v2583
        %v2630 = vadd.f32 %v2389, %v2585
        %v2631 = vadd.f32 %v2390, %v2589
        %v2632 = vadd.f32 %v2391, %v2591
        %v2633 = vadd.f32 %v2392, %v2593
        %v2634 = vadd.f32 %v2393, %v2595
        %v2635 = vadd.f32 %v2394, %v2599
        %v2636 = vadd.f32 %v2395, %v2601
        %v2637 = vadd.f32 %v2396, %v2603
        %v2638 = vadd.f32 %v2397, %v2605
        %s2639 = scalar_lea.vmem %s2, 256
        %v2640 = vld [vmem:[%s2639] sm:$0xf]
        %v2641 = vld [vmem:[%s2639 + $0x4] sm:$0xf]
        %v2642 = vld [vmem:[%s2639 + $0x8] sm:$0xf]
        %v2643 = vld [vmem:[%s2639 + $0xc] sm:$0xf]
        %v2644 = vld [vmem:[%s2639 + $0x10] sm:$0xf]
        %v2645 = vld [vmem:[%s2639 + $0x14] sm:$0xf]
        %v2646 = vld [vmem:[%s2639 + $0x18] sm:$0xf]
        %v2647 = vld [vmem:[%s2639 + $0x1c] sm:$0xf]
        %v2648 = vld [vmem:[%s2639 + $0x20] sm:$0xf]
        %v2649 = vld [vmem:[%s2639 + $0x24] sm:$0xf]
        %v2650 = vld [vmem:[%s2639 + $0x28] sm:$0xf]
        %v2651 = vld [vmem:[%s2639 + $0x2c] sm:$0xf]
        %v2652 = vld [vmem:[%s2639 + $0x30] sm:$0xf]
        %v2653 = vld [vmem:[%s2639 + $0x34] sm:$0xf]
        %v2654 = vld [vmem:[%s2639 + $0x38] sm:$0xf]
        %v2655 = vld [vmem:[%s2639 + $0x3c] sm:$0xf]
        %v2656 = vpack.c.bf16 %v314, %v312
        %v2657 = vpack.c.bf16 %v315, %v313
        %v2658 = vpack.c.bf16 %v318, %v316
        %v2659 = vpack.c.bf16 %v319, %v317
        %v2676 = vunpack.c.l.b16 %v2640
        %v2677 = vunpack.c.l.b16 %v2641
        %v2678 = vunpack.c.l.b16 %v2642
        %v2679 = vunpack.c.l.b16 %v2643
        %v2680 = vunpack.c.l.b16 %v2644
        %v2681 = vunpack.c.l.b16 %v2645
        %v2682 = vunpack.c.l.b16 %v2646
        %v2683 = vunpack.c.l.b16 %v2647
        %v2684 = vunpack.c.l.b16 %v2648
        %v2685 = vunpack.c.l.b16 %v2649
        %v2686 = vunpack.c.l.b16 %v2650
        %v2687 = vunpack.c.l.b16 %v2651
        %v2688 = vunpack.c.l.b16 %v2652
        %v2689 = vunpack.c.l.b16 %v2653
        %v2690 = vunpack.c.l.b16 %v2654
        %v2691 = vunpack.c.l.b16 %v2655
        %v2692 = vpack.c.b16 %v2677, %v2676
        %v2693 = vpack.c.b16 %v2679, %v2678
        %v2694 = vpack.c.b16 %v2681, %v2680
        %v2695 = vpack.c.b16 %v2683, %v2682
        %v2696 = vpack.c.b16 %v2685, %v2684
        %v2697 = vpack.c.b16 %v2687, %v2686
        %v2698 = vpack.c.b16 %v2689, %v2688
        %v2699 = vpack.c.b16 %v2691, %v2690
        %v2701 = vsel %vm476, %v2692, 0
        %v2704 = vsel %vm476, %v2693, 0
        %v2707 = vsel %vm476, %v2694, 0
        %v2710 = vsel %vm476, %v2695, 0
        %v2713 = vsel %vm476, %v2696, 0
        %v2716 = vsel %vm476, %v2697, 0
        %v2719 = vsel %vm476, %v2698, 0
        %v2722 = vsel %vm476, %v2699, 0
        %2724 = vmatprep.subr.bf16.mxu0 %v2657
        %2725 = vmatpush1.bf16.msra.mxu0 %v2656
        %2726 = vmatprep.subr.bf16.mxu0 %v2659
        %2727 = vmatpush1.bf16.msra.mxu0 %v2658
        %2728 = vmatprep.subr.bf16.mxu0 0
        %2729 = vmatpush1.bf16.msra.mxu0 0
        %2730 = vmatprep.subr.bf16.mxu0 0
        %2731 = vmatpush1.bf16.msra.mxu0 0
        %2732 = vmatprep.subr.bf16.mxu0 0
        %2733 = vmatpush1.bf16.msra.mxu0 0
        %2734 = vmatprep.subr.bf16.mxu0 0
        %2735 = vmatpush1.bf16.msra.mxu0 0
        %2736 = vmatprep.subr.bf16.mxu0 0
        %2737 = vmatpush1.bf16.msra.mxu0 0
        %2738 = vmatprep.subr.bf16.mxu0 0
        %2739 = vmatpush1.bf16.msra.mxu0 0
        %2740 = vmatprep.subr.bf16.mxu0 0
        %2741 = vmatpush1.bf16.msra.mxu0 0
        %2742 = vmatprep.subr.bf16.mxu0 0
        %2743 = vmatpush1.bf16.msra.mxu0 0
        %2744 = vmatprep.subr.bf16.mxu0 0
        %2745 = vmatpush1.bf16.msra.mxu0 0
        %2746 = vmatprep.subr.bf16.mxu0 0
        %2747 = vmatpush1.bf16.msra.mxu0 0
        %2748 = vmatprep.subr.bf16.mxu0 0
        %2749 = vmatpush1.bf16.msra.mxu0 0
        %2750 = vmatprep.subr.bf16.mxu0 0
        %2751 = vmatpush1.bf16.msra.mxu0 0
        %2752 = vmatprep.subr.bf16.mxu0 0
        %2753 = vmatpush1.bf16.msra.mxu0 0
        %2754 = vmatprep.subr.bf16.mxu0 0
        %2755 = vmatpush1.bf16.msra.mxu0 0
        %2756 = vmatprep.mubr.bf16.mxu0 0
        %2757 = vmatmul.mubr.bf16.gmra.mrb[0].mxu0 %v2701
        %v2758 = vpop.f32.mrb[0].mxu0
        %v2759 = vadd.f32 0.0, %v2758
        %v2760 = vpop.f32.mrb[0].mxu0
        %v2761 = vadd.f32 0.0, %v2760
        %v2762 = vpop.f32.mrb[0].mxu0
        %v2763 = vadd.f32 0.0, %v2762
        %v2764 = vpop.f32.mrb[0].mxu0
        %v2765 = vadd.f32 0.0, %v2764
        %2766 = vmatprep.mubr.bf16.mxu0 0
        %2767 = vmatmul.mubr.bf16.gmra.mrb[0].mxu0 %v2704
        %v2768 = vpop.f32.mrb[0].mxu0
        %v2769 = vadd.f32 0.0, %v2768
        %v2770 = vpop.f32.mrb[0].mxu0
        %v2771 = vadd.f32 0.0, %v2770
        %v2772 = vpop.f32.mrb[0].mxu0
        %v2773 = vadd.f32 0.0, %v2772
        %v2774 = vpop.f32.mrb[0].mxu0
        %v2775 = vadd.f32 0.0, %v2774
        %2776 = vmatprep.mubr.bf16.mxu0 0
        %2777 = vmatmul.mubr.bf16.gmra.mrb[0].mxu0 %v2707
        %v2778 = vpop.f32.mrb[0].mxu0
        %v2779 = vadd.f32 0.0, %v2778
        %v2780 = vpop.f32.mrb[0].mxu0
        %v2781 = vadd.f32 0.0, %v2780
        %v2782 = vpop.f32.mrb[0].mxu0
        %v2783 = vadd.f32 0.0, %v2782
        %v2784 = vpop.f32.mrb[0].mxu0
        %v2785 = vadd.f32 0.0, %v2784
        %2786 = vmatprep.mubr.bf16.mxu0 0
        %2787 = vmatmul.mubr.bf16.gmra.mrb[0].mxu0 %v2710
        %v2788 = vpop.f32.mrb[0].mxu0
        %v2789 = vadd.f32 0.0, %v2788
        %v2790 = vpop.f32.mrb[0].mxu0
        %v2791 = vadd.f32 0.0, %v2790
        %v2792 = vpop.f32.mrb[0].mxu0
        %v2793 = vadd.f32 0.0, %v2792
        %v2794 = vpop.f32.mrb[0].mxu0
        %v2795 = vadd.f32 0.0, %v2794
        %2796 = vmatprep.mubr.bf16.mxu0 0
        %2797 = vmatmul.mubr.bf16.gmra.mrb[0].mxu0 %v2713
        %v2798 = vpop.f32.mrb[0].mxu0
        %v2799 = vadd.f32 0.0, %v2798
        %v2800 = vpop.f32.mrb[0].mxu0
        %v2801 = vadd.f32 0.0, %v2800
        %v2802 = vpop.f32.mrb[0].mxu0
        %v2803 = vadd.f32 0.0, %v2802
        %v2804 = vpop.f32.mrb[0].mxu0
        %v2805 = vadd.f32 0.0, %v2804
        %2806 = vmatprep.mubr.bf16.mxu0 0
        %2807 = vmatmul.mubr.bf16.gmra.mrb[0].mxu0 %v2716
        %v2808 = vpop.f32.mrb[0].mxu0
        %v2809 = vadd.f32 0.0, %v2808
        %v2810 = vpop.f32.mrb[0].mxu0
        %v2811 = vadd.f32 0.0, %v2810
        %v2812 = vpop.f32.mrb[0].mxu0
        %v2813 = vadd.f32 0.0, %v2812
        %v2814 = vpop.f32.mrb[0].mxu0
        %v2815 = vadd.f32 0.0, %v2814
        %2816 = vmatprep.mubr.bf16.mxu0 0
        %2817 = vmatmul.mubr.bf16.gmra.mrb[0].mxu0 %v2719
        %v2818 = vpop.f32.mrb[0].mxu0
        %v2819 = vadd.f32 0.0, %v2818
        %v2820 = vpop.f32.mrb[0].mxu0
        %v2821 = vadd.f32 0.0, %v2820
        %v2822 = vpop.f32.mrb[0].mxu0
        %v2823 = vadd.f32 0.0, %v2822
        %v2824 = vpop.f32.mrb[0].mxu0
        %v2825 = vadd.f32 0.0, %v2824
        %2826 = vmatprep.mubr.bf16.mxu0 0
        %2827 = vmatmul.mubr.bf16.gmra.mrb[0].mxu0 %v2722
        %v2828 = vpop.f32.mrb[0].mxu0
        %v2829 = vadd.f32 0.0, %v2828
        %v2830 = vpop.f32.mrb[0].mxu0
        %v2831 = vadd.f32 0.0, %v2830
        %v2832 = vpop.f32.mrb[0].mxu0
        %v2833 = vadd.f32 0.0, %v2832
        %v2834 = vpop.f32.mrb[0].mxu0
        %v2835 = vadd.f32 0.0, %v2834
        %2836 = vdwg.mxu0
        %v2837 = vadd.f32 %v2607, %v2759
        %v2838 = vadd.f32 %v2608, %v2761
        %v2839 = vadd.f32 %v2609, %v2763
        %v2840 = vadd.f32 %v2610, %v2765
        %v2841 = vadd.f32 %v2611, %v2769
        %v2842 = vadd.f32 %v2612, %v2771
        %v2843 = vadd.f32 %v2613, %v2773
        %v2844 = vadd.f32 %v2614, %v2775
        %v2845 = vadd.f32 %v2615, %v2779
        %v2846 = vadd.f32 %v2616, %v2781
        %v2847 = vadd.f32 %v2617, %v2783
        %v2848 = vadd.f32 %v2618, %v2785
        %v2849 = vadd.f32 %v2619, %v2789
        %v2850 = vadd.f32 %v2620, %v2791
        %v2851 = vadd.f32 %v2621, %v2793
        %v2852 = vadd.f32 %v2622, %v2795
        %v2853 = vadd.f32 %v2623, %v2799
        %v2854 = vadd.f32 %v2624, %v2801
        %v2855 = vadd.f32 %v2625, %v2803
        %v2856 = vadd.f32 %v2626, %v2805
        %v2857 = vadd.f32 %v2627, %v2809
        %v2858 = vadd.f32 %v2628, %v2811
        %v2859 = vadd.f32 %v2629, %v2813
        %v2860 = vadd.f32 %v2630, %v2815
        %v2861 = vadd.f32 %v2631, %v2819
        %v2862 = vadd.f32 %v2632, %v2821
        %v2863 = vadd.f32 %v2633, %v2823
        %v2864 = vadd.f32 %v2634, %v2825
        %v2865 = vadd.f32 %v2635, %v2829
        %v2866 = vadd.f32 %v2636, %v2831
        %v2867 = vadd.f32 %v2637, %v2833
        %v2868 = vadd.f32 %v2638, %v2835
        %2869 = vrot.lane.b32.xlu0 %v311, 127
        %v2870 = vpop.permute.xlu0 %2869
        %2871 = vrot.lane.b32.xlu0 %v321, 127
        %v2872 = vpop.permute.xlu0 %2871
        %vm2873 = vcmask 1039360
        %v2874 = vsel %vm2873, %v2870, %v2872
        %v2878 = vsel %vm2873, %v2872, %v2870
        %2879 = vrot.lane.b32.xlu0 %v312, 127
        %v2880 = vpop.permute.xlu0 %2879
        %2881 = vrot.lane.b32.xlu0 %v313, 127
        %v2882 = vpop.permute.xlu0 %2881
        %2883 = vrot.lane.b32.xlu0 %v314, 127
        %v2884 = vpop.permute.xlu0 %2883
        %2885 = vrot.lane.b32.xlu0 %v315, 127
        %v2886 = vpop.permute.xlu0 %2885
        %2887 = vrot.lane.b32.xlu0 %v316, 127
        %v2888 = vpop.permute.xlu0 %2887
        %2889 = vrot.lane.b32.xlu0 %v317, 127
        %v2890 = vpop.permute.xlu0 %2889
        %2891 = vrot.lane.b32.xlu0 %v318, 127
        %v2892 = vpop.permute.xlu0 %2891
        %2893 = vrot.lane.b32.xlu0 %v319, 127
        %v2894 = vpop.permute.xlu0 %2893
        %v2895 = vsel %vm2873, %v2880, %v2882
        %v2896 = vsel %vm2873, %v2884, %v2886
        %v2897 = vsel %vm2873, %v2888, %v2890
        %v2898 = vsel %vm2873, %v2892, %v2894
        %v2911 = vsel %vm2873, %v2882, %v2880
        %v2912 = vsel %vm2873, %v2886, %v2884
        %v2913 = vsel %vm2873, %v2890, %v2888
        %v2914 = vsel %vm2873, %v2894, %v2892
        %s2915 = scalar_lea.vmem %s4, 10
        %v2916 = vld [vmem:[%s2915] sm:$0x3]
        %v2918 = vlaneseq
        %v2919 = vshrl.u32 %v2918, 7
        %v2920 = vsub.s32 0, %v2919
        %v2921 = vrot.slane %v2916, %v2920
        %v2922 = vlaneseq
        %v2923 = vshrl.u32 %v2922, 7
        %v2924 = vsub.s32 1, %v2923
        %v2925 = vrot.slane %v2916, %v2924
        %v2928 = vmul.f32 %v2874, %v2921
        %v2929 = vmul.f32 %v2878, %v2925
        %v2930 = vmul.f32 %v2895, %v2921
        %v2931 = vmul.f32 %v2911, %v2925
        %v2932 = vmul.f32 %v2896, %v2921
        %v2933 = vmul.f32 %v2912, %v2925
        %v2934 = vmul.f32 %v2897, %v2921
        %v2935 = vmul.f32 %v2913, %v2925
        %v2936 = vmul.f32 %v2898, %v2921
        %v2937 = vmul.f32 %v2914, %v2925
        %s2938 = scalar_lea.vmem %s1, 320
        %v2939 = vld [vmem:[%s2938] sm:$0xf]
        %v2940 = vld [vmem:[%s2938 + $0x4] sm:$0xf]
        %v2941 = vld [vmem:[%s2938 + $0x8] sm:$0xf]
        %v2942 = vld [vmem:[%s2938 + $0xc] sm:$0xf]
        %v2943 = vld [vmem:[%s2938 + $0x10] sm:$0xf]
        %v2944 = vld [vmem:[%s2938 + $0x14] sm:$0xf]
        %v2945 = vld [vmem:[%s2938 + $0x18] sm:$0xf]
        %v2946 = vld [vmem:[%s2938 + $0x1c] sm:$0xf]
        %v2947 = vld [vmem:[%s2938 + $0x20] sm:$0xf]
        %v2948 = vld [vmem:[%s2938 + $0x24] sm:$0xf]
        %v2949 = vld [vmem:[%s2938 + $0x28] sm:$0xf]
        %v2950 = vld [vmem:[%s2938 + $0x2c] sm:$0xf]
        %v2951 = vld [vmem:[%s2938 + $0x30] sm:$0xf]
        %v2952 = vld [vmem:[%s2938 + $0x34] sm:$0xf]
        %v2953 = vld [vmem:[%s2938 + $0x38] sm:$0xf]
        %v2954 = vld [vmem:[%s2938 + $0x3c] sm:$0xf]
        %v2955 = vpack.c.bf16 %v2928, %v2928
        %v2956 = vpack.c.bf16 %v2929, %v2929
        %v2973 = vunpack.c.l.b16 %v2939
        %v2974 = vunpack.c.l.b16 %v2940
        %v2975 = vunpack.c.l.b16 %v2941
        %v2976 = vunpack.c.l.b16 %v2942
        %v2977 = vunpack.c.l.b16 %v2943
        %v2978 = vunpack.c.l.b16 %v2944
        %v2979 = vunpack.c.l.b16 %v2945
        %v2980 = vunpack.c.l.b16 %v2946
        %v2981 = vunpack.c.l.b16 %v2947
        %v2982 = vunpack.c.l.b16 %v2948
        %v2983 = vunpack.c.l.b16 %v2949
        %v2984 = vunpack.c.l.b16 %v2950
        %v2985 = vunpack.c.l.b16 %v2951
        %v2986 = vunpack.c.l.b16 %v2952
        %v2987 = vunpack.c.l.b16 %v2953
        %v2988 = vunpack.c.l.b16 %v2954
        %v2989 = vpack.c.b16 %v2974, %v2973
        %v2990 = vpack.c.b16 %v2976, %v2975
        %v2991 = vpack.c.b16 %v2978, %v2977
        %v2992 = vpack.c.b16 %v2980, %v2979
        %v2993 = vpack.c.b16 %v2982, %v2981
        %v2994 = vpack.c.b16 %v2984, %v2983
        %v2995 = vpack.c.b16 %v2986, %v2985
        %v2996 = vpack.c.b16 %v2988, %v2987
        %v2998 = vsel %vm654, %v2989, 0
        %v3001 = vsel %vm654, %v2990, 0
        %v3004 = vsel %vm654, %v2991, 0
        %v3007 = vsel %vm654, %v2992, 0
        %v3010 = vsel %vm654, %v2993, 0
        %v3013 = vsel %vm654, %v2994, 0
        %v3016 = vsel %vm654, %v2995, 0
        %v3019 = vsel %vm654, %v2996, 0
        %v3022 = vsel %vm679, %v2955, 0
        %v3025 = vsel %vm679, %v2956, 0
        %3027 = vmatprep.subr.bf16.mxu0 %v3025
        %3028 = vmatpush1.bf16.msra.mxu0 %v3022
        %3029 = vmatprep.subr.bf16.mxu0 0
        %3030 = vmatpush1.bf16.msra.mxu0 0
        %3031 = vmatprep.subr.bf16.mxu0 0
        %3032 = vmatpush1.bf16.msra.mxu0 0
        %3033 = vmatprep.subr.bf16.mxu0 0
        %3034 = vmatpush1.bf16.msra.mxu0 0
        %3035 = vmatprep.subr.bf16.mxu0 0
        %3036 = vmatpush1.bf16.msra.mxu0 0
        %3037 = vmatprep.subr.bf16.mxu0 0
        %3038 = vmatpush1.bf16.msra.mxu0 0
        %3039 = vmatprep.subr.bf16.mxu0 0
        %3040 = vmatpush1.bf16.msra.mxu0 0
        %3041 = vmatprep.subr.bf16.mxu0 0
        %3042 = vmatpush1.bf16.msra.mxu0 0
        %3043 = vmatprep.subr.bf16.mxu0 0
        %3044 = vmatpush1.bf16.msra.mxu0 0
        %3045 = vmatprep.subr.bf16.mxu0 0
        %3046 = vmatpush1.bf16.msra.mxu0 0
        %3047 = vmatprep.subr.bf16.mxu0 0
        %3048 = vmatpush1.bf16.msra.mxu0 0
        %3049 = vmatprep.subr.bf16.mxu0 0
        %3050 = vmatpush1.bf16.msra.mxu0 0
        %3051 = vmatprep.subr.bf16.mxu0 0
        %3052 = vmatpush1.bf16.msra.mxu0 0
        %3053 = vmatprep.subr.bf16.mxu0 0
        %3054 = vmatpush1.bf16.msra.mxu0 0
        %3055 = vmatprep.subr.bf16.mxu0 0
        %3056 = vmatpush1.bf16.msra.mxu0 0
        %3057 = vmatprep.subr.bf16.mxu0 0
        %3058 = vmatpush1.bf16.msra.mxu0 0
        %3059 = vmatprep.mubr.bf16.mxu0 0
        %3060 = vmatmul.mubr.bf16.gmra.mrb[0].mxu0 %v2998
        %v3061 = vpop.f32.mrb[0].mxu0
        %v3062 = vadd.f32 0.0, %v3061
        %v3063 = vpop.f32.mrb[0].mxu0
        %v3064 = vadd.f32 0.0, %v3063
        %v3065 = vpop.f32.mrb[0].mxu0
        %v3066 = vadd.f32 0.0, %v3065
        %v3067 = vpop.f32.mrb[0].mxu0
        %v3068 = vadd.f32 0.0, %v3067
        %3069 = vmatprep.mubr.bf16.mxu0 0
        %3070 = vmatmul.mubr.bf16.gmra.mrb[0].mxu0 %v3001
        %v3071 = vpop.f32.mrb[0].mxu0
        %v3072 = vadd.f32 0.0, %v3071
        %v3073 = vpop.f32.mrb[0].mxu0
        %v3074 = vadd.f32 0.0, %v3073
        %v3075 = vpop.f32.mrb[0].mxu0
        %v3076 = vadd.f32 0.0, %v3075
        %v3077 = vpop.f32.mrb[0].mxu0
        %v3078 = vadd.f32 0.0, %v3077
        %3079 = vmatprep.mubr.bf16.mxu0 0
        %3080 = vmatmul.mubr.bf16.gmra.mrb[0].mxu0 %v3004
        %v3081 = vpop.f32.mrb[0].mxu0
        %v3082 = vadd.f32 0.0, %v3081
        %v3083 = vpop.f32.mrb[0].mxu0
        %v3084 = vadd.f32 0.0, %v3083
        %v3085 = vpop.f32.mrb[0].mxu0
        %v3086 = vadd.f32 0.0, %v3085
        %v3087 = vpop.f32.mrb[0].mxu0
        %v3088 = vadd.f32 0.0, %v3087
        %3089 = vmatprep.mubr.bf16.mxu0 0
        %3090 = vmatmul.mubr.bf16.gmra.mrb[0].mxu0 %v3007
        %v3091 = vpop.f32.mrb[0].mxu0
        %v3092 = vadd.f32 0.0, %v3091
        %v3093 = vpop.f32.mrb[0].mxu0
        %v3094 = vadd.f32 0.0, %v3093
        %v3095 = vpop.f32.mrb[0].mxu0
        %v3096 = vadd.f32 0.0, %v3095
        %v3097 = vpop.f32.mrb[0].mxu0
        %v3098 = vadd.f32 0.0, %v3097
        %3099 = vmatprep.mubr.bf16.mxu0 0
        %3100 = vmatmul.mubr.bf16.gmra.mrb[0].mxu0 %v3010
        %v3101 = vpop.f32.mrb[0].mxu0
        %v3102 = vadd.f32 0.0, %v3101
        %v3103 = vpop.f32.mrb[0].mxu0
        %v3104 = vadd.f32 0.0, %v3103
        %v3105 = vpop.f32.mrb[0].mxu0
        %v3106 = vadd.f32 0.0, %v3105
        %v3107 = vpop.f32.mrb[0].mxu0
        %v3108 = vadd.f32 0.0, %v3107
        %3109 = vmatprep.mubr.bf16.mxu0 0
        %3110 = vmatmul.mubr.bf16.gmra.mrb[0].mxu0 %v3013
        %v3111 = vpop.f32.mrb[0].mxu0
        %v3112 = vadd.f32 0.0, %v3111
        %v3113 = vpop.f32.mrb[0].mxu0
        %v3114 = vadd.f32 0.0, %v3113
        %v3115 = vpop.f32.mrb[0].mxu0
        %v3116 = vadd.f32 0.0, %v3115
        %v3117 = vpop.f32.mrb[0].mxu0
        %v3118 = vadd.f32 0.0, %v3117
        %3119 = vmatprep.mubr.bf16.mxu0 0
        %3120 = vmatmul.mubr.bf16.gmra.mrb[0].mxu0 %v3016
        %v3121 = vpop.f32.mrb[0].mxu0
        %v3122 = vadd.f32 0.0, %v3121
        %v3123 = vpop.f32.mrb[0].mxu0
        %v3124 = vadd.f32 0.0, %v3123
        %v3125 = vpop.f32.mrb[0].mxu0
        %v3126 = vadd.f32 0.0, %v3125
        %v3127 = vpop.f32.mrb[0].mxu0
        %v3128 = vadd.f32 0.0, %v3127
        %3129 = vmatprep.mubr.bf16.mxu0 0
        %3130 = vmatmul.mubr.bf16.gmra.mrb[0].mxu0 %v3019
        %v3131 = vpop.f32.mrb[0].mxu0
        %v3132 = vadd.f32 0.0, %v3131
        %v3133 = vpop.f32.mrb[0].mxu0
        %v3134 = vadd.f32 0.0, %v3133
        %v3135 = vpop.f32.mrb[0].mxu0
        %v3136 = vadd.f32 0.0, %v3135
        %v3137 = vpop.f32.mrb[0].mxu0
        %v3138 = vadd.f32 0.0, %v3137
        %3139 = vdwg.mxu0
        %v3140 = vadd.f32 %v2837, %v3062
        %v3141 = vadd.f32 %v2838, %v3064
        %v3142 = vadd.f32 %v2839, %v3066
        %v3143 = vadd.f32 %v2840, %v3068
        %v3144 = vadd.f32 %v2841, %v3072
        %v3145 = vadd.f32 %v2842, %v3074
        %v3146 = vadd.f32 %v2843, %v3076
        %v3147 = vadd.f32 %v2844, %v3078
        %v3148 = vadd.f32 %v2845, %v3082
        %v3149 = vadd.f32 %v2846, %v3084
        %v3150 = vadd.f32 %v2847, %v3086
        %v3151 = vadd.f32 %v2848, %v3088
        %v3152 = vadd.f32 %v2849, %v3092
        %v3153 = vadd.f32 %v2850, %v3094
        %v3154 = vadd.f32 %v2851, %v3096
        %v3155 = vadd.f32 %v2852, %v3098
        %v3156 = vadd.f32 %v2853, %v3102
        %v3157 = vadd.f32 %v2854, %v3104
        %v3158 = vadd.f32 %v2855, %v3106
        %v3159 = vadd.f32 %v2856, %v3108
        %v3160 = vadd.f32 %v2857, %v3112
        %v3161 = vadd.f32 %v2858, %v3114
        %v3162 = vadd.f32 %v2859, %v3116
        %v3163 = vadd.f32 %v2860, %v3118
        %v3164 = vadd.f32 %v2861, %v3122
        %v3165 = vadd.f32 %v2862, %v3124
        %v3166 = vadd.f32 %v2863, %v3126
        %v3167 = vadd.f32 %v2864, %v3128
        %v3168 = vadd.f32 %v2865, %v3132
        %v3169 = vadd.f32 %v2866, %v3134
        %v3170 = vadd.f32 %v2867, %v3136
        %v3171 = vadd.f32 %v2868, %v3138
        %s3172 = scalar_lea.vmem %s2, 320
        %v3173 = vld [vmem:[%s3172] sm:$0xf]
        %v3174 = vld [vmem:[%s3172 + $0x4] sm:$0xf]
        %v3175 = vld [vmem:[%s3172 + $0x8] sm:$0xf]
        %v3176 = vld [vmem:[%s3172 + $0xc] sm:$0xf]
        %v3177 = vld [vmem:[%s3172 + $0x10] sm:$0xf]
        %v3178 = vld [vmem:[%s3172 + $0x14] sm:$0xf]
        %v3179 = vld [vmem:[%s3172 + $0x18] sm:$0xf]
        %v3180 = vld [vmem:[%s3172 + $0x1c] sm:$0xf]
        %v3181 = vld [vmem:[%s3172 + $0x20] sm:$0xf]
        %v3182 = vld [vmem:[%s3172 + $0x24] sm:$0xf]
        %v3183 = vld [vmem:[%s3172 + $0x28] sm:$0xf]
        %v3184 = vld [vmem:[%s3172 + $0x2c] sm:$0xf]
        %v3185 = vld [vmem:[%s3172 + $0x30] sm:$0xf]
        %v3186 = vld [vmem:[%s3172 + $0x34] sm:$0xf]
        %v3187 = vld [vmem:[%s3172 + $0x38] sm:$0xf]
        %v3188 = vld [vmem:[%s3172 + $0x3c] sm:$0xf]
        %v3189 = vpack.c.bf16 %v2932, %v2930
        %v3190 = vpack.c.bf16 %v2933, %v2931
        %v3191 = vpack.c.bf16 %v2936, %v2934
        %v3192 = vpack.c.bf16 %v2937, %v2935
        %v3209 = vunpack.c.l.b16 %v3173
        %v3210 = vunpack.c.l.b16 %v3174
        %v3211 = vunpack.c.l.b16 %v3175
        %v3212 = vunpack.c.l.b16 %v3176
        %v3213 = vunpack.c.l.b16 %v3177
        %v3214 = vunpack.c.l.b16 %v3178
        %v3215 = vunpack.c.l.b16 %v3179
        %v3216 = vunpack.c.l.b16 %v3180
        %v3217 = vunpack.c.l.b16 %v3181
        %v3218 = vunpack.c.l.b16 %v3182
        %v3219 = vunpack.c.l.b16 %v3183
        %v3220 = vunpack.c.l.b16 %v3184
        %v3221 = vunpack.c.l.b16 %v3185
        %v3222 = vunpack.c.l.b16 %v3186
        %v3223 = vunpack.c.l.b16 %v3187
        %v3224 = vunpack.c.l.b16 %v3188
        %v3225 = vpack.c.b16 %v3210, %v3209
        %v3226 = vpack.c.b16 %v3212, %v3211
        %v3227 = vpack.c.b16 %v3214, %v3213
        %v3228 = vpack.c.b16 %v3216, %v3215
        %v3229 = vpack.c.b16 %v3218, %v3217
        %v3230 = vpack.c.b16 %v3220, %v3219
        %v3231 = vpack.c.b16 %v3222, %v3221
        %v3232 = vpack.c.b16 %v3224, %v3223
        %v3234 = vsel %vm476, %v3225, 0
        %v3237 = vsel %vm476, %v3226, 0
        %v3240 = vsel %vm476, %v3227, 0
        %v3243 = vsel %vm476, %v3228, 0
        %v3246 = vsel %vm476, %v3229, 0
        %v3249 = vsel %vm476, %v3230, 0
        %v3252 = vsel %vm476, %v3231, 0
        %v3255 = vsel %vm476, %v3232, 0
        %3257 = vmatprep.subr.bf16.mxu0 %v3190
        %3258 = vmatpush1.bf16.msra.mxu0 %v3189
        %3259 = vmatprep.subr.bf16.mxu0 %v3192
        %3260 = vmatpush1.bf16.msra.mxu0 %v3191
        %3261 = vmatprep.subr.bf16.mxu0 0
        %3262 = vmatpush1.bf16.msra.mxu0 0
        %3263 = vmatprep.subr.bf16.mxu0 0
        %3264 = vmatpush1.bf16.msra.mxu0 0
        %3265 = vmatprep.subr.bf16.mxu0 0
        %3266 = vmatpush1.bf16.msra.mxu0 0
        %3267 = vmatprep.subr.bf16.mxu0 0
        %3268 = vmatpush1.bf16.msra.mxu0 0
        %3269 = vmatprep.subr.bf16.mxu0 0
        %3270 = vmatpush1.bf16.msra.mxu0 0
        %3271 = vmatprep.subr.bf16.mxu0 0
        %3272 = vmatpush1.bf16.msra.mxu0 0
        %3273 = vmatprep.subr.bf16.mxu0 0
        %3274 = vmatpush1.bf16.msra.mxu0 0
        %3275 = vmatprep.subr.bf16.mxu0 0
        %3276 = vmatpush1.bf16.msra.mxu0 0
        %3277 = vmatprep.subr.bf16.mxu0 0
        %3278 = vmatpush1.bf16.msra.mxu0 0
        %3279 = vmatprep.subr.bf16.mxu0 0
        %3280 = vmatpush1.bf16.msra.mxu0 0
        %3281 = vmatprep.subr.bf16.mxu0 0
        %3282 = vmatpush1.bf16.msra.mxu0 0
        %3283 = vmatprep.subr.bf16.mxu0 0
        %3284 = vmatpush1.bf16.msra.mxu0 0
        %3285 = vmatprep.subr.bf16.mxu0 0
        %3286 = vmatpush1.bf16.msra.mxu0 0
        %3287 = vmatprep.subr.bf16.mxu0 0
        %3288 = vmatpush1.bf16.msra.mxu0 0
        %3289 = vmatprep.mubr.bf16.mxu0 0
        %3290 = vmatmul.mubr.bf16.gmra.mrb[0].mxu0 %v3234
        %v3291 = vpop.f32.mrb[0].mxu0
        %v3292 = vadd.f32 0.0, %v3291
        %v3293 = vpop.f32.mrb[0].mxu0
        %v3294 = vadd.f32 0.0, %v3293
        %v3295 = vpop.f32.mrb[0].mxu0
        %v3296 = vadd.f32 0.0, %v3295
        %v3297 = vpop.f32.mrb[0].mxu0
        %v3298 = vadd.f32 0.0, %v3297
        %3299 = vmatprep.mubr.bf16.mxu0 0
        %3300 = vmatmul.mubr.bf16.gmra.mrb[0].mxu0 %v3237
        %v3301 = vpop.f32.mrb[0].mxu0
        %v3302 = vadd.f32 0.0, %v3301
        %v3303 = vpop.f32.mrb[0].mxu0
        %v3304 = vadd.f32 0.0, %v3303
        %v3305 = vpop.f32.mrb[0].mxu0
        %v3306 = vadd.f32 0.0, %v3305
        %v3307 = vpop.f32.mrb[0].mxu0
        %v3308 = vadd.f32 0.0, %v3307
        %3309 = vmatprep.mubr.bf16.mxu0 0
        %3310 = vmatmul.mubr.bf16.gmra.mrb[0].mxu0 %v3240
        %v3311 = vpop.f32.mrb[0].mxu0
        %v3312 = vadd.f32 0.0, %v3311
        %v3313 = vpop.f32.mrb[0].mxu0
        %v3314 = vadd.f32 0.0, %v3313
        %v3315 = vpop.f32.mrb[0].mxu0
        %v3316 = vadd.f32 0.0, %v3315
        %v3317 = vpop.f32.mrb[0].mxu0
        %v3318 = vadd.f32 0.0, %v3317
        %3319 = vmatprep.mubr.bf16.mxu0 0
        %3320 = vmatmul.mubr.bf16.gmra.mrb[0].mxu0 %v3243
        %v3321 = vpop.f32.mrb[0].mxu0
        %v3322 = vadd.f32 0.0, %v3321
        %v3323 = vpop.f32.mrb[0].mxu0
        %v3324 = vadd.f32 0.0, %v3323
        %v3325 = vpop.f32.mrb[0].mxu0
        %v3326 = vadd.f32 0.0, %v3325
        %v3327 = vpop.f32.mrb[0].mxu0
        %v3328 = vadd.f32 0.0, %v3327
        %3329 = vmatprep.mubr.bf16.mxu0 0
        %3330 = vmatmul.mubr.bf16.gmra.mrb[0].mxu0 %v3246
        %v3331 = vpop.f32.mrb[0].mxu0
        %v3332 = vadd.f32 0.0, %v3331
        %v3333 = vpop.f32.mrb[0].mxu0
        %v3334 = vadd.f32 0.0, %v3333
        %v3335 = vpop.f32.mrb[0].mxu0
        %v3336 = vadd.f32 0.0, %v3335
        %v3337 = vpop.f32.mrb[0].mxu0
        %v3338 = vadd.f32 0.0, %v3337
        %3339 = vmatprep.mubr.bf16.mxu0 0
        %3340 = vmatmul.mubr.bf16.gmra.mrb[0].mxu0 %v3249
        %v3341 = vpop.f32.mrb[0].mxu0
        %v3342 = vadd.f32 0.0, %v3341
        %v3343 = vpop.f32.mrb[0].mxu0
        %v3344 = vadd.f32 0.0, %v3343
        %v3345 = vpop.f32.mrb[0].mxu0
        %v3346 = vadd.f32 0.0, %v3345
        %v3347 = vpop.f32.mrb[0].mxu0
        %v3348 = vadd.f32 0.0, %v3347
        %3349 = vmatprep.mubr.bf16.mxu0 0
        %3350 = vmatmul.mubr.bf16.gmra.mrb[0].mxu0 %v3252
        %v3351 = vpop.f32.mrb[0].mxu0
        %v3352 = vadd.f32 0.0, %v3351
        %v3353 = vpop.f32.mrb[0].mxu0
        %v3354 = vadd.f32 0.0, %v3353
        %v3355 = vpop.f32.mrb[0].mxu0
        %v3356 = vadd.f32 0.0, %v3355
        %v3357 = vpop.f32.mrb[0].mxu0
        %v3358 = vadd.f32 0.0, %v3357
        %3359 = vmatprep.mubr.bf16.mxu0 0
        %3360 = vmatmul.mubr.bf16.gmra.mrb[0].mxu0 %v3255
        %v3361 = vpop.f32.mrb[0].mxu0
        %v3362 = vadd.f32 0.0, %v3361
        %v3363 = vpop.f32.mrb[0].mxu0
        %v3364 = vadd.f32 0.0, %v3363
        %v3365 = vpop.f32.mrb[0].mxu0
        %v3366 = vadd.f32 0.0, %v3365
        %v3367 = vpop.f32.mrb[0].mxu0
        %v3368 = vadd.f32 0.0, %v3367
        %3369 = vdwg.mxu0
        %v3370 = vadd.f32 %v3140, %v3292
        %v3371 = vadd.f32 %v3141, %v3294
        %v3372 = vadd.f32 %v3142, %v3296
        %v3373 = vadd.f32 %v3143, %v3298
        %v3374 = vadd.f32 %v3144, %v3302
        %v3375 = vadd.f32 %v3145, %v3304
        %v3376 = vadd.f32 %v3146, %v3306
        %v3377 = vadd.f32 %v3147, %v3308
        %v3378 = vadd.f32 %v3148, %v3312
        %v3379 = vadd.f32 %v3149, %v3314
        %v3380 = vadd.f32 %v3150, %v3316
        %v3381 = vadd.f32 %v3151, %v3318
        %v3382 = vadd.f32 %v3152, %v3322
        %v3383 = vadd.f32 %v3153, %v3324
        %v3384 = vadd.f32 %v3154, %v3326
        %v3385 = vadd.f32 %v3155, %v3328
        %v3386 = vadd.f32 %v3156, %v3332
        %v3387 = vadd.f32 %v3157, %v3334
        %v3388 = vadd.f32 %v3158, %v3336
        %v3389 = vadd.f32 %v3159, %v3338
        %v3390 = vadd.f32 %v3160, %v3342
        %v3391 = vadd.f32 %v3161, %v3344
        %v3392 = vadd.f32 %v3162, %v3346
        %v3393 = vadd.f32 %v3163, %v3348
        %v3394 = vadd.f32 %v3164, %v3352
        %v3395 = vadd.f32 %v3165, %v3354
        %v3396 = vadd.f32 %v3166, %v3356
        %v3397 = vadd.f32 %v3167, %v3358
        %v3398 = vadd.f32 %v3168, %v3362
        %v3399 = vadd.f32 %v3169, %v3364
        %v3400 = vadd.f32 %v3170, %v3366
        %v3401 = vadd.f32 %v3171, %v3368
        %3402 = vrot.lane.b32.xlu0 %v311, 113
        %v3403 = vpop.permute.xlu0 %3402
        %3404 = vrot.lane.b32.xlu0 %v321, 113
        %v3405 = vpop.permute.xlu0 %3404
        %vm3406 = vcmask 924672
        %v3407 = vsel %vm3406, %v3403, %v3405
        %v3411 = vsel %vm3406, %v3405, %v3403
        %3412 = vrot.lane.b32.xlu0 %v312, 113
        %v3413 = vpop.permute.xlu0 %3412
        %3414 = vrot.lane.b32.xlu0 %v313, 113
        %v3415 = vpop.permute.xlu0 %3414
        %3416 = vrot.lane.b32.xlu0 %v314, 113
        %v3417 = vpop.permute.xlu0 %3416
        %3418 = vrot.lane.b32.xlu0 %v315, 113
        %v3419 = vpop.permute.xlu0 %3418
        %3420 = vrot.lane.b32.xlu0 %v316, 113
        %v3421 = vpop.permute.xlu0 %3420
        %3422 = vrot.lane.b32.xlu0 %v317, 113
        %v3423 = vpop.permute.xlu0 %3422
        %3424 = vrot.lane.b32.xlu0 %v318, 113
        %v3425 = vpop.permute.xlu0 %3424
        %3426 = vrot.lane.b32.xlu0 %v319, 113
        %v3427 = vpop.permute.xlu0 %3426
        %v3428 = vsel %vm3406, %v3413, %v3415
        %v3429 = vsel %vm3406, %v3417, %v3419
        %v3430 = vsel %vm3406, %v3421, %v3423
        %v3431 = vsel %vm3406, %v3425, %v3427
        %v3444 = vsel %vm3406, %v3415, %v3413
        %v3445 = vsel %vm3406, %v3419, %v3417
        %v3446 = vsel %vm3406, %v3423, %v3421
        %v3447 = vsel %vm3406, %v3427, %v3425
        %s3448 = scalar_lea.vmem %s4, 12
        %v3449 = vld [vmem:[%s3448] sm:$0x3]
        %v3451 = vlaneseq
        %v3452 = vshrl.u32 %v3451, 7
        %v3453 = vsub.s32 0, %v3452
        %v3454 = vrot.slane %v3449, %v3453
        %v3455 = vlaneseq
        %v3456 = vshrl.u32 %v3455, 7
        %v3457 = vsub.s32 1, %v3456
        %v3458 = vrot.slane %v3449, %v3457
        %v3461 = vmul.f32 %v3407, %v3454
        %v3462 = vmul.f32 %v3411, %v3458
        %v3463 = vmul.f32 %v3428, %v3454
        %v3464 = vmul.f32 %v3444, %v3458
        %v3465 = vmul.f32 %v3429, %v3454
        %v3466 = vmul.f32 %v3445, %v3458
        %v3467 = vmul.f32 %v3430, %v3454
        %v3468 = vmul.f32 %v3446, %v3458
        %v3469 = vmul.f32 %v3431, %v3454
        %v3470 = vmul.f32 %v3447, %v3458
        %s3471 = scalar_lea.vmem %s1, 384
        %v3472 = vld [vmem:[%s3471] sm:$0xf]
        %v3473 = vld [vmem:[%s3471 + $0x4] sm:$0xf]
        %v3474 = vld [vmem:[%s3471 + $0x8] sm:$0xf]
        %v3475 = vld [vmem:[%s3471 + $0xc] sm:$0xf]
        %v3476 = vld [vmem:[%s3471 + $0x10] sm:$0xf]
        %v3477 = vld [vmem:[%s3471 + $0x14] sm:$0xf]
        %v3478 = vld [vmem:[%s3471 + $0x18] sm:$0xf]
        %v3479 = vld [vmem:[%s3471 + $0x1c] sm:$0xf]
        %v3480 = vld [vmem:[%s3471 + $0x20] sm:$0xf]
        %v3481 = vld [vmem:[%s3471 + $0x24] sm:$0xf]
        %v3482 = vld [vmem:[%s3471 + $0x28] sm:$0xf]
        %v3483 = vld [vmem:[%s3471 + $0x2c] sm:$0xf]
        %v3484 = vld [vmem:[%s3471 + $0x30] sm:$0xf]
        %v3485 = vld [vmem:[%s3471 + $0x34] sm:$0xf]
        %v3486 = vld [vmem:[%s3471 + $0x38] sm:$0xf]
        %v3487 = vld [vmem:[%s3471 + $0x3c] sm:$0xf]
        %v3488 = vpack.c.bf16 %v3461, %v3461
        %v3489 = vpack.c.bf16 %v3462, %v3462
        %v3506 = vunpack.c.l.b16 %v3472
        %v3507 = vunpack.c.l.b16 %v3473
        %v3508 = vunpack.c.l.b16 %v3474
        %v3509 = vunpack.c.l.b16 %v3475
        %v3510 = vunpack.c.l.b16 %v3476
        %v3511 = vunpack.c.l.b16 %v3477
        %v3512 = vunpack.c.l.b16 %v3478
        %v3513 = vunpack.c.l.b16 %v3479
        %v3514 = vunpack.c.l.b16 %v3480
        %v3515 = vunpack.c.l.b16 %v3481
        %v3516 = vunpack.c.l.b16 %v3482
        %v3517 = vunpack.c.l.b16 %v3483
        %v3518 = vunpack.c.l.b16 %v3484
        %v3519 = vunpack.c.l.b16 %v3485
        %v3520 = vunpack.c.l.b16 %v3486
        %v3521 = vunpack.c.l.b16 %v3487
        %v3522 = vpack.c.b16 %v3507, %v3506
        %v3523 = vpack.c.b16 %v3509, %v3508
        %v3524 = vpack.c.b16 %v3511, %v3510
        %v3525 = vpack.c.b16 %v3513, %v3512
        %v3526 = vpack.c.b16 %v3515, %v3514
        %v3527 = vpack.c.b16 %v3517, %v3516
        %v3528 = vpack.c.b16 %v3519, %v3518
        %v3529 = vpack.c.b16 %v3521, %v3520
        %v3531 = vsel %vm654, %v3522, 0
        %v3534 = vsel %vm654, %v3523, 0
        %v3537 = vsel %vm654, %v3524, 0
        %v3540 = vsel %vm654, %v3525, 0
        %v3543 = vsel %vm654, %v3526, 0
        %v3546 = vsel %vm654, %v3527, 0
        %v3549 = vsel %vm654, %v3528, 0
        %v3552 = vsel %vm654, %v3529, 0
        %v3555 = vsel %vm679, %v3488, 0
        %v3558 = vsel %vm679, %v3489, 0
        %3560 = vmatprep.subr.bf16.mxu0 %v3558
        %3561 = vmatpush1.bf16.msra.mxu0 %v3555
        %3562 = vmatprep.subr.bf16.mxu0 0
        %3563 = vmatpush1.bf16.msra.mxu0 0
        %3564 = vmatprep.subr.bf16.mxu0 0
        %3565 = vmatpush1.bf16.msra.mxu0 0
        %3566 = vmatprep.subr.bf16.mxu0 0
        %3567 = vmatpush1.bf16.msra.mxu0 0
        %3568 = vmatprep.subr.bf16.mxu0 0
        %3569 = vmatpush1.bf16.msra.mxu0 0
        %3570 = vmatprep.subr.bf16.mxu0 0
        %3571 = vmatpush1.bf16.msra.mxu0 0
        %3572 = vmatprep.subr.bf16.mxu0 0
        %3573 = vmatpush1.bf16.msra.mxu0 0
        %3574 = vmatprep.subr.bf16.mxu0 0
        %3575 = vmatpush1.bf16.msra.mxu0 0
        %3576 = vmatprep.subr.bf16.mxu0 0
        %3577 = vmatpush1.bf16.msra.mxu0 0
        %3578 = vmatprep.subr.bf16.mxu0 0
        %3579 = vmatpush1.bf16.msra.mxu0 0
        %3580 = vmatprep.subr.bf16.mxu0 0
        %3581 = vmatpush1.bf16.msra.mxu0 0
        %3582 = vmatprep.subr.bf16.mxu0 0
        %3583 = vmatpush1.bf16.msra.mxu0 0
        %3584 = vmatprep.subr.bf16.mxu0 0
        %3585 = vmatpush1.bf16.msra.mxu0 0
        %3586 = vmatprep.subr.bf16.mxu0 0
        %3587 = vmatpush1.bf16.msra.mxu0 0
        %3588 = vmatprep.subr.bf16.mxu0 0
        %3589 = vmatpush1.bf16.msra.mxu0 0
        %3590 = vmatprep.subr.bf16.mxu0 0
        %3591 = vmatpush1.bf16.msra.mxu0 0
        %3592 = vmatprep.mubr.bf16.mxu0 0
        %3593 = vmatmul.mubr.bf16.gmra.mrb[0].mxu0 %v3531
        %v3594 = vpop.f32.mrb[0].mxu0
        %v3595 = vadd.f32 0.0, %v3594
        %v3596 = vpop.f32.mrb[0].mxu0
        %v3597 = vadd.f32 0.0, %v3596
        %v3598 = vpop.f32.mrb[0].mxu0
        %v3599 = vadd.f32 0.0, %v3598
        %v3600 = vpop.f32.mrb[0].mxu0
        %v3601 = vadd.f32 0.0, %v3600
        %3602 = vmatprep.mubr.bf16.mxu0 0
        %3603 = vmatmul.mubr.bf16.gmra.mrb[0].mxu0 %v3534
        %v3604 = vpop.f32.mrb[0].mxu0
        %v3605 = vadd.f32 0.0, %v3604
        %v3606 = vpop.f32.mrb[0].mxu0
        %v3607 = vadd.f32 0.0, %v3606
        %v3608 = vpop.f32.mrb[0].mxu0
        %v3609 = vadd.f32 0.0, %v3608
        %v3610 = vpop.f32.mrb[0].mxu0
        %v3611 = vadd.f32 0.0, %v3610
        %3612 = vmatprep.mubr.bf16.mxu0 0
        %3613 = vmatmul.mubr.bf16.gmra.mrb[0].mxu0 %v3537
        %v3614 = vpop.f32.mrb[0].mxu0
        %v3615 = vadd.f32 0.0, %v3614
        %v3616 = vpop.f32.mrb[0].mxu0
        %v3617 = vadd.f32 0.0, %v3616
        %v3618 = vpop.f32.mrb[0].mxu0
        %v3619 = vadd.f32 0.0, %v3618
        %v3620 = vpop.f32.mrb[0].mxu0
        %v3621 = vadd.f32 0.0, %v3620
        %3622 = vmatprep.mubr.bf16.mxu0 0
        %3623 = vmatmul.mubr.bf16.gmra.mrb[0].mxu0 %v3540
        %v3624 = vpop.f32.mrb[0].mxu0
        %v3625 = vadd.f32 0.0, %v3624
        %v3626 = vpop.f32.mrb[0].mxu0
        %v3627 = vadd.f32 0.0, %v3626
        %v3628 = vpop.f32.mrb[0].mxu0
        %v3629 = vadd.f32 0.0, %v3628
        %v3630 = vpop.f32.mrb[0].mxu0
        %v3631 = vadd.f32 0.0, %v3630
        %3632 = vmatprep.mubr.bf16.mxu0 0
        %3633 = vmatmul.mubr.bf16.gmra.mrb[0].mxu0 %v3543
        %v3634 = vpop.f32.mrb[0].mxu0
        %v3635 = vadd.f32 0.0, %v3634
        %v3636 = vpop.f32.mrb[0].mxu0
        %v3637 = vadd.f32 0.0, %v3636
        %v3638 = vpop.f32.mrb[0].mxu0
        %v3639 = vadd.f32 0.0, %v3638
        %v3640 = vpop.f32.mrb[0].mxu0
        %v3641 = vadd.f32 0.0, %v3640
        %3642 = vmatprep.mubr.bf16.mxu0 0
        %3643 = vmatmul.mubr.bf16.gmra.mrb[0].mxu0 %v3546
        %v3644 = vpop.f32.mrb[0].mxu0
        %v3645 = vadd.f32 0.0, %v3644
        %v3646 = vpop.f32.mrb[0].mxu0
        %v3647 = vadd.f32 0.0, %v3646
        %v3648 = vpop.f32.mrb[0].mxu0
        %v3649 = vadd.f32 0.0, %v3648
        %v3650 = vpop.f32.mrb[0].mxu0
        %v3651 = vadd.f32 0.0, %v3650
        %3652 = vmatprep.mubr.bf16.mxu0 0
        %3653 = vmatmul.mubr.bf16.gmra.mrb[0].mxu0 %v3549
        %v3654 = vpop.f32.mrb[0].mxu0
        %v3655 = vadd.f32 0.0, %v3654
        %v3656 = vpop.f32.mrb[0].mxu0
        %v3657 = vadd.f32 0.0, %v3656
        %v3658 = vpop.f32.mrb[0].mxu0
        %v3659 = vadd.f32 0.0, %v3658
        %v3660 = vpop.f32.mrb[0].mxu0
        %v3661 = vadd.f32 0.0, %v3660
        %3662 = vmatprep.mubr.bf16.mxu0 0
        %3663 = vmatmul.mubr.bf16.gmra.mrb[0].mxu0 %v3552
        %v3664 = vpop.f32.mrb[0].mxu0
        %v3665 = vadd.f32 0.0, %v3664
        %v3666 = vpop.f32.mrb[0].mxu0
        %v3667 = vadd.f32 0.0, %v3666
        %v3668 = vpop.f32.mrb[0].mxu0
        %v3669 = vadd.f32 0.0, %v3668
        %v3670 = vpop.f32.mrb[0].mxu0
        %v3671 = vadd.f32 0.0, %v3670
        %3672 = vdwg.mxu0
        %v3673 = vadd.f32 %v3370, %v3595
        %v3674 = vadd.f32 %v3371, %v3597
        %v3675 = vadd.f32 %v3372, %v3599
        %v3676 = vadd.f32 %v3373, %v3601
        %v3677 = vadd.f32 %v3374, %v3605
        %v3678 = vadd.f32 %v3375, %v3607
        %v3679 = vadd.f32 %v3376, %v3609
        %v3680 = vadd.f32 %v3377, %v3611
        %v3681 = vadd.f32 %v3378, %v3615
        %v3682 = vadd.f32 %v3379, %v3617
        %v3683 = vadd.f32 %v3380, %v3619
        %v3684 = vadd.f32 %v3381, %v3621
        %v3685 = vadd.f32 %v3382, %v3625
        %v3686 = vadd.f32 %v3383, %v3627
        %v3687 = vadd.f32 %v3384, %v3629
        %v3688 = vadd.f32 %v3385, %v3631
        %v3689 = vadd.f32 %v3386, %v3635
        %v3690 = vadd.f32 %v3387, %v3637
        %v3691 = vadd.f32 %v3388, %v3639
        %v3692 = vadd.f32 %v3389, %v3641
        %v3693 = vadd.f32 %v3390, %v3645
        %v3694 = vadd.f32 %v3391, %v3647
        %v3695 = vadd.f32 %v3392, %v3649
        %v3696 = vadd.f32 %v3393, %v3651
        %v3697 = vadd.f32 %v3394, %v3655
        %v3698 = vadd.f32 %v3395, %v3657
        %v3699 = vadd.f32 %v3396, %v3659
        %v3700 = vadd.f32 %v3397, %v3661
        %v3701 = vadd.f32 %v3398, %v3665
        %v3702 = vadd.f32 %v3399, %v3667
        %v3703 = vadd.f32 %v3400, %v3669
        %v3704 = vadd.f32 %v3401, %v3671
        %s3705 = scalar_lea.vmem %s2, 384
        %v3706 = vld [vmem:[%s3705] sm:$0xf]
        %v3707 = vld [vmem:[%s3705 + $0x4] sm:$0xf]
        %v3708 = vld [vmem:[%s3705 + $0x8] sm:$0xf]
        %v3709 = vld [vmem:[%s3705 + $0xc] sm:$0xf]
        %v3710 = vld [vmem:[%s3705 + $0x10] sm:$0xf]
        %v3711 = vld [vmem:[%s3705 + $0x14] sm:$0xf]
        %v3712 = vld [vmem:[%s3705 + $0x18] sm:$0xf]
        %v3713 = vld [vmem:[%s3705 + $0x1c] sm:$0xf]
        %v3714 = vld [vmem:[%s3705 + $0x20] sm:$0xf]
        %v3715 = vld [vmem:[%s3705 + $0x24] sm:$0xf]
        %v3716 = vld [vmem:[%s3705 + $0x28] sm:$0xf]
        %v3717 = vld [vmem:[%s3705 + $0x2c] sm:$0xf]
        %v3718 = vld [vmem:[%s3705 + $0x30] sm:$0xf]
        %v3719 = vld [vmem:[%s3705 + $0x34] sm:$0xf]
        %v3720 = vld [vmem:[%s3705 + $0x38] sm:$0xf]
        %v3721 = vld [vmem:[%s3705 + $0x3c] sm:$0xf]
        %v3722 = vpack.c.bf16 %v3465, %v3463
        %v3723 = vpack.c.bf16 %v3466, %v3464
        %v3724 = vpack.c.bf16 %v3469, %v3467
        %v3725 = vpack.c.bf16 %v3470, %v3468
        %v3742 = vunpack.c.l.b16 %v3706
        %v3743 = vunpack.c.l.b16 %v3707
        %v3744 = vunpack.c.l.b16 %v3708
        %v3745 = vunpack.c.l.b16 %v3709
        %v3746 = vunpack.c.l.b16 %v3710
        %v3747 = vunpack.c.l.b16 %v3711
        %v3748 = vunpack.c.l.b16 %v3712
        %v3749 = vunpack.c.l.b16 %v3713
        %v3750 = vunpack.c.l.b16 %v3714
        %v3751 = vunpack.c.l.b16 %v3715
        %v3752 = vunpack.c.l.b16 %v3716
        %v3753 = vunpack.c.l.b16 %v3717
        %v3754 = vunpack.c.l.b16 %v3718
        %v3755 = vunpack.c.l.b16 %v3719
        %v3756 = vunpack.c.l.b16 %v3720
        %v3757 = vunpack.c.l.b16 %v3721
        %v3758 = vpack.c.b16 %v3743, %v3742
        %v3759 = vpack.c.b16 %v3745, %v3744
        %v3760 = vpack.c.b16 %v3747, %v3746
        %v3761 = vpack.c.b16 %v3749, %v3748
        %v3762 = vpack.c.b16 %v3751, %v3750
        %v3763 = vpack.c.b16 %v3753, %v3752
        %v3764 = vpack.c.b16 %v3755, %v3754
        %v3765 = vpack.c.b16 %v3757, %v3756
        %v3767 = vsel %vm476, %v3758, 0
        %v3770 = vsel %vm476, %v3759, 0
        %v3773 = vsel %vm476, %v3760, 0
        %v3776 = vsel %vm476, %v3761, 0
        %v3779 = vsel %vm476, %v3762, 0
        %v3782 = vsel %vm476, %v3763, 0
        %v3785 = vsel %vm476, %v3764, 0
        %v3788 = vsel %vm476, %v3765, 0
        %3790 = vmatprep.subr.bf16.mxu0 %v3723
        %3791 = vmatpush1.bf16.msra.mxu0 %v3722
        %3792 = vmatprep.subr.bf16.mxu0 %v3725
        %3793 = vmatpush1.bf16.msra.mxu0 %v3724
        %3794 = vmatprep.subr.bf16.mxu0 0
        %3795 = vmatpush1.bf16.msra.mxu0 0
        %3796 = vmatprep.subr.bf16.mxu0 0
        %3797 = vmatpush1.bf16.msra.mxu0 0
        %3798 = vmatprep.subr.bf16.mxu0 0
        %3799 = vmatpush1.bf16.msra.mxu0 0
        %3800 = vmatprep.subr.bf16.mxu0 0
        %3801 = vmatpush1.bf16.msra.mxu0 0
        %3802 = vmatprep.subr.bf16.mxu0 0
        %3803 = vmatpush1.bf16.msra.mxu0 0
        %3804 = vmatprep.subr.bf16.mxu0 0
        %3805 = vmatpush1.bf16.msra.mxu0 0
        %3806 = vmatprep.subr.bf16.mxu0 0
        %3807 = vmatpush1.bf16.msra.mxu0 0
        %3808 = vmatprep.subr.bf16.mxu0 0
        %3809 = vmatpush1.bf16.msra.mxu0 0
        %3810 = vmatprep.subr.bf16.mxu0 0
        %3811 = vmatpush1.bf16.msra.mxu0 0
        %3812 = vmatprep.subr.bf16.mxu0 0
        %3813 = vmatpush1.bf16.msra.mxu0 0
        %3814 = vmatprep.subr.bf16.mxu0 0
        %3815 = vmatpush1.bf16.msra.mxu0 0
        %3816 = vmatprep.subr.bf16.mxu0 0
        %3817 = vmatpush1.bf16.msra.mxu0 0
        %3818 = vmatprep.subr.bf16.mxu0 0
        %3819 = vmatpush1.bf16.msra.mxu0 0
        %3820 = vmatprep.subr.bf16.mxu0 0
        %3821 = vmatpush1.bf16.msra.mxu0 0
        %3822 = vmatprep.mubr.bf16.mxu0 0
        %3823 = vmatmul.mubr.bf16.gmra.mrb[0].mxu0 %v3767
        %v3824 = vpop.f32.mrb[0].mxu0
        %v3825 = vadd.f32 0.0, %v3824
        %v3826 = vpop.f32.mrb[0].mxu0
        %v3827 = vadd.f32 0.0, %v3826
        %v3828 = vpop.f32.mrb[0].mxu0
        %v3829 = vadd.f32 0.0, %v3828
        %v3830 = vpop.f32.mrb[0].mxu0
        %v3831 = vadd.f32 0.0, %v3830
        %3832 = vmatprep.mubr.bf16.mxu0 0
        %3833 = vmatmul.mubr.bf16.gmra.mrb[0].mxu0 %v3770
        %v3834 = vpop.f32.mrb[0].mxu0
        %v3835 = vadd.f32 0.0, %v3834
        %v3836 = vpop.f32.mrb[0].mxu0
        %v3837 = vadd.f32 0.0, %v3836
        %v3838 = vpop.f32.mrb[0].mxu0
        %v3839 = vadd.f32 0.0, %v3838
        %v3840 = vpop.f32.mrb[0].mxu0
        %v3841 = vadd.f32 0.0, %v3840
        %3842 = vmatprep.mubr.bf16.mxu0 0
        %3843 = vmatmul.mubr.bf16.gmra.mrb[0].mxu0 %v3773
        %v3844 = vpop.f32.mrb[0].mxu0
        %v3845 = vadd.f32 0.0, %v3844
        %v3846 = vpop.f32.mrb[0].mxu0
        %v3847 = vadd.f32 0.0, %v3846
        %v3848 = vpop.f32.mrb[0].mxu0
        %v3849 = vadd.f32 0.0, %v3848
        %v3850 = vpop.f32.mrb[0].mxu0
        %v3851 = vadd.f32 0.0, %v3850
        %3852 = vmatprep.mubr.bf16.mxu0 0
        %3853 = vmatmul.mubr.bf16.gmra.mrb[0].mxu0 %v3776
        %v3854 = vpop.f32.mrb[0].mxu0
        %v3855 = vadd.f32 0.0, %v3854
        %v3856 = vpop.f32.mrb[0].mxu0
        %v3857 = vadd.f32 0.0, %v3856
        %v3858 = vpop.f32.mrb[0].mxu0
        %v3859 = vadd.f32 0.0, %v3858
        %v3860 = vpop.f32.mrb[0].mxu0
        %v3861 = vadd.f32 0.0, %v3860
        %3862 = vmatprep.mubr.bf16.mxu0 0
        %3863 = vmatmul.mubr.bf16.gmra.mrb[0].mxu0 %v3779
        %v3864 = vpop.f32.mrb[0].mxu0
        %v3865 = vadd.f32 0.0, %v3864
        %v3866 = vpop.f32.mrb[0].mxu0
        %v3867 = vadd.f32 0.0, %v3866
        %v3868 = vpop.f32.mrb[0].mxu0
        %v3869 = vadd.f32 0.0, %v3868
        %v3870 = vpop.f32.mrb[0].mxu0
        %v3871 = vadd.f32 0.0, %v3870
        %3872 = vmatprep.mubr.bf16.mxu0 0
        %3873 = vmatmul.mubr.bf16.gmra.mrb[0].mxu0 %v3782
        %v3874 = vpop.f32.mrb[0].mxu0
        %v3875 = vadd.f32 0.0, %v3874
        %v3876 = vpop.f32.mrb[0].mxu0
        %v3877 = vadd.f32 0.0, %v3876
        %v3878 = vpop.f32.mrb[0].mxu0
        %v3879 = vadd.f32 0.0, %v3878
        %v3880 = vpop.f32.mrb[0].mxu0
        %v3881 = vadd.f32 0.0, %v3880
        %3882 = vmatprep.mubr.bf16.mxu0 0
        %3883 = vmatmul.mubr.bf16.gmra.mrb[0].mxu0 %v3785
        %v3884 = vpop.f32.mrb[0].mxu0
        %v3885 = vadd.f32 0.0, %v3884
        %v3886 = vpop.f32.mrb[0].mxu0
        %v3887 = vadd.f32 0.0, %v3886
        %v3888 = vpop.f32.mrb[0].mxu0
        %v3889 = vadd.f32 0.0, %v3888
        %v3890 = vpop.f32.mrb[0].mxu0
        %v3891 = vadd.f32 0.0, %v3890
        %3892 = vmatprep.mubr.bf16.mxu0 0
        %3893 = vmatmul.mubr.bf16.gmra.mrb[0].mxu0 %v3788
        %v3894 = vpop.f32.mrb[0].mxu0
        %v3895 = vadd.f32 0.0, %v3894
        %v3896 = vpop.f32.mrb[0].mxu0
        %v3897 = vadd.f32 0.0, %v3896
        %v3898 = vpop.f32.mrb[0].mxu0
        %v3899 = vadd.f32 0.0, %v3898
        %v3900 = vpop.f32.mrb[0].mxu0
        %v3901 = vadd.f32 0.0, %v3900
        %3902 = vdwg.mxu0
        %v3903 = vadd.f32 %v3673, %v3825
        %v3904 = vadd.f32 %v3674, %v3827
        %v3905 = vadd.f32 %v3675, %v3829
        %v3906 = vadd.f32 %v3676, %v3831
        %v3907 = vadd.f32 %v3677, %v3835
        %v3908 = vadd.f32 %v3678, %v3837
        %v3909 = vadd.f32 %v3679, %v3839
        %v3910 = vadd.f32 %v3680, %v3841
        %v3911 = vadd.f32 %v3681, %v3845
        %v3912 = vadd.f32 %v3682, %v3847
        %v3913 = vadd.f32 %v3683, %v3849
        %v3914 = vadd.f32 %v3684, %v3851
        %v3915 = vadd.f32 %v3685, %v3855
        %v3916 = vadd.f32 %v3686, %v3857
        %v3917 = vadd.f32 %v3687, %v3859
        %v3918 = vadd.f32 %v3688, %v3861
        %v3919 = vadd.f32 %v3689, %v3865
        %v3920 = vadd.f32 %v3690, %v3867
        %v3921 = vadd.f32 %v3691, %v3869
        %v3922 = vadd.f32 %v3692, %v3871
        %v3923 = vadd.f32 %v3693, %v3875
        %v3924 = vadd.f32 %v3694, %v3877
        %v3925 = vadd.f32 %v3695, %v3879
        %v3926 = vadd.f32 %v3696, %v3881
        %v3927 = vadd.f32 %v3697, %v3885
        %v3928 = vadd.f32 %v3698, %v3887
        %v3929 = vadd.f32 %v3699, %v3889
        %v3930 = vadd.f32 %v3700, %v3891
        %v3931 = vadd.f32 %v3701, %v3895
        %v3932 = vadd.f32 %v3702, %v3897
        %v3933 = vadd.f32 %v3703, %v3899
        %v3934 = vadd.f32 %v3704, %v3901
        %3935 = vrot.lane.b32.xlu0 %v311, 112
        %v3936 = vpop.permute.xlu0 %3935
        %3937 = vrot.lane.b32.xlu0 %v321, 112
        %v3938 = vpop.permute.xlu0 %3937
        %vm3939 = vcmask 916480
        %v3940 = vsel %vm3939, %v3936, %v3938
        %v3944 = vsel %vm3939, %v3938, %v3936
        %3945 = vrot.lane.b32.xlu0 %v312, 112
        %v3946 = vpop.permute.xlu0 %3945
        %3947 = vrot.lane.b32.xlu0 %v313, 112
        %v3948 = vpop.permute.xlu0 %3947
        %3949 = vrot.lane.b32.xlu0 %v314, 112
        %v3950 = vpop.permute.xlu0 %3949
        %3951 = vrot.lane.b32.xlu0 %v315, 112
        %v3952 = vpop.permute.xlu0 %3951
        %3953 = vrot.lane.b32.xlu0 %v316, 112
        %v3954 = vpop.permute.xlu0 %3953
        %3955 = vrot.lane.b32.xlu0 %v317, 112
        %v3956 = vpop.permute.xlu0 %3955
        %3957 = vrot.lane.b32.xlu0 %v318, 112
        %v3958 = vpop.permute.xlu0 %3957
        %3959 = vrot.lane.b32.xlu0 %v319, 112
        %v3960 = vpop.permute.xlu0 %3959
        %v3961 = vsel %vm3939, %v3946, %v3948
        %v3962 = vsel %vm3939, %v3950, %v3952
        %v3963 = vsel %vm3939, %v3954, %v3956
        %v3964 = vsel %vm3939, %v3958, %v3960
        %v3977 = vsel %vm3939, %v3948, %v3946
        %v3978 = vsel %vm3939, %v3952, %v3950
        %v3979 = vsel %vm3939, %v3956, %v3954
        %v3980 = vsel %vm3939, %v3960, %v3958
        %s3981 = scalar_lea.vmem %s4, 14
        %v3982 = vld [vmem:[%s3981] sm:$0x3]
        %v3984 = vlaneseq
        %v3985 = vshrl.u32 %v3984, 7
        %v3986 = vsub.s32 0, %v3985
        %v3987 = vrot.slane %v3982, %v3986
        %v3988 = vlaneseq
        %v3989 = vshrl.u32 %v3988, 7
        %v3990 = vsub.s32 1, %v3989
        %v3991 = vrot.slane %v3982, %v3990
        %v3994 = vmul.f32 %v3940, %v3987
        %v3995 = vmul.f32 %v3944, %v3991
        %v3996 = vmul.f32 %v3961, %v3987
        %v3997 = vmul.f32 %v3977, %v3991
        %v3998 = vmul.f32 %v3962, %v3987
        %v3999 = vmul.f32 %v3978, %v3991
        %v4000 = vmul.f32 %v3963, %v3987
        %v4001 = vmul.f32 %v3979, %v3991
        %v4002 = vmul.f32 %v3964, %v3987
        %v4003 = vmul.f32 %v3980, %v3991
        %s4004 = scalar_lea.vmem %s1, 448
        %v4005 = vld [vmem:[%s4004] sm:$0xf]
        %v4006 = vld [vmem:[%s4004 + $0x4] sm:$0xf]
        %v4007 = vld [vmem:[%s4004 + $0x8] sm:$0xf]
        %v4008 = vld [vmem:[%s4004 + $0xc] sm:$0xf]
        %v4009 = vld [vmem:[%s4004 + $0x10] sm:$0xf]
        %v4010 = vld [vmem:[%s4004 + $0x14] sm:$0xf]
        %v4011 = vld [vmem:[%s4004 + $0x18] sm:$0xf]
        %v4012 = vld [vmem:[%s4004 + $0x1c] sm:$0xf]
        %v4013 = vld [vmem:[%s4004 + $0x20] sm:$0xf]
        %v4014 = vld [vmem:[%s4004 + $0x24] sm:$0xf]
        %v4015 = vld [vmem:[%s4004 + $0x28] sm:$0xf]
        %v4016 = vld [vmem:[%s4004 + $0x2c] sm:$0xf]
        %v4017 = vld [vmem:[%s4004 + $0x30] sm:$0xf]
        %v4018 = vld [vmem:[%s4004 + $0x34] sm:$0xf]
        %v4019 = vld [vmem:[%s4004 + $0x38] sm:$0xf]
        %v4020 = vld [vmem:[%s4004 + $0x3c] sm:$0xf]
        %v4021 = vpack.c.bf16 %v3994, %v3994
        %v4022 = vpack.c.bf16 %v3995, %v3995
        %v4039 = vunpack.c.l.b16 %v4005
        %v4040 = vunpack.c.l.b16 %v4006
        %v4041 = vunpack.c.l.b16 %v4007
        %v4042 = vunpack.c.l.b16 %v4008
        %v4043 = vunpack.c.l.b16 %v4009
        %v4044 = vunpack.c.l.b16 %v4010
        %v4045 = vunpack.c.l.b16 %v4011
        %v4046 = vunpack.c.l.b16 %v4012
        %v4047 = vunpack.c.l.b16 %v4013
        %v4048 = vunpack.c.l.b16 %v4014
        %v4049 = vunpack.c.l.b16 %v4015
        %v4050 = vunpack.c.l.b16 %v4016
        %v4051 = vunpack.c.l.b16 %v4017
        %v4052 = vunpack.c.l.b16 %v4018
        %v4053 = vunpack.c.l.b16 %v4019
        %v4054 = vunpack.c.l.b16 %v4020
        %v4055 = vpack.c.b16 %v4040, %v4039
        %v4056 = vpack.c.b16 %v4042, %v4041
        %v4057 = vpack.c.b16 %v4044, %v4043
        %v4058 = vpack.c.b16 %v4046, %v4045
        %v4059 = vpack.c.b16 %v4048, %v4047
        %v4060 = vpack.c.b16 %v4050, %v4049
        %v4061 = vpack.c.b16 %v4052, %v4051
        %v4062 = vpack.c.b16 %v4054, %v4053
        %v4064 = vsel %vm654, %v4055, 0
        %v4067 = vsel %vm654, %v4056, 0
        %v4070 = vsel %vm654, %v4057, 0
        %v4073 = vsel %vm654, %v4058, 0
        %v4076 = vsel %vm654, %v4059, 0
        %v4079 = vsel %vm654, %v4060, 0
        %v4082 = vsel %vm654, %v4061, 0
        %v4085 = vsel %vm654, %v4062, 0
        %v4088 = vsel %vm679, %v4021, 0
        %v4091 = vsel %vm679, %v4022, 0
        %4093 = vmatprep.subr.bf16.mxu0 %v4091
        %4094 = vmatpush1.bf16.msra.mxu0 %v4088
        %4095 = vmatprep.subr.bf16.mxu0 0
        %4096 = vmatpush1.bf16.msra.mxu0 0
        %4097 = vmatprep.subr.bf16.mxu0 0
        %4098 = vmatpush1.bf16.msra.mxu0 0
        %4099 = vmatprep.subr.bf16.mxu0 0
        %4100 = vmatpush1.bf16.msra.mxu0 0
        %4101 = vmatprep.subr.bf16.mxu0 0
        %4102 = vmatpush1.bf16.msra.mxu0 0
        %4103 = vmatprep.subr.bf16.mxu0 0
        %4104 = vmatpush1.bf16.msra.mxu0 0
        %4105 = vmatprep.subr.bf16.mxu0 0
        %4106 = vmatpush1.bf16.msra.mxu0 0
        %4107 = vmatprep.subr.bf16.mxu0 0
        %4108 = vmatpush1.bf16.msra.mxu0 0
        %4109 = vmatprep.subr.bf16.mxu0 0
        %4110 = vmatpush1.bf16.msra.mxu0 0
        %4111 = vmatprep.subr.bf16.mxu0 0
        %4112 = vmatpush1.bf16.msra.mxu0 0
        %4113 = vmatprep.subr.bf16.mxu0 0
        %4114 = vmatpush1.bf16.msra.mxu0 0
        %4115 = vmatprep.subr.bf16.mxu0 0
        %4116 = vmatpush1.bf16.msra.mxu0 0
        %4117 = vmatprep.subr.bf16.mxu0 0
        %4118 = vmatpush1.bf16.msra.mxu0 0
        %4119 = vmatprep.subr.bf16.mxu0 0
        %4120 = vmatpush1.bf16.msra.mxu0 0
        %4121 = vmatprep.subr.bf16.mxu0 0
        %4122 = vmatpush1.bf16.msra.mxu0 0
        %4123 = vmatprep.subr.bf16.mxu0 0
        %4124 = vmatpush1.bf16.msra.mxu0 0
        %4125 = vmatprep.mubr.bf16.mxu0 0
        %4126 = vmatmul.mubr.bf16.gmra.mrb[0].mxu0 %v4064
        %v4127 = vpop.f32.mrb[0].mxu0
        %v4128 = vadd.f32 0.0, %v4127
        %v4129 = vpop.f32.mrb[0].mxu0
        %v4130 = vadd.f32 0.0, %v4129
        %v4131 = vpop.f32.mrb[0].mxu0
        %v4132 = vadd.f32 0.0, %v4131
        %v4133 = vpop.f32.mrb[0].mxu0
        %v4134 = vadd.f32 0.0, %v4133
        %4135 = vmatprep.mubr.bf16.mxu0 0
        %4136 = vmatmul.mubr.bf16.gmra.mrb[0].mxu0 %v4067
        %v4137 = vpop.f32.mrb[0].mxu0
        %v4138 = vadd.f32 0.0, %v4137
        %v4139 = vpop.f32.mrb[0].mxu0
        %v4140 = vadd.f32 0.0, %v4139
        %v4141 = vpop.f32.mrb[0].mxu0
        %v4142 = vadd.f32 0.0, %v4141
        %v4143 = vpop.f32.mrb[0].mxu0
        %v4144 = vadd.f32 0.0, %v4143
        %4145 = vmatprep.mubr.bf16.mxu0 0
        %4146 = vmatmul.mubr.bf16.gmra.mrb[0].mxu0 %v4070
        %v4147 = vpop.f32.mrb[0].mxu0
        %v4148 = vadd.f32 0.0, %v4147
        %v4149 = vpop.f32.mrb[0].mxu0
        %v4150 = vadd.f32 0.0, %v4149
        %v4151 = vpop.f32.mrb[0].mxu0
        %v4152 = vadd.f32 0.0, %v4151
        %v4153 = vpop.f32.mrb[0].mxu0
        %v4154 = vadd.f32 0.0, %v4153
        %4155 = vmatprep.mubr.bf16.mxu0 0
        %4156 = vmatmul.mubr.bf16.gmra.mrb[0].mxu0 %v4073
        %v4157 = vpop.f32.mrb[0].mxu0
        %v4158 = vadd.f32 0.0, %v4157
        %v4159 = vpop.f32.mrb[0].mxu0
        %v4160 = vadd.f32 0.0, %v4159
        %v4161 = vpop.f32.mrb[0].mxu0
        %v4162 = vadd.f32 0.0, %v4161
        %v4163 = vpop.f32.mrb[0].mxu0
        %v4164 = vadd.f32 0.0, %v4163
        %4165 = vmatprep.mubr.bf16.mxu0 0
        %4166 = vmatmul.mubr.bf16.gmra.mrb[0].mxu0 %v4076
        %v4167 = vpop.f32.mrb[0].mxu0
        %v4168 = vadd.f32 0.0, %v4167
        %v4169 = vpop.f32.mrb[0].mxu0
        %v4170 = vadd.f32 0.0, %v4169
        %v4171 = vpop.f32.mrb[0].mxu0
        %v4172 = vadd.f32 0.0, %v4171
        %v4173 = vpop.f32.mrb[0].mxu0
        %v4174 = vadd.f32 0.0, %v4173
        %4175 = vmatprep.mubr.bf16.mxu0 0
        %4176 = vmatmul.mubr.bf16.gmra.mrb[0].mxu0 %v4079
        %v4177 = vpop.f32.mrb[0].mxu0
        %v4178 = vadd.f32 0.0, %v4177
        %v4179 = vpop.f32.mrb[0].mxu0
        %v4180 = vadd.f32 0.0, %v4179
        %v4181 = vpop.f32.mrb[0].mxu0
        %v4182 = vadd.f32 0.0, %v4181
        %v4183 = vpop.f32.mrb[0].mxu0
        %v4184 = vadd.f32 0.0, %v4183
        %4185 = vmatprep.mubr.bf16.mxu0 0
        %4186 = vmatmul.mubr.bf16.gmra.mrb[0].mxu0 %v4082
        %v4187 = vpop.f32.mrb[0].mxu0
        %v4188 = vadd.f32 0.0, %v4187
        %v4189 = vpop.f32.mrb[0].mxu0
        %v4190 = vadd.f32 0.0, %v4189
        %v4191 = vpop.f32.mrb[0].mxu0
        %v4192 = vadd.f32 0.0, %v4191
        %v4193 = vpop.f32.mrb[0].mxu0
        %v4194 = vadd.f32 0.0, %v4193
        %4195 = vmatprep.mubr.bf16.mxu0 0
        %4196 = vmatmul.mubr.bf16.gmra.mrb[0].mxu0 %v4085
        %v4197 = vpop.f32.mrb[0].mxu0
        %v4198 = vadd.f32 0.0, %v4197
        %v4199 = vpop.f32.mrb[0].mxu0
        %v4200 = vadd.f32 0.0, %v4199
        %v4201 = vpop.f32.mrb[0].mxu0
        %v4202 = vadd.f32 0.0, %v4201
        %v4203 = vpop.f32.mrb[0].mxu0
        %v4204 = vadd.f32 0.0, %v4203
        %4205 = vdwg.mxu0
        %v4206 = vadd.f32 %v3903, %v4128
        %v4207 = vadd.f32 %v3904, %v4130
        %v4208 = vadd.f32 %v3905, %v4132
        %v4209 = vadd.f32 %v3906, %v4134
        %v4210 = vadd.f32 %v3907, %v4138
        %v4211 = vadd.f32 %v3908, %v4140
        %v4212 = vadd.f32 %v3909, %v4142
        %v4213 = vadd.f32 %v3910, %v4144
        %v4214 = vadd.f32 %v3911, %v4148
        %v4215 = vadd.f32 %v3912, %v4150
        %v4216 = vadd.f32 %v3913, %v4152
        %v4217 = vadd.f32 %v3914, %v4154
        %v4218 = vadd.f32 %v3915, %v4158
        %v4219 = vadd.f32 %v3916, %v4160
        %v4220 = vadd.f32 %v3917, %v4162
        %v4221 = vadd.f32 %v3918, %v4164
        %v4222 = vadd.f32 %v3919, %v4168
        %v4223 = vadd.f32 %v3920, %v4170
        %v4224 = vadd.f32 %v3921, %v4172
        %v4225 = vadd.f32 %v3922, %v4174
        %v4226 = vadd.f32 %v3923, %v4178
        %v4227 = vadd.f32 %v3924, %v4180
        %v4228 = vadd.f32 %v3925, %v4182
        %v4229 = vadd.f32 %v3926, %v4184
        %v4230 = vadd.f32 %v3927, %v4188
        %v4231 = vadd.f32 %v3928, %v4190
        %v4232 = vadd.f32 %v3929, %v4192
        %v4233 = vadd.f32 %v3930, %v4194
        %v4234 = vadd.f32 %v3931, %v4198
        %v4235 = vadd.f32 %v3932, %v4200
        %v4236 = vadd.f32 %v3933, %v4202
        %v4237 = vadd.f32 %v3934, %v4204
        %s4238 = scalar_lea.vmem %s2, 448
        %v4239 = vld [vmem:[%s4238] sm:$0xf]
        %v4240 = vld [vmem:[%s4238 + $0x4] sm:$0xf]
        %v4241 = vld [vmem:[%s4238 + $0x8] sm:$0xf]
        %v4242 = vld [vmem:[%s4238 + $0xc] sm:$0xf]
        %v4243 = vld [vmem:[%s4238 + $0x10] sm:$0xf]
        %v4244 = vld [vmem:[%s4238 + $0x14] sm:$0xf]
        %v4245 = vld [vmem:[%s4238 + $0x18] sm:$0xf]
        %v4246 = vld [vmem:[%s4238 + $0x1c] sm:$0xf]
        %v4247 = vld [vmem:[%s4238 + $0x20] sm:$0xf]
        %v4248 = vld [vmem:[%s4238 + $0x24] sm:$0xf]
        %v4249 = vld [vmem:[%s4238 + $0x28] sm:$0xf]
        %v4250 = vld [vmem:[%s4238 + $0x2c] sm:$0xf]
        %v4251 = vld [vmem:[%s4238 + $0x30] sm:$0xf]
        %v4252 = vld [vmem:[%s4238 + $0x34] sm:$0xf]
        %v4253 = vld [vmem:[%s4238 + $0x38] sm:$0xf]
        %v4254 = vld [vmem:[%s4238 + $0x3c] sm:$0xf]
        %v4255 = vpack.c.bf16 %v3998, %v3996
        %v4256 = vpack.c.bf16 %v3999, %v3997
        %v4257 = vpack.c.bf16 %v4002, %v4000
        %v4258 = vpack.c.bf16 %v4003, %v4001
        %v4275 = vunpack.c.l.b16 %v4239
        %v4276 = vunpack.c.l.b16 %v4240
        %v4277 = vunpack.c.l.b16 %v4241
        %v4278 = vunpack.c.l.b16 %v4242
        %v4279 = vunpack.c.l.b16 %v4243
        %v4280 = vunpack.c.l.b16 %v4244
        %v4281 = vunpack.c.l.b16 %v4245
        %v4282 = vunpack.c.l.b16 %v4246
        %v4283 = vunpack.c.l.b16 %v4247
        %v4284 = vunpack.c.l.b16 %v4248
        %v4285 = vunpack.c.l.b16 %v4249
        %v4286 = vunpack.c.l.b16 %v4250
        %v4287 = vunpack.c.l.b16 %v4251
        %v4288 = vunpack.c.l.b16 %v4252
        %v4289 = vunpack.c.l.b16 %v4253
        %v4290 = vunpack.c.l.b16 %v4254
        %v4291 = vpack.c.b16 %v4276, %v4275
        %v4292 = vpack.c.b16 %v4278, %v4277
        %v4293 = vpack.c.b16 %v4280, %v4279
        %v4294 = vpack.c.b16 %v4282, %v4281
        %v4295 = vpack.c.b16 %v4284, %v4283
        %v4296 = vpack.c.b16 %v4286, %v4285
        %v4297 = vpack.c.b16 %v4288, %v4287
        %v4298 = vpack.c.b16 %v4290, %v4289
        %v4300 = vsel %vm476, %v4291, 0
        %v4303 = vsel %vm476, %v4292, 0
        %v4306 = vsel %vm476, %v4293, 0
        %v4309 = vsel %vm476, %v4294, 0
        %v4312 = vsel %vm476, %v4295, 0
        %v4315 = vsel %vm476, %v4296, 0
        %v4318 = vsel %vm476, %v4297, 0
        %v4321 = vsel %vm476, %v4298, 0
        %4323 = vmatprep.subr.bf16.mxu0 %v4256
        %4324 = vmatpush1.bf16.msra.mxu0 %v4255
        %4325 = vmatprep.subr.bf16.mxu0 %v4258
        %4326 = vmatpush1.bf16.msra.mxu0 %v4257
        %4327 = vmatprep.subr.bf16.mxu0 0
        %4328 = vmatpush1.bf16.msra.mxu0 0
        %4329 = vmatprep.subr.bf16.mxu0 0
        %4330 = vmatpush1.bf16.msra.mxu0 0
        %4331 = vmatprep.subr.bf16.mxu0 0
        %4332 = vmatpush1.bf16.msra.mxu0 0
        %4333 = vmatprep.subr.bf16.mxu0 0
        %4334 = vmatpush1.bf16.msra.mxu0 0
        %4335 = vmatprep.subr.bf16.mxu0 0
        %4336 = vmatpush1.bf16.msra.mxu0 0
        %4337 = vmatprep.subr.bf16.mxu0 0
        %4338 = vmatpush1.bf16.msra.mxu0 0
        %4339 = vmatprep.subr.bf16.mxu0 0
        %4340 = vmatpush1.bf16.msra.mxu0 0
        %4341 = vmatprep.subr.bf16.mxu0 0
        %4342 = vmatpush1.bf16.msra.mxu0 0
        %4343 = vmatprep.subr.bf16.mxu0 0
        %4344 = vmatpush1.bf16.msra.mxu0 0
        %4345 = vmatprep.subr.bf16.mxu0 0
        %4346 = vmatpush1.bf16.msra.mxu0 0
        %4347 = vmatprep.subr.bf16.mxu0 0
        %4348 = vmatpush1.bf16.msra.mxu0 0
        %4349 = vmatprep.subr.bf16.mxu0 0
        %4350 = vmatpush1.bf16.msra.mxu0 0
        %4351 = vmatprep.subr.bf16.mxu0 0
        %4352 = vmatpush1.bf16.msra.mxu0 0
        %4353 = vmatprep.subr.bf16.mxu0 0
        %4354 = vmatpush1.bf16.msra.mxu0 0
        %4355 = vmatprep.mubr.bf16.mxu0 0
        %4356 = vmatmul.mubr.bf16.gmra.mrb[0].mxu0 %v4300
        %v4357 = vpop.f32.mrb[0].mxu0
        %v4358 = vadd.f32 0.0, %v4357
        %v4359 = vpop.f32.mrb[0].mxu0
        %v4360 = vadd.f32 0.0, %v4359
        %v4361 = vpop.f32.mrb[0].mxu0
        %v4362 = vadd.f32 0.0, %v4361
        %v4363 = vpop.f32.mrb[0].mxu0
        %v4364 = vadd.f32 0.0, %v4363
        %4365 = vmatprep.mubr.bf16.mxu0 0
        %4366 = vmatmul.mubr.bf16.gmra.mrb[0].mxu0 %v4303
        %v4367 = vpop.f32.mrb[0].mxu0
        %v4368 = vadd.f32 0.0, %v4367
        %v4369 = vpop.f32.mrb[0].mxu0
        %v4370 = vadd.f32 0.0, %v4369
        %v4371 = vpop.f32.mrb[0].mxu0
        %v4372 = vadd.f32 0.0, %v4371
        %v4373 = vpop.f32.mrb[0].mxu0
        %v4374 = vadd.f32 0.0, %v4373
        %4375 = vmatprep.mubr.bf16.mxu0 0
        %4376 = vmatmul.mubr.bf16.gmra.mrb[0].mxu0 %v4306
        %v4377 = vpop.f32.mrb[0].mxu0
        %v4378 = vadd.f32 0.0, %v4377
        %v4379 = vpop.f32.mrb[0].mxu0
        %v4380 = vadd.f32 0.0, %v4379
        %v4381 = vpop.f32.mrb[0].mxu0
        %v4382 = vadd.f32 0.0, %v4381
        %v4383 = vpop.f32.mrb[0].mxu0
        %v4384 = vadd.f32 0.0, %v4383
        %4385 = vmatprep.mubr.bf16.mxu0 0
        %4386 = vmatmul.mubr.bf16.gmra.mrb[0].mxu0 %v4309
        %v4387 = vpop.f32.mrb[0].mxu0
        %v4388 = vadd.f32 0.0, %v4387
        %v4389 = vpop.f32.mrb[0].mxu0
        %v4390 = vadd.f32 0.0, %v4389
        %v4391 = vpop.f32.mrb[0].mxu0
        %v4392 = vadd.f32 0.0, %v4391
        %v4393 = vpop.f32.mrb[0].mxu0
        %v4394 = vadd.f32 0.0, %v4393
        %4395 = vmatprep.mubr.bf16.mxu0 0
        %4396 = vmatmul.mubr.bf16.gmra.mrb[0].mxu0 %v4312
        %v4397 = vpop.f32.mrb[0].mxu0
        %v4398 = vadd.f32 0.0, %v4397
        %v4399 = vpop.f32.mrb[0].mxu0
        %v4400 = vadd.f32 0.0, %v4399
        %v4401 = vpop.f32.mrb[0].mxu0
        %v4402 = vadd.f32 0.0, %v4401
        %v4403 = vpop.f32.mrb[0].mxu0
        %v4404 = vadd.f32 0.0, %v4403
        %4405 = vmatprep.mubr.bf16.mxu0 0
        %4406 = vmatmul.mubr.bf16.gmra.mrb[0].mxu0 %v4315
        %v4407 = vpop.f32.mrb[0].mxu0
        %v4408 = vadd.f32 0.0, %v4407
        %v4409 = vpop.f32.mrb[0].mxu0
        %v4410 = vadd.f32 0.0, %v4409
        %v4411 = vpop.f32.mrb[0].mxu0
        %v4412 = vadd.f32 0.0, %v4411
        %v4413 = vpop.f32.mrb[0].mxu0
        %v4414 = vadd.f32 0.0, %v4413
        %4415 = vmatprep.mubr.bf16.mxu0 0
        %4416 = vmatmul.mubr.bf16.gmra.mrb[0].mxu0 %v4318
        %v4417 = vpop.f32.mrb[0].mxu0
        %v4418 = vadd.f32 0.0, %v4417
        %v4419 = vpop.f32.mrb[0].mxu0
        %v4420 = vadd.f32 0.0, %v4419
        %v4421 = vpop.f32.mrb[0].mxu0
        %v4422 = vadd.f32 0.0, %v4421
        %v4423 = vpop.f32.mrb[0].mxu0
        %v4424 = vadd.f32 0.0, %v4423
        %4425 = vmatprep.mubr.bf16.mxu0 0
        %4426 = vmatmul.mubr.bf16.gmra.mrb[0].mxu0 %v4321
        %v4427 = vpop.f32.mrb[0].mxu0
        %v4428 = vadd.f32 0.0, %v4427
        %v4429 = vpop.f32.mrb[0].mxu0
        %v4430 = vadd.f32 0.0, %v4429
        %v4431 = vpop.f32.mrb[0].mxu0
        %v4432 = vadd.f32 0.0, %v4431
        %v4433 = vpop.f32.mrb[0].mxu0
        %v4434 = vadd.f32 0.0, %v4433
        %4435 = vdwg.mxu0
        %v4436 = vadd.f32 %v4206, %v4358
        %v4437 = vadd.f32 %v4207, %v4360
        %v4438 = vadd.f32 %v4208, %v4362
        %v4439 = vadd.f32 %v4209, %v4364
        %v4440 = vadd.f32 %v4210, %v4368
        %v4441 = vadd.f32 %v4211, %v4370
        %v4442 = vadd.f32 %v4212, %v4372
        %v4443 = vadd.f32 %v4213, %v4374
        %v4444 = vadd.f32 %v4214, %v4378
        %v4445 = vadd.f32 %v4215, %v4380
        %v4446 = vadd.f32 %v4216, %v4382
        %v4447 = vadd.f32 %v4217, %v4384
        %v4448 = vadd.f32 %v4218, %v4388
        %v4449 = vadd.f32 %v4219, %v4390
        %v4450 = vadd.f32 %v4220, %v4392
        %v4451 = vadd.f32 %v4221, %v4394
        %v4452 = vadd.f32 %v4222, %v4398
        %v4453 = vadd.f32 %v4223, %v4400
        %v4454 = vadd.f32 %v4224, %v4402
        %v4455 = vadd.f32 %v4225, %v4404
        %v4456 = vadd.f32 %v4226, %v4408
        %v4457 = vadd.f32 %v4227, %v4410
        %v4458 = vadd.f32 %v4228, %v4412
        %v4459 = vadd.f32 %v4229, %v4414
        %v4460 = vadd.f32 %v4230, %v4418
        %v4461 = vadd.f32 %v4231, %v4420
        %v4462 = vadd.f32 %v4232, %v4422
        %v4463 = vadd.f32 %v4233, %v4424
        %v4464 = vadd.f32 %v4234, %v4428
        %v4465 = vadd.f32 %v4235, %v4430
        %v4466 = vadd.f32 %v4236, %v4432
        %v4467 = vadd.f32 %v4237, %v4434
        %4468 = vrot.lane.b32.xlu0 %v311, 111
        %v4469 = vpop.permute.xlu0 %4468
        %4470 = vrot.lane.b32.xlu0 %v321, 111
        %v4471 = vpop.permute.xlu0 %4470
        %vm4472 = vcmask 908288
        %v4473 = vsel %vm4472, %v4469, %v4471
        %v4477 = vsel %vm4472, %v4471, %v4469
        %4478 = vrot.lane.b32.xlu0 %v312, 111
        %v4479 = vpop.permute.xlu0 %4478
        %4480 = vrot.lane.b32.xlu0 %v313, 111
        %v4481 = vpop.permute.xlu0 %4480
        %4482 = vrot.lane.b32.xlu0 %v314, 111
        %v4483 = vpop.permute.xlu0 %4482
        %4484 = vrot.lane.b32.xlu0 %v315, 111
        %v4485 = vpop.permute.xlu0 %4484
        %4486 = vrot.lane.b32.xlu0 %v316, 111
        %v4487 = vpop.permute.xlu0 %4486
        %4488 = vrot.lane.b32.xlu0 %v317, 111
        %v4489 = vpop.permute.xlu0 %4488
        %4490 = vrot.lane.b32.xlu0 %v318, 111
        %v4491 = vpop.permute.xlu0 %4490
        %4492 = vrot.lane.b32.xlu0 %v319, 111
        %v4493 = vpop.permute.xlu0 %4492
        %v4494 = vsel %vm4472, %v4479, %v4481
        %v4495 = vsel %vm4472, %v4483, %v4485
        %v4496 = vsel %vm4472, %v4487, %v4489
        %v4497 = vsel %vm4472, %v4491, %v4493
        %v4510 = vsel %vm4472, %v4481, %v4479
        %v4511 = vsel %vm4472, %v4485, %v4483
        %v4512 = vsel %vm4472, %v4489, %v4487
        %v4513 = vsel %vm4472, %v4493, %v4491
        %s4514 = scalar_lea.vmem %s4, 16
        %v4515 = vld [vmem:[%s4514] sm:$0x3]
        %v4517 = vlaneseq
        %v4518 = vshrl.u32 %v4517, 7
        %v4519 = vsub.s32 0, %v4518
        %v4520 = vrot.slane %v4515, %v4519
        %v4521 = vlaneseq
        %v4522 = vshrl.u32 %v4521, 7
        %v4523 = vsub.s32 1, %v4522
        %v4524 = vrot.slane %v4515, %v4523
        %v4527 = vmul.f32 %v4473, %v4520
        %v4528 = vmul.f32 %v4477, %v4524
        %v4529 = vmul.f32 %v4494, %v4520
        %v4530 = vmul.f32 %v4510, %v4524
        %v4531 = vmul.f32 %v4495, %v4520
        %v4532 = vmul.f32 %v4511, %v4524
        %v4533 = vmul.f32 %v4496, %v4520
        %v4534 = vmul.f32 %v4512, %v4524
        %v4535 = vmul.f32 %v4497, %v4520
        %v4536 = vmul.f32 %v4513, %v4524
        %s4537 = scalar_lea.vmem %s1, 512
        %v4538 = vld [vmem:[%s4537] sm:$0xf]
        %v4539 = vld [vmem:[%s4537 + $0x4] sm:$0xf]
        %v4540 = vld [vmem:[%s4537 + $0x8] sm:$0xf]
        %v4541 = vld [vmem:[%s4537 + $0xc] sm:$0xf]
        %v4542 = vld [vmem:[%s4537 + $0x10] sm:$0xf]
        %v4543 = vld [vmem:[%s4537 + $0x14] sm:$0xf]
        %v4544 = vld [vmem:[%s4537 + $0x18] sm:$0xf]
        %v4545 = vld [vmem:[%s4537 + $0x1c] sm:$0xf]
        %v4546 = vld [vmem:[%s4537 + $0x20] sm:$0xf]
        %v4547 = vld [vmem:[%s4537 + $0x24] sm:$0xf]
        %v4548 = vld [vmem:[%s4537 + $0x28] sm:$0xf]
        %v4549 = vld [vmem:[%s4537 + $0x2c] sm:$0xf]
        %v4550 = vld [vmem:[%s4537 + $0x30] sm:$0xf]
        %v4551 = vld [vmem:[%s4537 + $0x34] sm:$0xf]
        %v4552 = vld [vmem:[%s4537 + $0x38] sm:$0xf]
        %v4553 = vld [vmem:[%s4537 + $0x3c] sm:$0xf]
        %v4554 = vpack.c.bf16 %v4527, %v4527
        %v4555 = vpack.c.bf16 %v4528, %v4528
        %v4572 = vunpack.c.l.b16 %v4538
        %v4573 = vunpack.c.l.b16 %v4539
        %v4574 = vunpack.c.l.b16 %v4540
        %v4575 = vunpack.c.l.b16 %v4541
        %v4576 = vunpack.c.l.b16 %v4542
        %v4577 = vunpack.c.l.b16 %v4543
        %v4578 = vunpack.c.l.b16 %v4544
        %v4579 = vunpack.c.l.b16 %v4545
        %v4580 = vunpack.c.l.b16 %v4546
        %v4581 = vunpack.c.l.b16 %v4547
        %v4582 = vunpack.c.l.b16 %v4548
        %v4583 = vunpack.c.l.b16 %v4549
        %v4584 = vunpack.c.l.b16 %v4550
        %v4585 = vunpack.c.l.b16 %v4551
        %v4586 = vunpack.c.l.b16 %v4552
        %v4587 = vunpack.c.l.b16 %v4553
        %v4588 = vpack.c.b16 %v4573, %v4572
        %v4589 = vpack.c.b16 %v4575, %v4574
        %v4590 = vpack.c.b16 %v4577, %v4576
        %v4591 = vpack.c.b16 %v4579, %v4578
        %v4592 = vpack.c.b16 %v4581, %v4580
        %v4593 = vpack.c.b16 %v4583, %v4582
        %v4594 = vpack.c.b16 %v4585, %v4584
        %v4595 = vpack.c.b16 %v4587, %v4586
        %v4597 = vsel %vm654, %v4588, 0
        %v4600 = vsel %vm654, %v4589, 0
        %v4603 = vsel %vm654, %v4590, 0
        %v4606 = vsel %vm654, %v4591, 0
        %v4609 = vsel %vm654, %v4592, 0
        %v4612 = vsel %vm654, %v4593, 0
        %v4615 = vsel %vm654, %v4594, 0
        %v4618 = vsel %vm654, %v4595, 0
        %v4621 = vsel %vm679, %v4554, 0
        %v4624 = vsel %vm679, %v4555, 0
        %4626 = vmatprep.subr.bf16.mxu0 %v4624
        %4627 = vmatpush1.bf16.msra.mxu0 %v4621
        %4628 = vmatprep.subr.bf16.mxu0 0
        %4629 = vmatpush1.bf16.msra.mxu0 0
        %4630 = vmatprep.subr.bf16.mxu0 0
        %4631 = vmatpush1.bf16.msra.mxu0 0
        %4632 = vmatprep.subr.bf16.mxu0 0
        %4633 = vmatpush1.bf16.msra.mxu0 0
        %4634 = vmatprep.subr.bf16.mxu0 0
        %4635 = vmatpush1.bf16.msra.mxu0 0
        %4636 = vmatprep.subr.bf16.mxu0 0
        %4637 = vmatpush1.bf16.msra.mxu0 0
        %4638 = vmatprep.subr.bf16.mxu0 0
        %4639 = vmatpush1.bf16.msra.mxu0 0
        %4640 = vmatprep.subr.bf16.mxu0 0
        %4641 = vmatpush1.bf16.msra.mxu0 0
        %4642 = vmatprep.subr.bf16.mxu0 0
        %4643 = vmatpush1.bf16.msra.mxu0 0
        %4644 = vmatprep.subr.bf16.mxu0 0
        %4645 = vmatpush1.bf16.msra.mxu0 0
        %4646 = vmatprep.subr.bf16.mxu0 0
        %4647 = vmatpush1.bf16.msra.mxu0 0
        %4648 = vmatprep.subr.bf16.mxu0 0
        %4649 = vmatpush1.bf16.msra.mxu0 0
        %4650 = vmatprep.subr.bf16.mxu0 0
        %4651 = vmatpush1.bf16.msra.mxu0 0
        %4652 = vmatprep.subr.bf16.mxu0 0
        %4653 = vmatpush1.bf16.msra.mxu0 0
        %4654 = vmatprep.subr.bf16.mxu0 0
        %4655 = vmatpush1.bf16.msra.mxu0 0
        %4656 = vmatprep.subr.bf16.mxu0 0
        %4657 = vmatpush1.bf16.msra.mxu0 0
        %4658 = vmatprep.mubr.bf16.mxu0 0
        %4659 = vmatmul.mubr.bf16.gmra.mrb[0].mxu0 %v4597
        %v4660 = vpop.f32.mrb[0].mxu0
        %v4661 = vadd.f32 0.0, %v4660
        %v4662 = vpop.f32.mrb[0].mxu0
        %v4663 = vadd.f32 0.0, %v4662
        %v4664 = vpop.f32.mrb[0].mxu0
        %v4665 = vadd.f32 0.0, %v4664
        %v4666 = vpop.f32.mrb[0].mxu0
        %v4667 = vadd.f32 0.0, %v4666
        %4668 = vmatprep.mubr.bf16.mxu0 0
        %4669 = vmatmul.mubr.bf16.gmra.mrb[0].mxu0 %v4600
        %v4670 = vpop.f32.mrb[0].mxu0
        %v4671 = vadd.f32 0.0, %v4670
        %v4672 = vpop.f32.mrb[0].mxu0
        %v4673 = vadd.f32 0.0, %v4672
        %v4674 = vpop.f32.mrb[0].mxu0
        %v4675 = vadd.f32 0.0, %v4674
        %v4676 = vpop.f32.mrb[0].mxu0
        %v4677 = vadd.f32 0.0, %v4676
        %4678 = vmatprep.mubr.bf16.mxu0 0
        %4679 = vmatmul.mubr.bf16.gmra.mrb[0].mxu0 %v4603
        %v4680 = vpop.f32.mrb[0].mxu0
        %v4681 = vadd.f32 0.0, %v4680
        %v4682 = vpop.f32.mrb[0].mxu0
        %v4683 = vadd.f32 0.0, %v4682
        %v4684 = vpop.f32.mrb[0].mxu0
        %v4685 = vadd.f32 0.0, %v4684
        %v4686 = vpop.f32.mrb[0].mxu0
        %v4687 = vadd.f32 0.0, %v4686
        %4688 = vmatprep.mubr.bf16.mxu0 0
        %4689 = vmatmul.mubr.bf16.gmra.mrb[0].mxu0 %v4606
        %v4690 = vpop.f32.mrb[0].mxu0
        %v4691 = vadd.f32 0.0, %v4690
        %v4692 = vpop.f32.mrb[0].mxu0
        %v4693 = vadd.f32 0.0, %v4692
        %v4694 = vpop.f32.mrb[0].mxu0
        %v4695 = vadd.f32 0.0, %v4694
        %v4696 = vpop.f32.mrb[0].mxu0
        %v4697 = vadd.f32 0.0, %v4696
        %4698 = vmatprep.mubr.bf16.mxu0 0
        %4699 = vmatmul.mubr.bf16.gmra.mrb[0].mxu0 %v4609
        %v4700 = vpop.f32.mrb[0].mxu0
        %v4701 = vadd.f32 0.0, %v4700
        %v4702 = vpop.f32.mrb[0].mxu0
        %v4703 = vadd.f32 0.0, %v4702
        %v4704 = vpop.f32.mrb[0].mxu0
        %v4705 = vadd.f32 0.0, %v4704
        %v4706 = vpop.f32.mrb[0].mxu0
        %v4707 = vadd.f32 0.0, %v4706
        %4708 = vmatprep.mubr.bf16.mxu0 0
        %4709 = vmatmul.mubr.bf16.gmra.mrb[0].mxu0 %v4612
        %v4710 = vpop.f32.mrb[0].mxu0
        %v4711 = vadd.f32 0.0, %v4710
        %v4712 = vpop.f32.mrb[0].mxu0
        %v4713 = vadd.f32 0.0, %v4712
        %v4714 = vpop.f32.mrb[0].mxu0
        %v4715 = vadd.f32 0.0, %v4714
        %v4716 = vpop.f32.mrb[0].mxu0
        %v4717 = vadd.f32 0.0, %v4716
        %4718 = vmatprep.mubr.bf16.mxu0 0
        %4719 = vmatmul.mubr.bf16.gmra.mrb[0].mxu0 %v4615
        %v4720 = vpop.f32.mrb[0].mxu0
        %v4721 = vadd.f32 0.0, %v4720
        %v4722 = vpop.f32.mrb[0].mxu0
        %v4723 = vadd.f32 0.0, %v4722
        %v4724 = vpop.f32.mrb[0].mxu0
        %v4725 = vadd.f32 0.0, %v4724
        %v4726 = vpop.f32.mrb[0].mxu0
        %v4727 = vadd.f32 0.0, %v4726
        %4728 = vmatprep.mubr.bf16.mxu0 0
        %4729 = vmatmul.mubr.bf16.gmra.mrb[0].mxu0 %v4618
        %v4730 = vpop.f32.mrb[0].mxu0
        %v4731 = vadd.f32 0.0, %v4730
        %v4732 = vpop.f32.mrb[0].mxu0
        %v4733 = vadd.f32 0.0, %v4732
        %v4734 = vpop.f32.mrb[0].mxu0
        %v4735 = vadd.f32 0.0, %v4734
        %v4736 = vpop.f32.mrb[0].mxu0
        %v4737 = vadd.f32 0.0, %v4736
        %4738 = vdwg.mxu0
        %v4739 = vadd.f32 %v4436, %v4661
        %v4740 = vadd.f32 %v4437, %v4663
        %v4741 = vadd.f32 %v4438, %v4665
        %v4742 = vadd.f32 %v4439, %v4667
        %v4743 = vadd.f32 %v4440, %v4671
        %v4744 = vadd.f32 %v4441, %v4673
        %v4745 = vadd.f32 %v4442, %v4675
        %v4746 = vadd.f32 %v4443, %v4677
        %v4747 = vadd.f32 %v4444, %v4681
        %v4748 = vadd.f32 %v4445, %v4683
        %v4749 = vadd.f32 %v4446, %v4685
        %v4750 = vadd.f32 %v4447, %v4687
        %v4751 = vadd.f32 %v4448, %v4691
        %v4752 = vadd.f32 %v4449, %v4693
        %v4753 = vadd.f32 %v4450, %v4695
        %v4754 = vadd.f32 %v4451, %v4697
        %v4755 = vadd.f32 %v4452, %v4701
        %v4756 = vadd.f32 %v4453, %v4703
        %v4757 = vadd.f32 %v4454, %v4705
        %v4758 = vadd.f32 %v4455, %v4707
        %v4759 = vadd.f32 %v4456, %v4711
        %v4760 = vadd.f32 %v4457, %v4713
        %v4761 = vadd.f32 %v4458, %v4715
        %v4762 = vadd.f32 %v4459, %v4717
        %v4763 = vadd.f32 %v4460, %v4721
        %v4764 = vadd.f32 %v4461, %v4723
        %v4765 = vadd.f32 %v4462, %v4725
        %v4766 = vadd.f32 %v4463, %v4727
        %v4767 = vadd.f32 %v4464, %v4731
        %v4768 = vadd.f32 %v4465, %v4733
        %v4769 = vadd.f32 %v4466, %v4735
        %v4770 = vadd.f32 %v4467, %v4737
        %s4771 = scalar_lea.vmem %s2, 512
        %v4772 = vld [vmem:[%s4771] sm:$0xf]
        %v4773 = vld [vmem:[%s4771 + $0x4] sm:$0xf]
        %v4774 = vld [vmem:[%s4771 + $0x8] sm:$0xf]
        %v4775 = vld [vmem:[%s4771 + $0xc] sm:$0xf]
        %v4776 = vld [vmem:[%s4771 + $0x10] sm:$0xf]
        %v4777 = vld [vmem:[%s4771 + $0x14] sm:$0xf]
        %v4778 = vld [vmem:[%s4771 + $0x18] sm:$0xf]
        %v4779 = vld [vmem:[%s4771 + $0x1c] sm:$0xf]
        %v4780 = vld [vmem:[%s4771 + $0x20] sm:$0xf]
        %v4781 = vld [vmem:[%s4771 + $0x24] sm:$0xf]
        %v4782 = vld [vmem:[%s4771 + $0x28] sm:$0xf]
        %v4783 = vld [vmem:[%s4771 + $0x2c] sm:$0xf]
        %v4784 = vld [vmem:[%s4771 + $0x30] sm:$0xf]
        %v4785 = vld [vmem:[%s4771 + $0x34] sm:$0xf]
        %v4786 = vld [vmem:[%s4771 + $0x38] sm:$0xf]
        %v4787 = vld [vmem:[%s4771 + $0x3c] sm:$0xf]
        %v4788 = vpack.c.bf16 %v4531, %v4529
        %v4789 = vpack.c.bf16 %v4532, %v4530
        %v4790 = vpack.c.bf16 %v4535, %v4533
        %v4791 = vpack.c.bf16 %v4536, %v4534
        %v4808 = vunpack.c.l.b16 %v4772
        %v4809 = vunpack.c.l.b16 %v4773
        %v4810 = vunpack.c.l.b16 %v4774
        %v4811 = vunpack.c.l.b16 %v4775
        %v4812 = vunpack.c.l.b16 %v4776
        %v4813 = vunpack.c.l.b16 %v4777
        %v4814 = vunpack.c.l.b16 %v4778
        %v4815 = vunpack.c.l.b16 %v4779
        %v4816 = vunpack.c.l.b16 %v4780
        %v4817 = vunpack.c.l.b16 %v4781
        %v4818 = vunpack.c.l.b16 %v4782
        %v4819 = vunpack.c.l.b16 %v4783
        %v4820 = vunpack.c.l.b16 %v4784
        %v4821 = vunpack.c.l.b16 %v4785
        %v4822 = vunpack.c.l.b16 %v4786
        %v4823 = vunpack.c.l.b16 %v4787
        %v4824 = vpack.c.b16 %v4809, %v4808
        %v4825 = vpack.c.b16 %v4811, %v4810
        %v4826 = vpack.c.b16 %v4813, %v4812
        %v4827 = vpack.c.b16 %v4815, %v4814
        %v4828 = vpack.c.b16 %v4817, %v4816
        %v4829 = vpack.c.b16 %v4819, %v4818
        %v4830 = vpack.c.b16 %v4821, %v4820
        %v4831 = vpack.c.b16 %v4823, %v4822
        %v4833 = vsel %vm476, %v4824, 0
        %v4836 = vsel %vm476, %v4825, 0
        %v4839 = vsel %vm476, %v4826, 0
        %v4842 = vsel %vm476, %v4827, 0
        %v4845 = vsel %vm476, %v4828, 0
        %v4848 = vsel %vm476, %v4829, 0
        %v4851 = vsel %vm476, %v4830, 0
        %v4854 = vsel %vm476, %v4831, 0
        %4856 = vmatprep.subr.bf16.mxu0 %v4789
        %4857 = vmatpush1.bf16.msra.mxu0 %v4788
        %4858 = vmatprep.subr.bf16.mxu0 %v4791
        %4859 = vmatpush1.bf16.msra.mxu0 %v4790
        %4860 = vmatprep.subr.bf16.mxu0 0
        %4861 = vmatpush1.bf16.msra.mxu0 0
        %4862 = vmatprep.subr.bf16.mxu0 0
        %4863 = vmatpush1.bf16.msra.mxu0 0
        %4864 = vmatprep.subr.bf16.mxu0 0
        %4865 = vmatpush1.bf16.msra.mxu0 0
        %4866 = vmatprep.subr.bf16.mxu0 0
        %4867 = vmatpush1.bf16.msra.mxu0 0
        %4868 = vmatprep.subr.bf16.mxu0 0
        %4869 = vmatpush1.bf16.msra.mxu0 0
        %4870 = vmatprep.subr.bf16.mxu0 0
        %4871 = vmatpush1.bf16.msra.mxu0 0
        %4872 = vmatprep.subr.bf16.mxu0 0
        %4873 = vmatpush1.bf16.msra.mxu0 0
        %4874 = vmatprep.subr.bf16.mxu0 0
        %4875 = vmatpush1.bf16.msra.mxu0 0
        %4876 = vmatprep.subr.bf16.mxu0 0
        %4877 = vmatpush1.bf16.msra.mxu0 0
        %4878 = vmatprep.subr.bf16.mxu0 0
        %4879 = vmatpush1.bf16.msra.mxu0 0
        %4880 = vmatprep.subr.bf16.mxu0 0
        %4881 = vmatpush1.bf16.msra.mxu0 0
        %4882 = vmatprep.subr.bf16.mxu0 0
        %4883 = vmatpush1.bf16.msra.mxu0 0
        %4884 = vmatprep.subr.bf16.mxu0 0
        %4885 = vmatpush1.bf16.msra.mxu0 0
        %4886 = vmatprep.subr.bf16.mxu0 0
        %4887 = vmatpush1.bf16.msra.mxu0 0
        %4888 = vmatprep.mubr.bf16.mxu0 0
        %4889 = vmatmul.mubr.bf16.gmra.mrb[0].mxu0 %v4833
        %v4890 = vpop.f32.mrb[0].mxu0
        %v4891 = vadd.f32 0.0, %v4890
        %v4892 = vpop.f32.mrb[0].mxu0
        %v4893 = vadd.f32 0.0, %v4892
        %v4894 = vpop.f32.mrb[0].mxu0
        %v4895 = vadd.f32 0.0, %v4894
        %v4896 = vpop.f32.mrb[0].mxu0
        %v4897 = vadd.f32 0.0, %v4896
        %4898 = vmatprep.mubr.bf16.mxu0 0
        %4899 = vmatmul.mubr.bf16.gmra.mrb[0].mxu0 %v4836
        %v4900 = vpop.f32.mrb[0].mxu0
        %v4901 = vadd.f32 0.0, %v4900
        %v4902 = vpop.f32.mrb[0].mxu0
        %v4903 = vadd.f32 0.0, %v4902
        %v4904 = vpop.f32.mrb[0].mxu0
        %v4905 = vadd.f32 0.0, %v4904
        %v4906 = vpop.f32.mrb[0].mxu0
        %v4907 = vadd.f32 0.0, %v4906
        %4908 = vmatprep.mubr.bf16.mxu0 0
        %4909 = vmatmul.mubr.bf16.gmra.mrb[0].mxu0 %v4839
        %v4910 = vpop.f32.mrb[0].mxu0
        %v4911 = vadd.f32 0.0, %v4910
        %v4912 = vpop.f32.mrb[0].mxu0
        %v4913 = vadd.f32 0.0, %v4912
        %v4914 = vpop.f32.mrb[0].mxu0
        %v4915 = vadd.f32 0.0, %v4914
        %v4916 = vpop.f32.mrb[0].mxu0
        %v4917 = vadd.f32 0.0, %v4916
        %4918 = vmatprep.mubr.bf16.mxu0 0
        %4919 = vmatmul.mubr.bf16.gmra.mrb[0].mxu0 %v4842
        %v4920 = vpop.f32.mrb[0].mxu0
        %v4921 = vadd.f32 0.0, %v4920
        %v4922 = vpop.f32.mrb[0].mxu0
        %v4923 = vadd.f32 0.0, %v4922
        %v4924 = vpop.f32.mrb[0].mxu0
        %v4925 = vadd.f32 0.0, %v4924
        %v4926 = vpop.f32.mrb[0].mxu0
        %v4927 = vadd.f32 0.0, %v4926
        %4928 = vmatprep.mubr.bf16.mxu0 0
        %4929 = vmatmul.mubr.bf16.gmra.mrb[0].mxu0 %v4845
        %v4930 = vpop.f32.mrb[0].mxu0
        %v4931 = vadd.f32 0.0, %v4930
        %v4932 = vpop.f32.mrb[0].mxu0
        %v4933 = vadd.f32 0.0, %v4932
        %v4934 = vpop.f32.mrb[0].mxu0
        %v4935 = vadd.f32 0.0, %v4934
        %v4936 = vpop.f32.mrb[0].mxu0
        %v4937 = vadd.f32 0.0, %v4936
        %4938 = vmatprep.mubr.bf16.mxu0 0
        %4939 = vmatmul.mubr.bf16.gmra.mrb[0].mxu0 %v4848
        %v4940 = vpop.f32.mrb[0].mxu0
        %v4941 = vadd.f32 0.0, %v4940
        %v4942 = vpop.f32.mrb[0].mxu0
        %v4943 = vadd.f32 0.0, %v4942
        %v4944 = vpop.f32.mrb[0].mxu0
        %v4945 = vadd.f32 0.0, %v4944
        %v4946 = vpop.f32.mrb[0].mxu0
        %v4947 = vadd.f32 0.0, %v4946
        %4948 = vmatprep.mubr.bf16.mxu0 0
        %4949 = vmatmul.mubr.bf16.gmra.mrb[0].mxu0 %v4851
        %v4950 = vpop.f32.mrb[0].mxu0
        %v4951 = vadd.f32 0.0, %v4950
        %v4952 = vpop.f32.mrb[0].mxu0
        %v4953 = vadd.f32 0.0, %v4952
        %v4954 = vpop.f32.mrb[0].mxu0
        %v4955 = vadd.f32 0.0, %v4954
        %v4956 = vpop.f32.mrb[0].mxu0
        %v4957 = vadd.f32 0.0, %v4956
        %4958 = vmatprep.mubr.bf16.mxu0 0
        %4959 = vmatmul.mubr.bf16.gmra.mrb[0].mxu0 %v4854
        %v4960 = vpop.f32.mrb[0].mxu0
        %v4961 = vadd.f32 0.0, %v4960
        %v4962 = vpop.f32.mrb[0].mxu0
        %v4963 = vadd.f32 0.0, %v4962
        %v4964 = vpop.f32.mrb[0].mxu0
        %v4965 = vadd.f32 0.0, %v4964
        %v4966 = vpop.f32.mrb[0].mxu0
        %v4967 = vadd.f32 0.0, %v4966
        %4968 = vdwg.mxu0
        %v4969 = vadd.f32 %v4739, %v4891
        %v4970 = vadd.f32 %v4740, %v4893
        %v4971 = vadd.f32 %v4741, %v4895
        %v4972 = vadd.f32 %v4742, %v4897
        %v4973 = vadd.f32 %v4743, %v4901
        %v4974 = vadd.f32 %v4744, %v4903
        %v4975 = vadd.f32 %v4745, %v4905
        %v4976 = vadd.f32 %v4746, %v4907
        %v4977 = vadd.f32 %v4747, %v4911
        %v4978 = vadd.f32 %v4748, %v4913
        %v4979 = vadd.f32 %v4749, %v4915
        %v4980 = vadd.f32 %v4750, %v4917
        %v4981 = vadd.f32 %v4751, %v4921
        %v4982 = vadd.f32 %v4752, %v4923
        %v4983 = vadd.f32 %v4753, %v4925
        %v4984 = vadd.f32 %v4754, %v4927
        %v4985 = vadd.f32 %v4755, %v4931
        %v4986 = vadd.f32 %v4756, %v4933
        %v4987 = vadd.f32 %v4757, %v4935
        %v4988 = vadd.f32 %v4758, %v4937
        %v4989 = vadd.f32 %v4759, %v4941
        %v4990 = vadd.f32 %v4760, %v4943
        %v4991 = vadd.f32 %v4761, %v4945
        %v4992 = vadd.f32 %v4762, %v4947
        %v4993 = vadd.f32 %v4763, %v4951
        %v4994 = vadd.f32 %v4764, %v4953
        %v4995 = vadd.f32 %v4765, %v4955
        %v4996 = vadd.f32 %v4766, %v4957
        %v4997 = vadd.f32 %v4767, %v4961
        %v4998 = vadd.f32 %v4768, %v4963
        %v4999 = vadd.f32 %v4769, %v4965
        %v5000 = vadd.f32 %v4770, %v4967
        %v5001 = vld [vmem:[%s3] sm:$0xff]
        %v5002 = vld [vmem:[%s3 + $0x8] sm:$0xff]
        %v5003 = vld [vmem:[%s3 + $0x10] sm:$0xff]
        %v5004 = vld [vmem:[%s3 + $0x18] sm:$0xff]
        %v5005 = vld [vmem:[%s3 + $0x20] sm:$0xff]
        %v5006 = vld [vmem:[%s3 + $0x28] sm:$0xff]
        %v5007 = vld [vmem:[%s3 + $0x30] sm:$0xff]
        %v5008 = vld [vmem:[%s3 + $0x38] sm:$0xff]
        %v5009 = vld [vmem:[%s3 + $0x40] sm:$0xff]
        %v5010 = vld [vmem:[%s3 + $0x48] sm:$0xff]
        %v5011 = vld [vmem:[%s3 + $0x50] sm:$0xff]
        %v5012 = vld [vmem:[%s3 + $0x58] sm:$0xff]
        %v5013 = vld [vmem:[%s3 + $0x60] sm:$0xff]
        %v5014 = vld [vmem:[%s3 + $0x68] sm:$0xff]
        %v5015 = vld [vmem:[%s3 + $0x70] sm:$0xff]
        %v5016 = vld [vmem:[%s3 + $0x78] sm:$0xff]
        %5018 = vset.pattern.permute.xlu0 0
        %5019 = vperm.xlu0 %5018, %v5001
        %v5020 = vpop.permute.xlu0 %5019
        %5023 = vset.pattern.permute.xlu0 0
        %5024 = vperm.xlu0 %5023, %v5002
        %v5025 = vpop.permute.xlu0 %5024
        %5028 = vset.pattern.permute.xlu0 0
        %5029 = vperm.xlu0 %5028, %v5003
        %v5030 = vpop.permute.xlu0 %5029
        %5033 = vset.pattern.permute.xlu0 0
        %5034 = vperm.xlu0 %5033, %v5004
        %v5035 = vpop.permute.xlu0 %5034
        %5038 = vset.pattern.permute.xlu0 0
        %5039 = vperm.xlu0 %5038, %v5005
        %v5040 = vpop.permute.xlu0 %5039
        %5043 = vset.pattern.permute.xlu0 0
        %5044 = vperm.xlu0 %5043, %v5006
        %v5045 = vpop.permute.xlu0 %5044
        %5048 = vset.pattern.permute.xlu0 0
        %5049 = vperm.xlu0 %5048, %v5007
        %v5050 = vpop.permute.xlu0 %5049
        %5053 = vset.pattern.permute.xlu0 0
        %5054 = vperm.xlu0 %5053, %v5008
        %v5055 = vpop.permute.xlu0 %5054
        %5058 = vset.pattern.permute.xlu0 0
        %5059 = vperm.xlu0 %5058, %v5009
        %v5060 = vpop.permute.xlu0 %5059
        %5063 = vset.pattern.permute.xlu0 0
        %5064 = vperm.xlu0 %5063, %v5010
        %v5065 = vpop.permute.xlu0 %5064
        %5068 = vset.pattern.permute.xlu0 0
        %5069 = vperm.xlu0 %5068, %v5011
        %v5070 = vpop.permute.xlu0 %5069
        %5073 = vset.pattern.permute.xlu0 0
        %5074 = vperm.xlu0 %5073, %v5012
        %v5075 = vpop.permute.xlu0 %5074
        %5078 = vset.pattern.permute.xlu0 0
        %5079 = vperm.xlu0 %5078, %v5013
        %v5080 = vpop.permute.xlu0 %5079
        %5083 = vset.pattern.permute.xlu0 0
        %5084 = vperm.xlu0 %5083, %v5014
        %v5085 = vpop.permute.xlu0 %5084
        %5088 = vset.pattern.permute.xlu0 0
        %5089 = vperm.xlu0 %5088, %v5015
        %v5090 = vpop.permute.xlu0 %5089
        %5093 = vset.pattern.permute.xlu0 0
        %5094 = vperm.xlu0 %5093, %v5016
        %v5095 = vpop.permute.xlu0 %5094
        %v5097 = vadd.f32 %v4969, %v5020
        %v5098 = vadd.f32 %v4970, %v5020
        %v5099 = vadd.f32 %v4971, %v5025
        %v5100 = vadd.f32 %v4972, %v5025
        %v5101 = vadd.f32 %v4973, %v5030
        %v5102 = vadd.f32 %v4974, %v5030
        %v5103 = vadd.f32 %v4975, %v5035
        %v5104 = vadd.f32 %v4976, %v5035
        %v5105 = vadd.f32 %v4977, %v5040
        %v5106 = vadd.f32 %v4978, %v5040
        %v5107 = vadd.f32 %v4979, %v5045
        %v5108 = vadd.f32 %v4980, %v5045
        %v5109 = vadd.f32 %v4981, %v5050
        %v5110 = vadd.f32 %v4982, %v5050
        %v5111 = vadd.f32 %v4983, %v5055
        %v5112 = vadd.f32 %v4984, %v5055
        %v5113 = vadd.f32 %v4985, %v5060
        %v5114 = vadd.f32 %v4986, %v5060
        %v5115 = vadd.f32 %v4987, %v5065
        %v5116 = vadd.f32 %v4988, %v5065
        %v5117 = vadd.f32 %v4989, %v5070
        %v5118 = vadd.f32 %v4990, %v5070
        %v5119 = vadd.f32 %v4991, %v5075
        %v5120 = vadd.f32 %v4992, %v5075
        %v5121 = vadd.f32 %v4993, %v5080
        %v5122 = vadd.f32 %v4994, %v5080
        %v5123 = vadd.f32 %v4995, %v5085
        %v5124 = vadd.f32 %v4996, %v5085
        %v5125 = vadd.f32 %v4997, %v5090
        %v5126 = vadd.f32 %v4998, %v5090
        %v5127 = vadd.f32 %v4999, %v5095
        %v5128 = vadd.f32 %v5000, %v5095
        %v5129 = vxor.u32 %v5097, 2147483648
        %v5130 = vxor.u32 %v5098, 2147483648
        %v5131 = vxor.u32 %v5099, 2147483648
        %v5132 = vxor.u32 %v5100, 2147483648
        %v5133 = vxor.u32 %v5101, 2147483648
        %v5134 = vxor.u32 %v5102, 2147483648
        %v5135 = vxor.u32 %v5103, 2147483648
        %v5136 = vxor.u32 %v5104, 2147483648
        %v5137 = vmul.f32 %v5129, 1.442695
        %v5138 = vpow.pop %v5137
        %v5139 = vmul.f32 %v5130, 1.442695
        %v5140 = vpow.pop %v5139
        %v5141 = vmul.f32 %v5131, 1.442695
        %v5142 = vpow.pop %v5141
        %v5143 = vmul.f32 %v5132, 1.442695
        %v5144 = vpow.pop %v5143
        %v5145 = vmul.f32 %v5133, 1.442695
        %v5146 = vpow.pop %v5145
        %v5147 = vmul.f32 %v5134, 1.442695
        %v5148 = vpow.pop %v5147
        %v5149 = vmul.f32 %v5135, 1.442695
        %v5150 = vpow.pop %v5149
        %v5151 = vmul.f32 %v5136, 1.442695
        %v5152 = vpow.pop %v5151
        %v5153 = vadd.f32 %v5138, 1.0
        %v5154 = vadd.f32 %v5140, 1.0
        %v5155 = vadd.f32 %v5142, 1.0
        %v5156 = vadd.f32 %v5144, 1.0
        %v5157 = vadd.f32 %v5146, 1.0
        %v5158 = vadd.f32 %v5148, 1.0
        %v5159 = vadd.f32 %v5150, 1.0
        %v5160 = vadd.f32 %v5152, 1.0
        %v5161 = vrcp.pop %v5153
        %v5162 = vmul.f32 1.0, %v5161
        %v5163 = vrcp.pop %v5154
        %v5164 = vmul.f32 1.0, %v5163
        %v5165 = vrcp.pop %v5155
        %v5166 = vmul.f32 1.0, %v5165
        %v5167 = vrcp.pop %v5156
        %v5168 = vmul.f32 1.0, %v5167
        %v5169 = vrcp.pop %v5157
        %v5170 = vmul.f32 1.0, %v5169
        %v5171 = vrcp.pop %v5158
        %v5172 = vmul.f32 1.0, %v5171
        %v5173 = vrcp.pop %v5159
        %v5174 = vmul.f32 1.0, %v5173
        %v5175 = vrcp.pop %v5160
        %v5176 = vmul.f32 1.0, %v5175
        %v5177 = vxor.u32 %v5105, 2147483648
        %v5178 = vxor.u32 %v5106, 2147483648
        %v5179 = vxor.u32 %v5107, 2147483648
        %v5180 = vxor.u32 %v5108, 2147483648
        %v5181 = vxor.u32 %v5109, 2147483648
        %v5182 = vxor.u32 %v5110, 2147483648
        %v5183 = vxor.u32 %v5111, 2147483648
        %v5184 = vxor.u32 %v5112, 2147483648
        %v5185 = vmul.f32 %v5177, 1.442695
        %v5186 = vpow.pop %v5185
        %v5187 = vmul.f32 %v5178, 1.442695
        %v5188 = vpow.pop %v5187
        %v5189 = vmul.f32 %v5179, 1.442695
        %v5190 = vpow.pop %v5189
        %v5191 = vmul.f32 %v5180, 1.442695
        %v5192 = vpow.pop %v5191
        %v5193 = vmul.f32 %v5181, 1.442695
        %v5194 = vpow.pop %v5193
        %v5195 = vmul.f32 %v5182, 1.442695
        %v5196 = vpow.pop %v5195
        %v5197 = vmul.f32 %v5183, 1.442695
        %v5198 = vpow.pop %v5197
        %v5199 = vmul.f32 %v5184, 1.442695
        %v5200 = vpow.pop %v5199
        %v5201 = vadd.f32 %v5186, 1.0
        %v5202 = vadd.f32 %v5188, 1.0
        %v5203 = vadd.f32 %v5190, 1.0
        %v5204 = vadd.f32 %v5192, 1.0
        %v5205 = vadd.f32 %v5194, 1.0
        %v5206 = vadd.f32 %v5196, 1.0
        %v5207 = vadd.f32 %v5198, 1.0
        %v5208 = vadd.f32 %v5200, 1.0
        %v5209 = vrcp.pop %v5201
        %v5210 = vmul.f32 1.0, %v5209
        %v5211 = vrcp.pop %v5202
        %v5212 = vmul.f32 1.0, %v5211
        %v5213 = vrcp.pop %v5203
        %v5214 = vmul.f32 1.0, %v5213
        %v5215 = vrcp.pop %v5204
        %v5216 = vmul.f32 1.0, %v5215
        %v5217 = vrcp.pop %v5205
        %v5218 = vmul.f32 1.0, %v5217
        %v5219 = vrcp.pop %v5206
        %v5220 = vmul.f32 1.0, %v5219
        %v5221 = vrcp.pop %v5207
        %v5222 = vmul.f32 1.0, %v5221
        %v5223 = vrcp.pop %v5208
        %v5224 = vmul.f32 1.0, %v5223
        %v5225 = vxor.u32 %v5113, 2147483648
        %v5226 = vxor.u32 %v5114, 2147483648
        %v5227 = vxor.u32 %v5115, 2147483648
        %v5228 = vxor.u32 %v5116, 2147483648
        %v5229 = vxor.u32 %v5117, 2147483648
        %v5230 = vxor.u32 %v5118, 2147483648
        %v5231 = vxor.u32 %v5119, 2147483648
        %v5232 = vxor.u32 %v5120, 2147483648
        %v5233 = vmul.f32 %v5225, 1.442695
        %v5234 = vpow.pop %v5233
        %v5235 = vmul.f32 %v5226, 1.442695
        %v5236 = vpow.pop %v5235
        %v5237 = vmul.f32 %v5227, 1.442695
        %v5238 = vpow.pop %v5237
        %v5239 = vmul.f32 %v5228, 1.442695
        %v5240 = vpow.pop %v5239
        %v5241 = vmul.f32 %v5229, 1.442695
        %v5242 = vpow.pop %v5241
        %v5243 = vmul.f32 %v5230, 1.442695
        %v5244 = vpow.pop %v5243
        %v5245 = vmul.f32 %v5231, 1.442695
        %v5246 = vpow.pop %v5245
        %v5247 = vmul.f32 %v5232, 1.442695
        %v5248 = vpow.pop %v5247
        %v5249 = vadd.f32 %v5234, 1.0
        %v5250 = vadd.f32 %v5236, 1.0
        %v5251 = vadd.f32 %v5238, 1.0
        %v5252 = vadd.f32 %v5240, 1.0
        %v5253 = vadd.f32 %v5242, 1.0
        %v5254 = vadd.f32 %v5244, 1.0
        %v5255 = vadd.f32 %v5246, 1.0
        %v5256 = vadd.f32 %v5248, 1.0
        %v5257 = vrcp.pop %v5249
        %v5258 = vmul.f32 1.0, %v5257
        %v5259 = vrcp.pop %v5250
        %v5260 = vmul.f32 1.0, %v5259
        %v5261 = vrcp.pop %v5251
        %v5262 = vmul.f32 1.0, %v5261
        %v5263 = vrcp.pop %v5252
        %v5264 = vmul.f32 1.0, %v5263
        %v5265 = vrcp.pop %v5253
        %v5266 = vmul.f32 1.0, %v5265
        %v5267 = vrcp.pop %v5254
        %v5268 = vmul.f32 1.0, %v5267
        %v5269 = vrcp.pop %v5255
        %v5270 = vmul.f32 1.0, %v5269
        %v5271 = vrcp.pop %v5256
        %v5272 = vmul.f32 1.0, %v5271
        %v5273 = vtanh.pop %v5121
        %v5274 = vtanh.pop %v5122
        %v5275 = vtanh.pop %v5123
        %v5276 = vtanh.pop %v5124
        %v5277 = vtanh.pop %v5125
        %v5278 = vtanh.pop %v5126
        %v5279 = vtanh.pop %v5127
        %v5280 = vtanh.pop %v5128
        %v5281 = vld [vmem:[#allocation3] sm:$0xff]
        %v5282 = vld [vmem:[#allocation3 + $0x8] sm:$0xff]
        %v5283 = vld [vmem:[#allocation3 + $0x10] sm:$0xff]
        %v5284 = vld [vmem:[#allocation3 + $0x18] sm:$0xff]
        %v5285 = vld [vmem:[#allocation3 + $0x20] sm:$0xff]
        %v5286 = vld [vmem:[#allocation3 + $0x28] sm:$0xff]
        %v5287 = vld [vmem:[#allocation3 + $0x30] sm:$0xff]
        %v5288 = vld [vmem:[#allocation3 + $0x38] sm:$0xff]
        %v5289 = vmul.f32 %v5210, %v5281
        %v5290 = vmul.f32 %v5212, %v5282
        %v5291 = vmul.f32 %v5214, %v5283
        %v5292 = vmul.f32 %v5216, %v5284
        %v5293 = vmul.f32 %v5218, %v5285
        %v5294 = vmul.f32 %v5220, %v5286
        %v5295 = vmul.f32 %v5222, %v5287
        %v5296 = vmul.f32 %v5224, %v5288
        %v5297 = vmul.f32 %v5162, %v5273
        %v5298 = vmul.f32 %v5164, %v5274
        %v5299 = vmul.f32 %v5166, %v5275
        %v5300 = vmul.f32 %v5168, %v5276
        %v5301 = vmul.f32 %v5170, %v5277
        %v5302 = vmul.f32 %v5172, %v5278
        %v5303 = vmul.f32 %v5174, %v5279
        %v5304 = vmul.f32 %v5176, %v5280
        %v5305 = vadd.f32 %v5289, %v5297
        %v5306 = vadd.f32 %v5290, %v5298
        %v5307 = vadd.f32 %v5291, %v5299
        %v5308 = vadd.f32 %v5292, %v5300
        %v5309 = vadd.f32 %v5293, %v5301
        %v5310 = vadd.f32 %v5294, %v5302
        %v5311 = vadd.f32 %v5295, %v5303
        %v5312 = vadd.f32 %v5296, %v5304
        %v5313 = vtanh.pop %v5305
        %v5314 = vtanh.pop %v5306
        %v5315 = vtanh.pop %v5307
        %v5316 = vtanh.pop %v5308
        %v5317 = vtanh.pop %v5309
        %v5318 = vtanh.pop %v5310
        %v5319 = vtanh.pop %v5311
        %v5320 = vtanh.pop %v5312
        %v5321 = vmul.f32 %v5258, %v5313
        %v5322 = vmul.f32 %v5260, %v5314
        %v5323 = vmul.f32 %v5262, %v5315
        %v5324 = vmul.f32 %v5264, %v5316
        %v5325 = vmul.f32 %v5266, %v5317
        %v5326 = vmul.f32 %v5268, %v5318
        %v5327 = vmul.f32 %v5270, %v5319
        %v5328 = vmul.f32 %v5272, %v5320
        %5329 = vst [vmem:[#allocation3] sm:$0xff] %v5305
        %5330 = vst [vmem:[#allocation3 + $0x8] sm:$0xff] %v5306
        %5331 = vst [vmem:[#allocation3 + $0x10] sm:$0xff] %v5307
        %5332 = vst [vmem:[#allocation3 + $0x18] sm:$0xff] %v5308
        %5333 = vst [vmem:[#allocation3 + $0x20] sm:$0xff] %v5309
        %5334 = vst [vmem:[#allocation3 + $0x28] sm:$0xff] %v5310
        %5335 = vst [vmem:[#allocation3 + $0x30] sm:$0xff] %v5311
        %5336 = vst [vmem:[#allocation3 + $0x38] sm:$0xff] %v5312
        %5337 = vst [vmem:[#allocation2] sm:$0xff] %v5321
        %5338 = vst [vmem:[#allocation2 + $0x8] sm:$0xff] %v5322
        %5339 = vst [vmem:[#allocation2 + $0x10] sm:$0xff] %v5323
        %5340 = vst [vmem:[#allocation2 + $0x18] sm:$0xff] %v5324
        %5341 = vst [vmem:[#allocation2 + $0x20] sm:$0xff] %v5325
        %5342 = vst [vmem:[#allocation2 + $0x28] sm:$0xff] %v5326
        %5343 = vst [vmem:[#allocation2 + $0x30] sm:$0xff] %v5327
        %5344 = vst [vmem:[#allocation2 + $0x38] sm:$0xff] %v5328
        %5345 = vst [vmem:[%s272] sm:$0xff] %v5321
        %5346 = vst [vmem:[%s272 + $0x8] sm:$0xff] %v5322
        %5347 = vst [vmem:[%s272 + $0x10] sm:$0xff] %v5323
        %5348 = vst [vmem:[%s272 + $0x18] sm:$0xff] %v5324
        %5349 = vst [vmem:[%s272 + $0x20] sm:$0xff] %v5325
        %5350 = vst [vmem:[%s272 + $0x28] sm:$0xff] %v5326
        %5351 = vst [vmem:[%s272 + $0x30] sm:$0xff] %v5327
        %5352 = vst [vmem:[%s272 + $0x38] sm:$0xff] %v5328
        %5353 = vst [vmem:[%s279] sm:$0xff] %v5305
        %5354 = vst [vmem:[%s279 + $0x8] sm:$0xff] %v5306
        %5355 = vst [vmem:[%s279 + $0x10] sm:$0xff] %v5307
        %5356 = vst [vmem:[%s279 + $0x18] sm:$0xff] %v5308
        %5357 = vst [vmem:[%s279 + $0x20] sm:$0xff] %v5309
        %5358 = vst [vmem:[%s279 + $0x28] sm:$0xff] %v5310
        %5359 = vst [vmem:[%s279 + $0x30] sm:$0xff] %v5311
        %5360 = vst [vmem:[%s279 + $0x38] sm:$0xff] %v5312
        %s5361 = sand.u32 %s158, 1
        %s5362 = scalar_lea.sflag [#allocation5], %s5361
        %s5363 = sand.u32 %s158, 1
        %s5364 = smul.addr %s5363, 64
        %s5365 = scalar_lea.vmem [#allocation4], %s5364
        %s5366 = sand.u32 %s184, 1
        %s5367 = scalar_lea.sflag [#allocation7], %s5366
        %s5368 = sand.u32 %s184, 1
        %s5369 = smul.addr %s5368, 64
        %s5370 = scalar_lea.vmem [#allocation6], %s5369
        // Predicated region
        $region45: #{tpu_custom_call.1} parent=39 // pred_check
          %p5371 = pneg %p168
        $region46: #{tpu_custom_call.1} parent=39 // pred_check_branch
          %5373 = sbr.rel (%p5371) target = $region48
        $region47: #{tpu_custom_call.1} parent=39 // pred_region
          %s5375 = ssub.s32 1024, 1024
          %5376 = vsyncadd %s5362, %s5375
          %s5377 = smul.addr %s29, 8
          %s5378 = smul.addr %s28, 64
          %s5379 = sadd.s32 %s5377, %s5378
          %s5380 = smul.addr %s5379, 128
          %s5381 = scalar_lea.hbm %s5, %s5380
          %s5382 = sshll.u32 %s5365, 4
          %s5383 = int_to_ptr.vmem [resolvable:$true] %s5382
          %5388 = dma.vmem_to_hbm [thread:$0]  %s5383, 1024, %s5381, %s5362, 256, 256, 16
        $region48: #{tpu_custom_call.1} parent=39 // pred_fallthru
          _
        // Predicated region
        $region49: #{tpu_custom_call.1} parent=39 // pred_check
          %p5389 = pneg %p194
        $region50: #{tpu_custom_call.1} parent=39 // pred_check_branch
          %5391 = sbr.rel (%p5389) target = $region52
        $region51: #{tpu_custom_call.1} parent=39 // pred_region
          %s5393 = ssub.s32 1024, 1024
          %5394 = vsyncadd %s5367, %s5393
          %s5395 = smul.addr %s28, 8
          %s5396 = smul.addr %s5395, 128
          %s5397 = scalar_lea.hbm %s6, %s5396
          %s5398 = sshll.u32 %s5370, 4
          %s5399 = int_to_ptr.vmem [resolvable:$true] %s5398
          %5404 = dma.vmem_to_hbm [thread:$0]  %s5399, 1024, %s5397, %s5367, 256, 256, 16
        $region52: #{tpu_custom_call.1} parent=39 // pred_fallthru
          _
      $region40: #{tpu_custom_call.1} parent=5 // pred_fallthru
        _
      %p5405 = scmp.le.s32.totalorder 2, %s19
      // Predicated region
      $region53: #{tpu_custom_call.1} parent=5 // pred_check
        %p5406 = pneg %p5405
      $region54: #{tpu_custom_call.1} parent=5 // pred_check_branch
        %5408 = sbr.rel (%p5406) target = $region56
      $region55: #{tpu_custom_call.1} parent=5 // pred_region
        %s5409 = ssub.s32 %s19, 2
        // Predicated region
        $region57: #{tpu_custom_call.1} parent=55 // pred_check
          %p5410 = pneg %p174
        $region58: #{tpu_custom_call.1} parent=55 // pred_check_branch
          %5412 = sbr.rel (%p5410) target = $region60
        $region59: #{tpu_custom_call.1} parent=55 // pred_region
          %s5413 = sand.u32 %s159, 1
          %s5414 = scalar_lea.sflag [#allocation5], %s5413
          %s5415 = sand.u32 %s159, 1
          %s5416 = smul.addr %s5415, 64
          %s5417 = scalar_lea.vmem [#allocation4], %s5416
          %5418 = dma.done %s5414, 1024
        $region60: #{tpu_custom_call.1} parent=55 // pred_fallthru
          _
        // Predicated region
        $region61: #{tpu_custom_call.1} parent=55 // pred_check
          %p5419 = pneg %p200
        $region62: #{tpu_custom_call.1} parent=55 // pred_check_branch
          %5421 = sbr.rel (%p5419) target = $region64
        $region63: #{tpu_custom_call.1} parent=55 // pred_region
          %s5422 = sand.u32 %s185, 1
          %s5423 = scalar_lea.sflag [#allocation7], %s5422
          %s5424 = sand.u32 %s185, 1
          %s5425 = smul.addr %s5424, 64
          %s5426 = scalar_lea.vmem [#allocation6], %s5425
          %5427 = dma.done %s5423, 1024
        $region64: #{tpu_custom_call.1} parent=55 // pred_fallthru
          _
      $region56: #{tpu_custom_call.1} parent=5 // pred_fallthru
        _
    $region6: #{tpu_custom_call.1} parent=1 // loop_footer
      %s23 = sadd.s32 1, %s19
    $region7: #{tpu_custom_call.1} parent=1 // loop_footer_branch
      %18 = sbr.rel target = $region3
    $region8: #{tpu_custom_call.1} parent=1 // loop_exit
      _
    %5428 = vsyncpa [#allocation5], 1
    %s5429 = scalar_lea.sflag [#allocation5], 1
    %5430 = vsyncpa %s5429, 1
    %5431 = vsyncpa [#allocation7], 1
    %s5432 = scalar_lea.sflag [#allocation7], 1
    %5433 = vsyncpa %s5432, 1

</llo_original>
